<compile_context>
chip_gen: v6e
topology: v6e:2x2x1
jax: 0.10.0
libtpu: 0.0.40
codegen_flags: <defaults>
</compile_context>

<pallas_src>
import functools

import jax
import jax.numpy as jnp
from jax.experimental import pallas as pl
from jax.experimental.pallas import tpu as pltpu


def _round_up(a, m):
    return (a + m - 1) // m * m


def _sigmoid(v):
    # exp goes to the EUP; the divide becomes an approximate EUP reciprocal,
    # keeping the elementwise chain between the two matmuls off the VALU.
    return pl.reciprocal(1.0 + jnp.exp(-v), approx=True)


def conformer_conv_kernel(x_lo_ref, x_mid_ref, x_hi_ref,
                          ln_g_ref, ln_b_ref, w1_ref, b1_ref,
                          dw_ref, bn_sh_ref, w2_ref, b2_ref,
                          out_ref, *, t_valid, use_roll):
    ti = pl.program_id(1)
    tT = out_ref.shape[1]
    C = out_ref.shape[2]
    K = dw_ref.shape[0]
    pad = (K - 1) // 2
    h8 = x_lo_ref.shape[1]          # halo width, multiple of the bf16 sublane tile
    tT_ext = tT + 2 * h8

    # ---- Haloed time window: one concat of sublane-tile-aligned bf16 pieces
    # (no scratch store/reload), then a single upcast to f32. ----
    xe = jnp.concatenate(
        [x_lo_ref[0], x_mid_ref[0], x_hi_ref[0]], axis=0).astype(jnp.float32)

    # ---- LayerNorm over channels (eps = 1e-5, biased variance) ----
    mu = jnp.mean(xe, axis=-1, keepdims=True)
    var = jnp.mean((xe - mu) ** 2, axis=-1, keepdims=True)
    xn = (xe - mu) * jax.lax.rsqrt(var + 1e-5)
    xn = xn * ln_g_ref[...] + ln_b_ref[...]              # (tT_ext, C) f32

    # ---- Pointwise conv #1 (bf16 MXU, f32 accum) + GLU over channels ----
    y = jnp.dot(xn.astype(jnp.bfloat16), w1_ref[...],
                preferred_element_type=jnp.float32) + b1_ref[...]
    a = y[:, :C]
    gate = y[:, C:]
    h = a * _sigmoid(gate)                               # (tT_ext, C) f32

    # ---- Zero rows outside the valid global time range ----
    # (handles clamped tile-boundary halos and wrapper-side time padding;
    # equivalent to the depthwise conv's zero 'SAME' padding.)
    row = jax.lax.broadcasted_iota(jnp.int32, (tT_ext, 1), 0)
    t_glob = row + ti * tT - h8
    h = h * ((t_glob >= 0) & (t_glob < t_valid)).astype(h.dtype)

    # ---- Depthwise conv along time (BN scale already folded into dw) ----
    # Taps are realized as XLU sublane rolls + an aligned slice (off the
    # VALU/vld relayout path); the center tap needs no shift.
    dw = dw_ref[...]                                     # (K, C) f32
    acc = jnp.zeros((tT, C), jnp.float32)
    for k in range(K):                                   # K static -> unrolled
        if use_roll and k != pad:
            tap = pltpu.roll(h, shift=(pad - k) % tT_ext, axis=0)[h8:h8 + tT, :]
        else:
            s = h8 - pad + k                             # s == h8 when k == pad
            tap = h[s:s + tT, :]
        acc = acc + tap * dw[k:k + 1, :]

    # ---- BatchNorm (eval) shift + Swish ----
    z = acc + bn_sh_ref[...]
    z = z * _sigmoid(z)

    # ---- Pointwise conv #2 (bf16 MXU, f32 accum) ----
    o = jnp.dot(z.astype(jnp.bfloat16), w2_ref[...],
                preferred_element_type=jnp.float32) + b2_ref[...]

    # Dropout -> identity in eval mode.
    out_ref[0] = o.astype(out_ref.dtype)


def conformer_conv_module(x, params, *, tile_t=512):
    """x: (B, T, C). Returns (B, T, C) bf16. Eval-mode ConformerConvModule."""
    B, T, C = x.shape
    K = params["dw"].shape[0]
    assert (K - 1) % 2 == 0, "kernel_size must be odd for 'SAME' padding"
    pad = (K - 1) // 2
    # TODO(synk): if production C is not a multiple of 128, pad channels (with
    # masked LayerNorm stats) so output stores stay lane-dense.

    io_dtype = jnp.bfloat16
    sub = 16                         # bf16 native sublane tile
    # Halo width rounded up to the sublane tile so all pieces stay aligned.
    h8 = _round_up(max(pad, 1), sub)
    # v7x note: keep B * nT >= 2 so both TensorCores get work; with the
    # min(T) clamp below the tile never exceeds T, so nT >= 1 per batch row.
    tT = _round_up(min(max(tile_t, sub), _round_up(T, sub)), h8)
    Tp = _round_up(T, tT)
    nT = Tp // tT
    r = tT // h8                     # h8-sized blocks per time tile
    nblk = Tp // h8                  # h8-sized blocks along (padded) time

    x_p = x.astype(io_dtype)
    if Tp != T:
        x_p = jnp.pad(x_p, ((0, 0), (0, Tp - T), (0, 0)))

    # Wrapper-side parameter prep: fold BN scale into the depthwise weights;
    # store the two matmul weights as bf16 in HBM (half the DMA / VMEM).
    ln_g, ln_b = params["ln_g"], params["ln_b"]
    b1, b2 = params["b1"], params["b2"]
    bn_sh = params["bn_sh"]
    dw_f = (params["dw"] * params["bn_s"]).astype(jnp.float32)
    w1_b = params["w1"].astype(jnp.bfloat16)
    w2_b = params["w2"].astype(jnp.bfloat16)
    small = (ln_g, ln_b, w1_b, b1, dw_f, bn_sh, w2_b, b2)

    def build(single_buffer_weights, use_roll):
        def _full(arr):
            nd = arr.ndim
            kwargs = {}
            if single_buffer_weights:
                # Constant index_map -> fetched once; drop the second buffer.
                kwargs["pipeline_mode"] = pl.Buffered(1)
            return pl.BlockSpec(arr.shape, lambda b, t, _nd=nd: (0,) * _nd,
                                **kwargs)

        in_specs = [
            # left halo / main tile / right halo of x.  Boundary tiles clamp
            # the halo block index; out-of-range rows are masked in-kernel.
            pl.BlockSpec((1, h8, C), lambda b, t: (b, jnp.maximum(t * r - 1, 0), 0)),
            pl.BlockSpec((1, tT, C), lambda b, t: (b, t, 0)),
            pl.BlockSpec((1, h8, C),
                         lambda b, t: (b, jnp.minimum((t + 1) * r, nblk - 1), 0)),
            _full(ln_g), _full(ln_b), _full(w1_b), _full(b1),
            _full(dw_f), _full(bn_sh), _full(w2_b), _full(b2),
        ]

        grid_spec = pltpu.PrefetchScalarGridSpec(
            num_scalar_prefetch=0,
            grid=(B, nT),
            in_specs=in_specs,
            out_specs=pl.BlockSpec((1, tT, C), lambda b, t: (b, t, 0)),
        )

        # Per-step VMEM estimate (bf16 I/O double-buffered, weights single- or
        # double-buffered, generous allowance for f32 intermediates/spills).
        wbytes = sum(a.size * a.dtype.itemsize for a in small)
        est = 2 * (tT + 2 * h8) * C * 2          # x halo+mid tiles (bf16)
        est += 2 * tT * C * 2                    # output tile (bf16)
        est += (1 if single_buffer_weights else 2) * wbytes
        est += 10 * (tT + 2 * h8) * C * 4        # f32 intermediates (xe..o, y=2C)
        vmem_limit = int(min(max(4 * est, 8 << 20), 48 << 20))

        return pl.pallas_call(
            functools.partial(conformer_conv_kernel, t_valid=T, use_roll=use_roll),
            out_shape=jax.ShapeDtypeStruct((B, Tp, C), io_dtype),
            grid_spec=grid_spec,
            compiler_params=pltpu.CompilerParams(
                dimension_semantics=("parallel", "parallel"),
                vmem_limit_bytes=vmem_limit),
        )

    args = (x_p, x_p, x_p, ln_g, ln_b, w1_b, b1, dw_f, bn_sh, w2_b, b2)
    try:
        out = jax.block_until_ready(build(True, True)(*args))
    except Exception:
        # Conservative fallback (double-buffered weight specs, value-slice
        # depthwise taps) for Pallas versions without Buffered(1)/sublane roll.
        out = jax.block_until_ready(build(False, False)(*args))

    return out if Tp == T else out[:, :T, :]


def reference_forward(x, params):
    """Pure-JAX f32 reference with the module's eval-mode semantics."""
    B, T, C = x.shape
    K = params["dw"].shape[0]
    pad = (K - 1) // 2
    mu = x.mean(-1, keepdims=True)
    var = ((x - mu) ** 2).mean(-1, keepdims=True)
    xn = (x - mu) / jnp.sqrt(var + 1e-5) * params["ln_g"][0] + params["ln_b"][0]
    y = xn @ params["w1"] + params["b1"][0]
    a, g = y[..., :C], y[..., C:]
    h = a * jax.nn.sigmoid(g)
    hp = jnp.pad(h, ((0, 0), (pad, pad), (0, 0)))
    acc = jnp.zeros_like(h)
    for k in range(K):
        acc = acc + hp[:, k:k + T, :] * params["dw"][k]
    z = acc * params["bn_s"][0] + params["bn_sh"][0]
    z = z * jax.nn.sigmoid(z)
    return z @ params["w2"] + params["b2"][0]


def make_params(key, C, K):
    ks = jax.random.split(key, 10)
    scale = 0.15
    ln_g = 1.0 + scale * jax.random.normal(ks[0], (1, C), jnp.float32)
    ln_b = scale * jax.random.normal(ks[1], (1, C), jnp.float32)
    # Pointwise conv #1: PyTorch weight (2C, C, 1) -> stored transposed (C, 2C).
    w1 = scale * jax.random.normal(ks[2], (C, 2 * C), jnp.float32)
    b1 = scale * jax.random.normal(ks[3], (1, 2 * C), jnp.float32)
    # Depthwise weight: PyTorch (C, 1, K) -> stored as (K, C).
    dw = scale * jax.random.normal(ks[4], (K, C), jnp.float32)
    # BatchNorm1d eval params folded into per-channel scale/shift.
    bn_gamma = 1.0 + scale * jax.random.normal(ks[5], (C,), jnp.float32)
    bn_beta = scale * jax.random.normal(ks[6], (C,), jnp.float32)
    bn_mean = scale * jax.random.normal(ks[7], (C,), jnp.float32)
    bn_var = 0.5 + jnp.abs(jax.random.normal(ks[8], (C,), jnp.float32))
    bn_s = (bn_gamma / jnp.sqrt(bn_var + 1e-5)).reshape(1, C)
    bn_sh = (bn_beta - bn_mean * bn_s[0]).reshape(1, C)
    # Pointwise conv #2: PyTorch weight (C, C, 1) -> stored transposed (C, C).
    w2 = scale * jax.random.normal(ks[9], (C, C), jnp.float32)
    b2 = scale * jax.random.normal(jax.random.fold_in(key, 99), (1, C),
                                   jnp.float32)
    return dict(ln_g=ln_g, ln_b=ln_b, w1=w1, b1=b1, dw=dw,
                bn_s=bn_s, bn_sh=bn_sh, w2=w2, b2=b2)


if __name__ == "__main__":
    # TODO(synk): Dropout and train-mode BatchNorm (batch statistics) are
    # stochastic/stateful; eval-mode semantics are implemented instead.
    # T=80 with tile_t=32 -> 3 time tiles (one ragged) so halo clamping,
    # masking and T-padding paths are exercised; C=128 keeps stores lane-dense.
    B, T, C, K = 2, 80, 128, 7
    key = jax.random.PRNGKey(0)
    kx, kp = jax.random.split(key)
    x = jax.random.normal(kx, (B, T, C), jnp.float32)
    params = make_params(kp, C, K)

    out_small = conformer_conv_module(x, params, tile_t=32)     # multi-tile path
    out_default = conformer_conv_module(x, params)               # default tile
    out_small = jax.block_until_ready(out_small)
    out_default = jax.block_until_ready(out_default)

    # Reference uses the bf16-rounded input (the kernel's effective input) so
    # the comparison isolates kernel numerics (bf16 matmuls, bf16 output,
    # approximate EUP reciprocals) -> relaxed tolerance.
    ref = reference_forward(x.astype(jnp.bfloat16).astype(jnp.float32), params)
    for out in (out_small, out_default):
        assert out.shape == (B, T, C)
        assert out.dtype == jnp.bfloat16
        o32 = out.astype(jnp.float32)
        max_err = float(jnp.max(jnp.abs(o32 - ref)))
        assert jnp.allclose(o32, ref, atol=1e-1, rtol=1e-1), max_err
    print("KERNEL_OK")
</pallas_src>

<mosaic_0001>
module attributes {stable_mosaic.version = 11 : i64} {
  func.func @conformer_conv_kernel(%arg0: i32, %arg1: i32, %arg2: memref<1x16x128xbf16, #tpu.memory_space<vmem>>, %arg3: memref<1x32x128xbf16, #tpu.memory_space<vmem>>, %arg4: memref<1x16x128xbf16, #tpu.memory_space<vmem>>, %arg5: memref<1x128xf32, #tpu.memory_space<vmem>>, %arg6: memref<1x128xf32, #tpu.memory_space<vmem>>, %arg7: memref<128x256xbf16, #tpu.memory_space<vmem>>, %arg8: memref<1x256xf32, #tpu.memory_space<vmem>>, %arg9: memref<7x128xf32, #tpu.memory_space<vmem>>, %arg10: memref<1x128xf32, #tpu.memory_space<vmem>>, %arg11: memref<128x128xbf16, #tpu.memory_space<vmem>>, %arg12: memref<1x128xf32, #tpu.memory_space<vmem>>, %arg13: memref<1x32x128xbf16, #tpu.memory_space<vmem>>) attributes {dimension_semantics = [#tpu.dimension_semantics<parallel>, #tpu.dimension_semantics<parallel>], iteration_bounds = array<i64: 2, 3>, scalar_prefetch = 0 : i64, scratch_operands = 0 : i64, tpu.core_type = #tpu.core_type<tc>, window_params = [{transform_indices = @transform_0, window_bounds = array<i64: 1, 16, 128>}, {transform_indices = @transform_1, window_bounds = array<i64: 1, 32, 128>}, {transform_indices = @transform_2, window_bounds = array<i64: 1, 16, 128>}, {pipeline_mode = #tpu.pipeline_mode<synchronous>, transform_indices = @transform_3, window_bounds = array<i64: 1, 128>}, {pipeline_mode = #tpu.pipeline_mode<synchronous>, transform_indices = @transform_4, window_bounds = array<i64: 1, 128>}, {pipeline_mode = #tpu.pipeline_mode<synchronous>, transform_indices = @transform_5, window_bounds = array<i64: 128, 256>}, {pipeline_mode = #tpu.pipeline_mode<synchronous>, transform_indices = @transform_6, window_bounds = array<i64: 1, 256>}, {pipeline_mode = #tpu.pipeline_mode<synchronous>, transform_indices = @transform_7, window_bounds = array<i64: 7, 128>}, {pipeline_mode = #tpu.pipeline_mode<synchronous>, transform_indices = @transform_8, window_bounds = array<i64: 1, 128>}, {pipeline_mode = #tpu.pipeline_mode<synchronous>, transform_indices = @transform_9, window_bounds = array<i64: 128, 128>}, {pipeline_mode = #tpu.pipeline_mode<synchronous>, transform_indices = @transform_10, window_bounds = array<i64: 1, 128>}, {transform_indices = @transform_11, window_bounds = array<i64: 1, 32, 128>}]} {
    %c0 = arith.constant 0 : index
    %c0_0 = arith.constant 0 : index
    %c0_1 = arith.constant 0 : index
    %0 = vector.load %arg2[%c0, %c0_0, %c0_1] : memref<1x16x128xbf16, #tpu.memory_space<vmem>>, vector<1x16x128xbf16>
    %1 = vector.shape_cast %0 : vector<1x16x128xbf16> to vector<16x128xbf16>
    %c0_2 = arith.constant 0 : index
    %c0_3 = arith.constant 0 : index
    %c0_4 = arith.constant 0 : index
    %2 = vector.load %arg3[%c0_2, %c0_3, %c0_4] : memref<1x32x128xbf16, #tpu.memory_space<vmem>>, vector<1x32x128xbf16>
    %3 = vector.shape_cast %2 : vector<1x32x128xbf16> to vector<32x128xbf16>
    %c0_5 = arith.constant 0 : index
    %c0_6 = arith.constant 0 : index
    %c0_7 = arith.constant 0 : index
    %4 = vector.load %arg4[%c0_5, %c0_6, %c0_7] : memref<1x16x128xbf16, #tpu.memory_space<vmem>>, vector<1x16x128xbf16>
    %5 = vector.shape_cast %4 : vector<1x16x128xbf16> to vector<16x128xbf16>
    %6 = tpu.concatenate %1, %3, %5 in 0 : vector<16x128xbf16>, vector<32x128xbf16>, vector<16x128xbf16> -> vector<64x128xbf16>
    %7 = arith.extf %6 : vector<64x128xbf16> to vector<64x128xf32>
    %cst = arith.constant dense<0.000000e+00> : vector<64xf32>
    %8 = vector.multi_reduction <add>, %7, %cst [1] : vector<64x128xf32> to vector<64xf32>
    %9 = vector.shape_cast %8 : vector<64xf32> to vector<64x1xf32>
    %cst_8 = arith.constant 1.280000e+02 : f32
    %10 = vector.broadcast %cst_8 : f32 to vector<64x1xf32>
    %11 = arith.divf %9, %10 : vector<64x1xf32>
    %12 = vector.broadcast %11 : vector<64x1xf32> to vector<64x128xf32>
    %13 = arith.subf %7, %12 : vector<64x128xf32>
    %14 = arith.mulf %13, %13 : vector<64x128xf32>
    %cst_9 = arith.constant dense<0.000000e+00> : vector<64xf32>
    %15 = vector.multi_reduction <add>, %14, %cst_9 [1] : vector<64x128xf32> to vector<64xf32>
    %16 = vector.shape_cast %15 : vector<64xf32> to vector<64x1xf32>
    %cst_10 = arith.constant 1.280000e+02 : f32
    %17 = vector.broadcast %cst_10 : f32 to vector<64x1xf32>
    %18 = arith.divf %16, %17 : vector<64x1xf32>
    %19 = vector.broadcast %11 : vector<64x1xf32> to vector<64x128xf32>
    %20 = arith.subf %7, %19 : vector<64x128xf32>
    %cst_11 = arith.constant 9.99999974E-6 : f32
    %21 = vector.broadcast %cst_11 : f32 to vector<64x1xf32>
    %22 = arith.addf %18, %21 : vector<64x1xf32>
    %23 = math.rsqrt %22 : vector<64x1xf32>
    %24 = vector.broadcast %23 : vector<64x1xf32> to vector<64x128xf32>
    %25 = arith.mulf %20, %24 : vector<64x128xf32>
    %c0_12 = arith.constant 0 : index
    %c0_13 = arith.constant 0 : index
    %26 = vector.load %arg5[%c0_12, %c0_13] : memref<1x128xf32, #tpu.memory_space<vmem>>, vector<1x128xf32>
    %27 = vector.broadcast %26 : vector<1x128xf32> to vector<64x128xf32>
    %28 = arith.mulf %25, %27 : vector<64x128xf32>
    %c0_14 = arith.constant 0 : index
    %c0_15 = arith.constant 0 : index
    %29 = vector.load %arg6[%c0_14, %c0_15] : memref<1x128xf32, #tpu.memory_space<vmem>>, vector<1x128xf32>
    %30 = vector.broadcast %29 : vector<1x128xf32> to vector<64x128xf32>
    %31 = arith.addf %28, %30 : vector<64x128xf32>
    %32 = arith.truncf %31 : vector<64x128xf32> to vector<64x128xbf16>
    %c0_16 = arith.constant 0 : index
    %c0_17 = arith.constant 0 : index
    %33 = vector.load %arg7[%c0_16, %c0_17] : memref<128x256xbf16, #tpu.memory_space<vmem>>, vector<128x256xbf16>
    %cst_18 = arith.constant dense<0.000000e+00> : vector<64x256xf32>
    %34 = tpu.matmul %32, %33, %cst_18 {dimension_numbers = #tpu.dot_dimension_numbers<[1], [0], [0], [1], [0, 0, 1, 1], [], []>} : vector<64x128xbf16>, vector<128x256xbf16>, vector<64x256xf32> -> vector<64x256xf32>
    %c0_19 = arith.constant 0 : index
    %c0_20 = arith.constant 0 : index
    %35 = vector.load %arg8[%c0_19, %c0_20] : memref<1x256xf32, #tpu.memory_space<vmem>>, vector<1x256xf32>
    %36 = vector.broadcast %35 : vector<1x256xf32> to vector<64x256xf32>
    %37 = arith.addf %34, %36 : vector<64x256xf32>
    %38 = vector.extract_strided_slice %37 {offsets = [0, 0], sizes = [64, 128], strides = [1, 1]} : vector<64x256xf32> to vector<64x128xf32>
    %39 = vector.extract_strided_slice %37 {offsets = [0, 128], sizes = [64, 128], strides = [1, 1]} : vector<64x256xf32> to vector<64x128xf32>
    %cst_21 = arith.constant 0.000000e+00 : f32
    %40 = vector.broadcast %cst_21 : f32 to vector<64x128xf32>
    %41 = arith.subf %40, %39 : vector<64x128xf32>
    %42 = math.exp %41 : vector<64x128xf32>
    %cst_22 = arith.constant 1.000000e+00 : f32
    %43 = vector.broadcast %cst_22 : f32 to vector<64x128xf32>
    %44 = arith.addf %43, %42 : vector<64x128xf32>
    %45 = tpu.reciprocal %44 {approx = true} : vector<64x128xf32> -> vector<64x128xf32>
    %46 = arith.mulf %38, %45 : vector<64x128xf32>
    %47 = tpu.iota {dimensions = array<i32: 0>} : vector<64x1xi32>
    %c32_i32 = arith.constant 32 : i32
    %48 = arith.muli %arg1, %c32_i32 : i32
    %49 = vector.broadcast %48 : i32 to vector<64x1xi32>
    %50 = arith.addi %47, %49 : vector<64x1xi32>
    %c16_i32 = arith.constant 16 : i32
    %51 = vector.broadcast %c16_i32 : i32 to vector<64x1xi32>
    %52 = arith.subi %50, %51 : vector<64x1xi32>
    %c0_i32 = arith.constant 0 : i32
    %53 = vector.broadcast %c0_i32 : i32 to vector<64x1xi32>
    %54 = arith.cmpi sge, %52, %53 : vector<64x1xi32>
    %c80_i32 = arith.constant 80 : i32
    %55 = vector.broadcast %c80_i32 : i32 to vector<64x1xi32>
    %56 = arith.cmpi slt, %52, %55 : vector<64x1xi32>
    %57 = arith.andi %54, %56 : vector<64x1xi1>
    %58 = arith.extui %57 : vector<64x1xi1> to vector<64x1xi32>
    %59 = arith.sitofp %58 : vector<64x1xi32> to vector<64x1xf32>
    %60 = vector.broadcast %59 : vector<64x1xf32> to vector<64x128xf32>
    %61 = arith.mulf %46, %60 : vector<64x128xf32>
    %c0_23 = arith.constant 0 : index
    %c0_24 = arith.constant 0 : index
    %62 = vector.load %arg9[%c0_23, %c0_24] : memref<7x128xf32, #tpu.memory_space<vmem>>, vector<7x128xf32>
    %cst_25 = arith.constant 0.000000e+00 : f32
    %63 = vector.broadcast %cst_25 : f32 to vector<32x128xf32>
    %c3_i32 = arith.constant 3 : i32
    %64 = tpu.dynamic_rotate %61 by %c3_i32 dim 0 : vector<64x128xf32>, i32 -> vector<64x128xf32>
    %65 = vector.extract_strided_slice %64 {offsets = [16, 0], sizes = [32, 128], strides = [1, 1]} : vector<64x128xf32> to vector<32x128xf32>
    %66 = vector.extract_strided_slice %62 {offsets = [0, 0], sizes = [1, 128], strides = [1, 1]} : vector<7x128xf32> to vector<1x128xf32>
    %67 = vector.broadcast %66 : vector<1x128xf32> to vector<32x128xf32>
    %68 = arith.mulf %65, %67 : vector<32x128xf32>
    %69 = arith.addf %63, %68 : vector<32x128xf32>
    %c2_i32 = arith.constant 2 : i32
    %70 = tpu.dynamic_rotate %61 by %c2_i32 dim 0 : vector<64x128xf32>, i32 -> vector<64x128xf32>
    %71 = vector.extract_strided_slice %70 {offsets = [16, 0], sizes = [32, 128], strides = [1, 1]} : vector<64x128xf32> to vector<32x128xf32>
    %72 = vector.extract_strided_slice %62 {offsets = [1, 0], sizes = [1, 128], strides = [1, 1]} : vector<7x128xf32> to vector<1x128xf32>
    %73 = vector.broadcast %72 : vector<1x128xf32> to vector<32x128xf32>
    %74 = arith.mulf %71, %73 : vector<32x128xf32>
    %75 = arith.addf %69, %74 : vector<32x128xf32>
    %c1_i32 = arith.constant 1 : i32
    %76 = tpu.dynamic_rotate %61 by %c1_i32 dim 0 : vector<64x128xf32>, i32 -> vector<64x128xf32>
    %77 = vector.extract_strided_slice %76 {offsets = [16, 0], sizes = [32, 128], strides = [1, 1]} : vector<64x128xf32> to vector<32x128xf32>
    %78 = vector.extract_strided_slice %62 {offsets = [2, 0], sizes = [1, 128], strides = [1, 1]} : vector<7x128xf32> to vector<1x128xf32>
    %79 = vector.broadcast %78 : vector<1x128xf32> to vector<32x128xf32>
    %80 = arith.mulf %77, %79 : vector<32x128xf32>
    %81 = arith.addf %75, %80 : vector<32x128xf32>
    %82 = vector.extract_strided_slice %61 {offsets = [16, 0], sizes = [32, 128], strides = [1, 1]} : vector<64x128xf32> to vector<32x128xf32>
    %83 = vector.extract_strided_slice %62 {offsets = [3, 0], sizes = [1, 128], strides = [1, 1]} : vector<7x128xf32> to vector<1x128xf32>
    %84 = vector.broadcast %83 : vector<1x128xf32> to vector<32x128xf32>
    %85 = arith.mulf %82, %84 : vector<32x128xf32>
    %86 = arith.addf %81, %85 : vector<32x128xf32>
    %c63_i32 = arith.constant 63 : i32
    %87 = tpu.dynamic_rotate %61 by %c63_i32 dim 0 : vector<64x128xf32>, i32 -> vector<64x128xf32>
    %88 = vector.extract_strided_slice %87 {offsets = [16, 0], sizes = [32, 128], strides = [1, 1]} : vector<64x128xf32> to vector<32x128xf32>
    %89 = vector.extract_strided_slice %62 {offsets = [4, 0], sizes = [1, 128], strides = [1, 1]} : vector<7x128xf32> to vector<1x128xf32>
    %90 = vector.broadcast %89 : vector<1x128xf32> to vector<32x128xf32>
    %91 = arith.mulf %88, %90 : vector<32x128xf32>
    %92 = arith.addf %86, %91 : vector<32x128xf32>
    %c62_i32 = arith.constant 62 : i32
    %93 = tpu.dynamic_rotate %61 by %c62_i32 dim 0 : vector<64x128xf32>, i32 -> vector<64x128xf32>
    %94 = vector.extract_strided_slice %93 {offsets = [16, 0], sizes = [32, 128], strides = [1, 1]} : vector<64x128xf32> to vector<32x128xf32>
    %95 = vector.extract_strided_slice %62 {offsets = [5, 0], sizes = [1, 128], strides = [1, 1]} : vector<7x128xf32> to vector<1x128xf32>
    %96 = vector.broadcast %95 : vector<1x128xf32> to vector<32x128xf32>
    %97 = arith.mulf %94, %96 : vector<32x128xf32>
    %98 = arith.addf %92, %97 : vector<32x128xf32>
    %c61_i32 = arith.constant 61 : i32
    %99 = tpu.dynamic_rotate %61 by %c61_i32 dim 0 : vector<64x128xf32>, i32 -> vector<64x128xf32>
    %100 = vector.extract_strided_slice %99 {offsets = [16, 0], sizes = [32, 128], strides = [1, 1]} : vector<64x128xf32> to vector<32x128xf32>
    %101 = vector.extract_strided_slice %62 {offsets = [6, 0], sizes = [1, 128], strides = [1, 1]} : vector<7x128xf32> to vector<1x128xf32>
    %102 = vector.broadcast %101 : vector<1x128xf32> to vector<32x128xf32>
    %103 = arith.mulf %100, %102 : vector<32x128xf32>
    %104 = arith.addf %98, %103 : vector<32x128xf32>
    %c0_26 = arith.constant 0 : index
    %c0_27 = arith.constant 0 : index
    %105 = vector.load %arg10[%c0_26, %c0_27] : memref<1x128xf32, #tpu.memory_space<vmem>>, vector<1x128xf32>
    %106 = vector.broadcast %105 : vector<1x128xf32> to vector<32x128xf32>
    %107 = arith.addf %104, %106 : vector<32x128xf32>
    %cst_28 = arith.constant 0.000000e+00 : f32
    %108 = vector.broadcast %cst_28 : f32 to vector<32x128xf32>
    %109 = arith.subf %108, %107 : vector<32x128xf32>
    %110 = math.exp %109 : vector<32x128xf32>
    %cst_29 = arith.constant 1.000000e+00 : f32
    %111 = vector.broadcast %cst_29 : f32 to vector<32x128xf32>
    %112 = arith.addf %111, %110 : vector<32x128xf32>
    %113 = tpu.reciprocal %112 {approx = true} : vector<32x128xf32> -> vector<32x128xf32>
    %114 = arith.mulf %107, %113 : vector<32x128xf32>
    %115 = arith.truncf %114 : vector<32x128xf32> to vector<32x128xbf16>
    %c0_30 = arith.constant 0 : index
    %c0_31 = arith.constant 0 : index
    %116 = vector.load %arg11[%c0_30, %c0_31] : memref<128x128xbf16, #tpu.memory_space<vmem>>, vector<128x128xbf16>
    %cst_32 = arith.constant dense<0.000000e+00> : vector<32x128xf32>
    %117 = tpu.matmul %115, %116, %cst_32 {dimension_numbers = #tpu.dot_dimension_numbers<[1], [0], [0], [1], [0, 0, 1, 1], [], []>} : vector<32x128xbf16>, vector<128x128xbf16>, vector<32x128xf32> -> vector<32x128xf32>
    %c0_33 = arith.constant 0 : index
    %c0_34 = arith.constant 0 : index
    %118 = vector.load %arg12[%c0_33, %c0_34] : memref<1x128xf32, #tpu.memory_space<vmem>>, vector<1x128xf32>
    %119 = vector.broadcast %118 : vector<1x128xf32> to vector<32x128xf32>
    %120 = arith.addf %117, %119 : vector<32x128xf32>
    %121 = arith.truncf %120 : vector<32x128xf32> to vector<32x128xbf16>
    %c0_35 = arith.constant 0 : index
    %c0_36 = arith.constant 0 : index
    %c0_37 = arith.constant 0 : index
    %122 = vector.load %arg13[%c0_35, %c0_36, %c0_37] : memref<1x32x128xbf16, #tpu.memory_space<vmem>>, vector<1x32x128xbf16>
    %123 = vector.shape_cast %122 : vector<1x32x128xbf16> to vector<32x128xbf16>
    %124 = vector.shape_cast %121 : vector<32x128xbf16> to vector<1x32x128xbf16>
    tpu.vector_store %arg13[%c0_35, %c0_36, %c0_37], %124 {strides = array<i32>} : memref<1x32x128xbf16, #tpu.memory_space<vmem>>, vector<1x32x128xbf16>,
    return
  }
  func.func @transform_0(%arg0: i32, %arg1: i32) -> (i32, i32, i32) {
    %c2_i32 = arith.constant 2 : i32
    %0 = arith.muli %arg1, %c2_i32 : i32
    %c1_i32 = arith.constant 1 : i32
    %1 = arith.subi %0, %c1_i32 : i32
    %c0_i32 = arith.constant 0 : i32
    %2 = arith.maxsi %1, %c0_i32 : i32
    %c0_i32_0 = arith.constant 0 : i32
    %c0_i32_1 = arith.constant 0 : i32
    return %arg0, %2, %c0_i32_0 : i32, i32, i32
  }
  func.func @transform_1(%arg0: i32, %arg1: i32) -> (i32, i32, i32) {
    %c0_i32 = arith.constant 0 : i32
    %c0_i32_0 = arith.constant 0 : i32
    return %arg0, %arg1, %c0_i32 : i32, i32, i32
  }
  func.func @transform_2(%arg0: i32, %arg1: i32) -> (i32, i32, i32) {
    %c1_i32 = arith.constant 1 : i32
    %0 = arith.addi %arg1, %c1_i32 : i32
    %c2_i32 = arith.constant 2 : i32
    %1 = arith.muli %0, %c2_i32 : i32
    %c5_i32 = arith.constant 5 : i32
    %2 = arith.minsi %1, %c5_i32 : i32
    %c0_i32 = arith.constant 0 : i32
    %c0_i32_0 = arith.constant 0 : i32
    return %arg0, %2, %c0_i32 : i32, i32, i32
  }
  func.func @transform_3(%arg0: i32, %arg1: i32) -> (i32, i32) {
    %c0_i32 = arith.constant 0 : i32
    %c0_i32_0 = arith.constant 0 : i32
    %c0_i32_1 = arith.constant 0 : i32
    return %c0_i32, %c0_i32_0 : i32, i32
  }
  func.func @transform_4(%arg0: i32, %arg1: i32) -> (i32, i32) {
    %c0_i32 = arith.constant 0 : i32
    %c0_i32_0 = arith.constant 0 : i32
    %c0_i32_1 = arith.constant 0 : i32
    return %c0_i32, %c0_i32_0 : i32, i32
  }
  func.func @transform_5(%arg0: i32, %arg1: i32) -> (i32, i32) {
    %c0_i32 = arith.constant 0 : i32
    %c0_i32_0 = arith.constant 0 : i32
    %c0_i32_1 = arith.constant 0 : i32
    return %c0_i32, %c0_i32_0 : i32, i32
  }
  func.func @transform_6(%arg0: i32, %arg1: i32) -> (i32, i32) {
    %c0_i32 = arith.constant 0 : i32
    %c0_i32_0 = arith.constant 0 : i32
    %c0_i32_1 = arith.constant 0 : i32
    return %c0_i32, %c0_i32_0 : i32, i32
  }
  func.func @transform_7(%arg0: i32, %arg1: i32) -> (i32, i32) {
    %c0_i32 = arith.constant 0 : i32
    %c0_i32_0 = arith.constant 0 : i32
    %c0_i32_1 = arith.constant 0 : i32
    return %c0_i32, %c0_i32_0 : i32, i32
  }
  func.func @transform_8(%arg0: i32, %arg1: i32) -> (i32, i32) {
    %c0_i32 = arith.constant 0 : i32
    %c0_i32_0 = arith.constant 0 : i32
    %c0_i32_1 = arith.constant 0 : i32
    return %c0_i32, %c0_i32_0 : i32, i32
  }
  func.func @transform_9(%arg0: i32, %arg1: i32) -> (i32, i32) {
    %c0_i32 = arith.constant 0 : i32
    %c0_i32_0 = arith.constant 0 : i32
    %c0_i32_1 = arith.constant 0 : i32
    return %c0_i32, %c0_i32_0 : i32, i32
  }
  func.func @transform_10(%arg0: i32, %arg1: i32) -> (i32, i32) {
    %c0_i32 = arith.constant 0 : i32
    %c0_i32_0 = arith.constant 0 : i32
    %c0_i32_1 = arith.constant 0 : i32
    return %c0_i32, %c0_i32_0 : i32, i32
  }
  func.func @transform_11(%arg0: i32, %arg1: i32) -> (i32, i32, i32) {
    %c0_i32 = arith.constant 0 : i32
    %c0_i32_0 = arith.constant 0 : i32
    return %arg0, %arg1, %c0_i32 : i32, i32, i32
  }
}

module attributes {stable_mosaic.version = 11 : i64} {
  func.func @conformer_conv_kernel(%arg0: i32, %arg1: i32, %arg2: memref<1x16x128xbf16, #tpu.memory_space<vmem>>, %arg3: memref<1x32x128xbf16, #tpu.memory_space<vmem>>, %arg4: memref<1x16x128xbf16, #tpu.memory_space<vmem>>, %arg5: memref<1x128xf32, #tpu.memory_space<vmem>>, %arg6: memref<1x128xf32, #tpu.memory_space<vmem>>, %arg7: memref<128x256xbf16, #tpu.memory_space<vmem>>, %arg8: memref<1x256xf32, #tpu.memory_space<vmem>>, %arg9: memref<7x128xf32, #tpu.memory_space<vmem>>, %arg10: memref<1x128xf32, #tpu.memory_space<vmem>>, %arg11: memref<128x128xbf16, #tpu.memory_space<vmem>>, %arg12: memref<1x128xf32, #tpu.memory_space<vmem>>, %arg13: memref<1x32x128xbf16, #tpu.memory_space<vmem>>) attributes {dimension_semantics = [#tpu.dimension_semantics<parallel>, #tpu.dimension_semantics<parallel>], iteration_bounds = array<i64: 2, 3>, scalar_prefetch = 0 : i64, scratch_operands = 0 : i64, tpu.core_type = #tpu.core_type<tc>, window_params = [{transform_indices = @transform_0, window_bounds = array<i64: 1, 16, 128>}, {transform_indices = @transform_1, window_bounds = array<i64: 1, 32, 128>}, {transform_indices = @transform_2, window_bounds = array<i64: 1, 16, 128>}, {pipeline_mode = #tpu.pipeline_mode<synchronous>, transform_indices = @transform_3, window_bounds = array<i64: 1, 128>}, {pipeline_mode = #tpu.pipeline_mode<synchronous>, transform_indices = @transform_4, window_bounds = array<i64: 1, 128>}, {pipeline_mode = #tpu.pipeline_mode<synchronous>, transform_indices = @transform_5, window_bounds = array<i64: 128, 256>}, {pipeline_mode = #tpu.pipeline_mode<synchronous>, transform_indices = @transform_6, window_bounds = array<i64: 1, 256>}, {pipeline_mode = #tpu.pipeline_mode<synchronous>, transform_indices = @transform_7, window_bounds = array<i64: 7, 128>}, {pipeline_mode = #tpu.pipeline_mode<synchronous>, transform_indices = @transform_8, window_bounds = array<i64: 1, 128>}, {pipeline_mode = #tpu.pipeline_mode<synchronous>, transform_indices = @transform_9, window_bounds = array<i64: 128, 128>}, {pipeline_mode = #tpu.pipeline_mode<synchronous>, transform_indices = @transform_10, window_bounds = array<i64: 1, 128>}, {transform_indices = @transform_11, window_bounds = array<i64: 1, 32, 128>}]} {
    %c0 = arith.constant 0 : index
    %c0_0 = arith.constant 0 : index
    %c0_1 = arith.constant 0 : index
    %0 = vector.load %arg2[%c0, %c0_0, %c0_1] : memref<1x16x128xbf16, #tpu.memory_space<vmem>>, vector<1x16x128xbf16>
    %1 = vector.shape_cast %0 : vector<1x16x128xbf16> to vector<16x128xbf16>
    %c0_2 = arith.constant 0 : index
    %c0_3 = arith.constant 0 : index
    %c0_4 = arith.constant 0 : index
    %2 = vector.load %arg3[%c0_2, %c0_3, %c0_4] : memref<1x32x128xbf16, #tpu.memory_space<vmem>>, vector<1x32x128xbf16>
    %3 = vector.shape_cast %2 : vector<1x32x128xbf16> to vector<32x128xbf16>
    %c0_5 = arith.constant 0 : index
    %c0_6 = arith.constant 0 : index
    %c0_7 = arith.constant 0 : index
    %4 = vector.load %arg4[%c0_5, %c0_6, %c0_7] : memref<1x16x128xbf16, #tpu.memory_space<vmem>>, vector<1x16x128xbf16>
    %5 = vector.shape_cast %4 : vector<1x16x128xbf16> to vector<16x128xbf16>
    %6 = tpu.concatenate %1, %3, %5 in 0 : vector<16x128xbf16>, vector<32x128xbf16>, vector<16x128xbf16> -> vector<64x128xbf16>
    %7 = arith.extf %6 : vector<64x128xbf16> to vector<64x128xf32>
    %cst = arith.constant dense<0.000000e+00> : vector<64xf32>
    %8 = vector.multi_reduction <add>, %7, %cst [1] : vector<64x128xf32> to vector<64xf32>
    %9 = vector.shape_cast %8 : vector<64xf32> to vector<64x1xf32>
    %cst_8 = arith.constant 1.280000e+02 : f32
    %10 = vector.broadcast %cst_8 : f32 to vector<64x1xf32>
    %11 = arith.divf %9, %10 : vector<64x1xf32>
    %12 = vector.broadcast %11 : vector<64x1xf32> to vector<64x128xf32>
    %13 = arith.subf %7, %12 : vector<64x128xf32>
    %14 = arith.mulf %13, %13 : vector<64x128xf32>
    %cst_9 = arith.constant dense<0.000000e+00> : vector<64xf32>
    %15 = vector.multi_reduction <add>, %14, %cst_9 [1] : vector<64x128xf32> to vector<64xf32>
    %16 = vector.shape_cast %15 : vector<64xf32> to vector<64x1xf32>
    %cst_10 = arith.constant 1.280000e+02 : f32
    %17 = vector.broadcast %cst_10 : f32 to vector<64x1xf32>
    %18 = arith.divf %16, %17 : vector<64x1xf32>
    %19 = vector.broadcast %11 : vector<64x1xf32> to vector<64x128xf32>
    %20 = arith.subf %7, %19 : vector<64x128xf32>
    %cst_11 = arith.constant 9.99999974E-6 : f32
    %21 = vector.broadcast %cst_11 : f32 to vector<64x1xf32>
    %22 = arith.addf %18, %21 : vector<64x1xf32>
    %23 = math.rsqrt %22 : vector<64x1xf32>
    %24 = vector.broadcast %23 : vector<64x1xf32> to vector<64x128xf32>
    %25 = arith.mulf %20, %24 : vector<64x128xf32>
    %c0_12 = arith.constant 0 : index
    %c0_13 = arith.constant 0 : index
    %26 = vector.load %arg5[%c0_12, %c0_13] : memref<1x128xf32, #tpu.memory_space<vmem>>, vector<1x128xf32>
    %27 = vector.broadcast %26 : vector<1x128xf32> to vector<64x128xf32>
    %28 = arith.mulf %25, %27 : vector<64x128xf32>
    %c0_14 = arith.constant 0 : index
    %c0_15 = arith.constant 0 : index
    %29 = vector.load %arg6[%c0_14, %c0_15] : memref<1x128xf32, #tpu.memory_space<vmem>>, vector<1x128xf32>
    %30 = vector.broadcast %29 : vector<1x128xf32> to vector<64x128xf32>
    %31 = arith.addf %28, %30 : vector<64x128xf32>
    %32 = arith.truncf %31 : vector<64x128xf32> to vector<64x128xbf16>
    %c0_16 = arith.constant 0 : index
    %c0_17 = arith.constant 0 : index
    %33 = vector.load %arg7[%c0_16, %c0_17] : memref<128x256xbf16, #tpu.memory_space<vmem>>, vector<128x256xbf16>
    %cst_18 = arith.constant dense<0.000000e+00> : vector<64x256xf32>
    %34 = tpu.matmul %32, %33, %cst_18 {dimension_numbers = #tpu.dot_dimension_numbers<[1], [0], [0], [1], [0, 0, 1, 1], [], []>} : vector<64x128xbf16>, vector<128x256xbf16>, vector<64x256xf32> -> vector<64x256xf32>
    %c0_19 = arith.constant 0 : index
    %c0_20 = arith.constant 0 : index
    %35 = vector.load %arg8[%c0_19, %c0_20] : memref<1x256xf32, #tpu.memory_space<vmem>>, vector<1x256xf32>
    %36 = vector.broadcast %35 : vector<1x256xf32> to vector<64x256xf32>
    %37 = arith.addf %34, %36 : vector<64x256xf32>
    %38 = vector.extract_strided_slice %37 {offsets = [0, 0], sizes = [64, 128], strides = [1, 1]} : vector<64x256xf32> to vector<64x128xf32>
    %39 = vector.extract_strided_slice %37 {offsets = [0, 128], sizes = [64, 128], strides = [1, 1]} : vector<64x256xf32> to vector<64x128xf32>
    %cst_21 = arith.constant 0.000000e+00 : f32
    %40 = vector.broadcast %cst_21 : f32 to vector<64x128xf32>
    %41 = arith.subf %40, %39 : vector<64x128xf32>
    %42 = math.exp %41 : vector<64x128xf32>
    %cst_22 = arith.constant 1.000000e+00 : f32
    %43 = vector.broadcast %cst_22 : f32 to vector<64x128xf32>
    %44 = arith.addf %43, %42 : vector<64x128xf32>
    %45 = tpu.reciprocal %44 {approx = true} : vector<64x128xf32> -> vector<64x128xf32>
    %46 = arith.mulf %38, %45 : vector<64x128xf32>
    %47 = tpu.iota {dimensions = array<i32: 0>} : vector<64x1xi32>
    %c32_i32 = arith.constant 32 : i32
    %48 = arith.muli %arg1, %c32_i32 : i32
    %49 = vector.broadcast %48 : i32 to vector<64x1xi32>
    %50 = arith.addi %47, %49 : vector<64x1xi32>
    %c16_i32 = arith.constant 16 : i32
    %51 = vector.broadcast %c16_i32 : i32 to vector<64x1xi32>
    %52 = arith.subi %50, %51 : vector<64x1xi32>
    %c0_i32 = arith.constant 0 : i32
    %53 = vector.broadcast %c0_i32 : i32 to vector<64x1xi32>
    %54 = arith.cmpi sge, %52, %53 : vector<64x1xi32>
    %c80_i32 = arith.constant 80 : i32
    %55 = vector.broadcast %c80_i32 : i32 to vector<64x1xi32>
    %56 = arith.cmpi slt, %52, %55 : vector<64x1xi32>
    %57 = arith.andi %54, %56 : vector<64x1xi1>
    %58 = arith.extui %57 : vector<64x1xi1> to vector<64x1xi32>
    %59 = arith.sitofp %58 : vector<64x1xi32> to vector<64x1xf32>
    %60 = vector.broadcast %59 : vector<64x1xf32> to vector<64x128xf32>
    %61 = arith.mulf %46, %60 : vector<64x128xf32>
    %c0_23 = arith.constant 0 : index
    %c0_24 = arith.constant 0 : index
    %62 = vector.load %arg9[%c0_23, %c0_24] : memref<7x128xf32, #tpu.memory_space<vmem>>, vector<7x128xf32>
    %cst_25 = arith.constant 0.000000e+00 : f32
    %63 = vector.broadcast %cst_25 : f32 to vector<32x128xf32>
    %64 = vector.extract_strided_slice %61 {offsets = [13, 0], sizes = [32, 128], strides = [1, 1]} : vector<64x128xf32> to vector<32x128xf32>
    %65 = vector.extract_strided_slice %62 {offsets = [0, 0], sizes = [1, 128], strides = [1, 1]} : vector<7x128xf32> to vector<1x128xf32>
    %66 = vector.broadcast %65 : vector<1x128xf32> to vector<32x128xf32>
    %67 = arith.mulf %64, %66 : vector<32x128xf32>
    %68 = arith.addf %63, %67 : vector<32x128xf32>
    %69 = vector.extract_strided_slice %61 {offsets = [14, 0], sizes = [32, 128], strides = [1, 1]} : vector<64x128xf32> to vector<32x128xf32>
    %70 = vector.extract_strided_slice %62 {offsets = [1, 0], sizes = [1, 128], strides = [1, 1]} : vector<7x128xf32> to vector<1x128xf32>
    %71 = vector.broadcast %70 : vector<1x128xf32> to vector<32x128xf32>
    %72 = arith.mulf %69, %71 : vector<32x128xf32>
    %73 = arith.addf %68, %72 : vector<32x128xf32>
    %74 = vector.extract_strided_slice %61 {offsets = [15, 0], sizes = [32, 128], strides = [1, 1]} : vector<64x128xf32> to vector<32x128xf32>
    %75 = vector.extract_strided_slice %62 {offsets = [2, 0], sizes = [1, 128], strides = [1, 1]} : vector<7x128xf32> to vector<1x128xf32>
    %76 = vector.broadcast %75 : vector<1x128xf32> to vector<32x128xf32>
    %77 = arith.mulf %74, %76 : vector<32x128xf32>
    %78 = arith.addf %73, %77 : vector<32x128xf32>
    %79 = vector.extract_strided_slice %61 {offsets = [16, 0], sizes = [32, 128], strides = [1, 1]} : vector<64x128xf32> to vector<32x128xf32>
    %80 = vector.extract_strided_slice %62 {offsets = [3, 0], sizes = [1, 128], strides = [1, 1]} : vector<7x128xf32> to vector<1x128xf32>
    %81 = vector.broadcast %80 : vector<1x128xf32> to vector<32x128xf32>
    %82 = arith.mulf %79, %81 : vector<32x128xf32>
    %83 = arith.addf %78, %82 : vector<32x128xf32>
    %84 = vector.extract_strided_slice %61 {offsets = [17, 0], sizes = [32, 128], strides = [1, 1]} : vector<64x128xf32> to vector<32x128xf32>
    %85 = vector.extract_strided_slice %62 {offsets = [4, 0], sizes = [1, 128], strides = [1, 1]} : vector<7x128xf32> to vector<1x128xf32>
    %86 = vector.broadcast %85 : vector<1x128xf32> to vector<32x128xf32>
    %87 = arith.mulf %84, %86 : vector<32x128xf32>
    %88 = arith.addf %83, %87 : vector<32x128xf32>
    %89 = vector.extract_strided_slice %61 {offsets = [18, 0], sizes = [32, 128], strides = [1, 1]} : vector<64x128xf32> to vector<32x128xf32>
    %90 = vector.extract_strided_slice %62 {offsets = [5, 0], sizes = [1, 128], strides = [1, 1]} : vector<7x128xf32> to vector<1x128xf32>
    %91 = vector.broadcast %90 : vector<1x128xf32> to vector<32x128xf32>
    %92 = arith.mulf %89, %91 : vector<32x128xf32>
    %93 = arith.addf %88, %92 : vector<32x128xf32>
    %94 = vector.extract_strided_slice %61 {offsets = [19, 0], sizes = [32, 128], strides = [1, 1]} : vector<64x128xf32> to vector<32x128xf32>
    %95 = vector.extract_strided_slice %62 {offsets = [6, 0], sizes = [1, 128], strides = [1, 1]} : vector<7x128xf32> to vector<1x128xf32>
    %96 = vector.broadcast %95 : vector<1x128xf32> to vector<32x128xf32>
    %97 = arith.mulf %94, %96 : vector<32x128xf32>
    %98 = arith.addf %93, %97 : vector<32x128xf32>
    %c0_26 = arith.constant 0 : index
    %c0_27 = arith.constant 0 : index
    %99 = vector.load %arg10[%c0_26, %c0_27] : memref<1x128xf32, #tpu.memory_space<vmem>>, vector<1x128xf32>
    %100 = vector.broadcast %99 : vector<1x128xf32> to vector<32x128xf32>
    %101 = arith.addf %98, %100 : vector<32x128xf32>
    %cst_28 = arith.constant 0.000000e+00 : f32
    %102 = vector.broadcast %cst_28 : f32 to vector<32x128xf32>
    %103 = arith.subf %102, %101 : vector<32x128xf32>
    %104 = math.exp %103 : vector<32x128xf32>
    %cst_29 = arith.constant 1.000000e+00 : f32
    %105 = vector.broadcast %cst_29 : f32 to vector<32x128xf32>
    %106 = arith.addf %105, %104 : vector<32x128xf32>
    %107 = tpu.reciprocal %106 {approx = true} : vector<32x128xf32> -> vector<32x128xf32>
    %108 = arith.mulf %101, %107 : vector<32x128xf32>
    %109 = arith.truncf %108 : vector<32x128xf32> to vector<32x128xbf16>
    %c0_30 = arith.constant 0 : index
    %c0_31 = arith.constant 0 : index
    %110 = vector.load %arg11[%c0_30, %c0_31] : memref<128x128xbf16, #tpu.memory_space<vmem>>, vector<128x128xbf16>
    %cst_32 = arith.constant dense<0.000000e+00> : vector<32x128xf32>
    %111 = tpu.matmul %109, %110, %cst_32 {dimension_numbers = #tpu.dot_dimension_numbers<[1], [0], [0], [1], [0, 0, 1, 1], [], []>} : vector<32x128xbf16>, vector<128x128xbf16>, vector<32x128xf32> -> vector<32x128xf32>
    %c0_33 = arith.constant 0 : index
    %c0_34 = arith.constant 0 : index
    %112 = vector.load %arg12[%c0_33, %c0_34] : memref<1x128xf32, #tpu.memory_space<vmem>>, vector<1x128xf32>
    %113 = vector.broadcast %112 : vector<1x128xf32> to vector<32x128xf32>
    %114 = arith.addf %111, %113 : vector<32x128xf32>
    %115 = arith.truncf %114 : vector<32x128xf32> to vector<32x128xbf16>
    %c0_35 = arith.constant 0 : index
    %c0_36 = arith.constant 0 : index
    %c0_37 = arith.constant 0 : index
    %116 = vector.load %arg13[%c0_35, %c0_36, %c0_37] : memref<1x32x128xbf16, #tpu.memory_space<vmem>>, vector<1x32x128xbf16>
    %117 = vector.shape_cast %116 : vector<1x32x128xbf16> to vector<32x128xbf16>
    %118 = vector.shape_cast %115 : vector<32x128xbf16> to vector<1x32x128xbf16>
    tpu.vector_store %arg13[%c0_35, %c0_36, %c0_37], %118 {strides = array<i32>} : memref<1x32x128xbf16, #tpu.memory_space<vmem>>, vector<1x32x128xbf16>,
    return
  }
  func.func @transform_0(%arg0: i32, %arg1: i32) -> (i32, i32, i32) {
    %c2_i32 = arith.constant 2 : i32
    %0 = arith.muli %arg1, %c2_i32 : i32
    %c1_i32 = arith.constant 1 : i32
    %1 = arith.subi %0, %c1_i32 : i32
    %c0_i32 = arith.constant 0 : i32
    %2 = arith.maxsi %1, %c0_i32 : i32
    %c0_i32_0 = arith.constant 0 : i32
    %c0_i32_1 = arith.constant 0 : i32
    return %arg0, %2, %c0_i32_0 : i32, i32, i32
  }
  func.func @transform_1(%arg0: i32, %arg1: i32) -> (i32, i32, i32) {
    %c0_i32 = arith.constant 0 : i32
    %c0_i32_0 = arith.constant 0 : i32
    return %arg0, %arg1, %c0_i32 : i32, i32, i32
  }
  func.func @transform_2(%arg0: i32, %arg1: i32) -> (i32, i32, i32) {
    %c1_i32 = arith.constant 1 : i32
    %0 = arith.addi %arg1, %c1_i32 : i32
    %c2_i32 = arith.constant 2 : i32
    %1 = arith.muli %0, %c2_i32 : i32
    %c5_i32 = arith.constant 5 : i32
    %2 = arith.minsi %1, %c5_i32 : i32
    %c0_i32 = arith.constant 0 : i32
    %c0_i32_0 = arith.constant 0 : i32
    return %arg0, %2, %c0_i32 : i32, i32, i32
  }
  func.func @transform_3(%arg0: i32, %arg1: i32) -> (i32, i32) {
    %c0_i32 = arith.constant 0 : i32
    %c0_i32_0 = arith.constant 0 : i32
    %c0_i32_1 = arith.constant 0 : i32
    return %c0_i32, %c0_i32_0 : i32, i32
  }
  func.func @transform_4(%arg0: i32, %arg1: i32) -> (i32, i32) {
    %c0_i32 = arith.constant 0 : i32
    %c0_i32_0 = arith.constant 0 : i32
    %c0_i32_1 = arith.constant 0 : i32
    return %c0_i32, %c0_i32_0 : i32, i32
  }
  func.func @transform_5(%arg0: i32, %arg1: i32) -> (i32, i32) {
    %c0_i32 = arith.constant 0 : i32
    %c0_i32_0 = arith.constant 0 : i32
    %c0_i32_1 = arith.constant 0 : i32
    return %c0_i32, %c0_i32_0 : i32, i32
  }
  func.func @transform_6(%arg0: i32, %arg1: i32) -> (i32, i32) {
    %c0_i32 = arith.constant 0 : i32
    %c0_i32_0 = arith.constant 0 : i32
    %c0_i32_1 = arith.constant 0 : i32
    return %c0_i32, %c0_i32_0 : i32, i32
  }
  func.func @transform_7(%arg0: i32, %arg1: i32) -> (i32, i32) {
    %c0_i32 = arith.constant 0 : i32
    %c0_i32_0 = arith.constant 0 : i32
    %c0_i32_1 = arith.constant 0 : i32
    return %c0_i32, %c0_i32_0 : i32, i32
  }
  func.func @transform_8(%arg0: i32, %arg1: i32) -> (i32, i32) {
    %c0_i32 = arith.constant 0 : i32
    %c0_i32_0 = arith.constant 0 : i32
    %c0_i32_1 = arith.constant 0 : i32
    return %c0_i32, %c0_i32_0 : i32, i32
  }
  func.func @transform_9(%arg0: i32, %arg1: i32) -> (i32, i32) {
    %c0_i32 = arith.constant 0 : i32
    %c0_i32_0 = arith.constant 0 : i32
    %c0_i32_1 = arith.constant 0 : i32
    return %c0_i32, %c0_i32_0 : i32, i32
  }
  func.func @transform_10(%arg0: i32, %arg1: i32) -> (i32, i32) {
    %c0_i32 = arith.constant 0 : i32
    %c0_i32_0 = arith.constant 0 : i32
    %c0_i32_1 = arith.constant 0 : i32
    return %c0_i32, %c0_i32_0 : i32, i32
  }
  func.func @transform_11(%arg0: i32, %arg1: i32) -> (i32, i32, i32) {
    %c0_i32 = arith.constant 0 : i32
    %c0_i32_0 = arith.constant 0 : i32
    return %arg0, %arg1, %c0_i32 : i32, i32, i32
  }
}

</mosaic_0001>

<llo_original>
// kernel: tpu_custom_call.1
$region0: #{tpu_custom_call.1}
  #allocation0 [shape = 'u32[]', space=smem, size = 0x4, offset = 0x4, fixed_abs, tag = 'smem constant byte address 0x4 - core index']
  #allocation1 [shape = 'u32[144,128]{1,0:T(1,128)}', space=vmem, size = 0x12000, scoped, tag = 'internal scratch']
  %s0 = inlined_call_operand.hbm [shape: bf16[2,96,128], index: 0, kind: input, shape index: {}]
  %s1 = inlined_call_operand.hbm [shape: bf16[2,96,128], index: 1, kind: input, shape index: {}]
  %s2 = inlined_call_operand.hbm [shape: bf16[2,96,128], index: 2, kind: input, shape index: {}]
  %s3 = inlined_call_operand.vmem [shape: f32[1,128], index: 3, kind: input, shape index: {}]
  %s4 = inlined_call_operand.vmem [shape: f32[1,128], index: 4, kind: input, shape index: {}]
  %s5 = inlined_call_operand.hbm [shape: bf16[128,256], index: 5, kind: input, shape index: {}]
  %s6 = inlined_call_operand.vmem [shape: f32[1,256], index: 6, kind: input, shape index: {}]
  %s7 = inlined_call_operand.vmem [shape: f32[7,128], index: 7, kind: input, shape index: {}]
  %s8 = inlined_call_operand.vmem [shape: f32[1,128], index: 8, kind: input, shape index: {}]
  %s9 = inlined_call_operand.hbm [shape: bf16[128,128], index: 9, kind: input, shape index: {}]
  %s10 = inlined_call_operand.vmem [shape: f32[1,128], index: 10, kind: input, shape index: {}]
  %s11 = inlined_call_operand.hbm [shape: bf16[2,96,128], index: 11, kind: output, shape index: {}]
  %s12 = sld [smem:[#allocation0]]
  $region97: #{tpu_custom_call.1} parent=0
    _
  %s14 = ssub.s32 1, %s12
  %s15 = scalar_select 0, %s14, %s12
  $region1: #{tpu_custom_call.1} parent=0
    #allocation2 [shape = 'u8[8192]{0}', space=vmem, size = 0x2000, scoped, tag = 'input window, operand 0']
    #allocation3 [shape = 's32[2]{0}', space=sflag, size = 0x8, scoped, tag = 'scoped memory for tpu_custom_call.1']
    #allocation4 [shape = 's32[2]{0}', space=sflag, size = 0x8, scoped, tag = 'scoped memory for tpu_custom_call.1']
    #allocation5 [shape = 'u8[16384]{0}', space=vmem, size = 0x4000, scoped, tag = 'input window, operand 1']
    #allocation6 [shape = 's32[2]{0}', space=sflag, size = 0x8, scoped, tag = 'scoped memory for tpu_custom_call.1']
    #allocation7 [shape = 'u8[8192]{0}', space=vmem, size = 0x2000, scoped, tag = 'input window, operand 2']
    #allocation8 [shape = 'u8[65536]{0}', space=vmem, size = 0x10000, scoped, tag = 'input window, operand 5, single buffered']
    #allocation9 [shape = 's32[1]{0}', space=sflag, size = 0x4, scoped, tag = 'scoped memory for tpu_custom_call.1']
    #allocation10 [shape = 'u8[32768]{0}', space=vmem, size = 0x8000, scoped, tag = 'input window, operand 9, single buffered']
    #allocation11 [shape = 'u8[16384]{0}', space=vmem, size = 0x4000, scoped, tag = 'output window, operand 0']
    %16 = vsyncpa [#allocation3], 0
    %s17 = scalar_lea.sflag [#allocation3], 1
    %18 = vsyncpa %s17, 0
    %19 = vsyncpa [#allocation6], 0
    %s20 = scalar_lea.sflag [#allocation6], 1
    %21 = vsyncpa %s20, 0
    %22 = vsyncpa [#allocation9], 0
    %23 = vsyncpa [#allocation4], 0
    %s24 = scalar_lea.sflag [#allocation4], 1
    %25 = vsyncpa %s24, 0
    loop: start=0, step=1, limit=8
    $region2: #{tpu_custom_call.1} parent=1 // loop_pre_header
      _
    $region3: #{tpu_custom_call.1} parent=1 // loop_header
      %s27 = sphi 0, %s31
      %p28 = scmp.ge.s32.totalorder %s27, 8
      %s34 = sphi 0, %s46
      %s35 = sphi 0, %s42
      %s36 = sphi 0, %s34
      %s37 = sphi 0, %s35
      %s38 = sphi 0, %s36
      %s39 = sphi 0, %s37
      %s59 = sphi 0, %s61
      %s62 = sphi 0, %s59
      %s63 = sphi 0, %s62
      %s79 = sphi 0, %s63
      %s87 = sphi 0, %s89
      %s90 = sphi 0, %s87
      %s91 = sphi 0, %s90
      %s107 = sphi 0, %s91
      %s123 = sphi 0, %s125
      %s126 = sphi 0, %s123
      %s127 = sphi 0, %s126
      %s143 = sphi 0, %s127
      %s147 = sphi 0, %s147
      %s149 = sphi 0, %s147
      %s150 = sphi 0, %s149
      %s164 = sphi 0, %s150
      %s168 = sphi 0, %s168
      %s170 = sphi 0, %s168
      %s171 = sphi 0, %s170
      %s185 = sphi 0, %s171
      %s189 = sphi 0, %s189
      %s191 = sphi 0, %s189
      %s192 = sphi 0, %s191
      %s206 = sphi 0, %s192
      %s210 = sphi 0, %s210
      %s212 = sphi 0, %s210
      %s213 = sphi 0, %s212
      %s227 = sphi 0, %s213
      %s231 = sphi 0, %s231
      %s233 = sphi 0, %s231
      %s234 = sphi 0, %s233
      %s248 = sphi 0, %s234
      %s252 = sphi 0, %s252
      %s254 = sphi 0, %s252
      %s255 = sphi 0, %s254
      %s269 = sphi 0, %s255
      %s273 = sphi 0, %s273
      %s275 = sphi 0, %s273
      %s276 = sphi 0, %s275
      %s290 = sphi 0, %s276
      %s294 = sphi 0, %s294
      %s296 = sphi 0, %s294
      %s297 = sphi 0, %s296
      %s311 = sphi 0, %s297
      %s319 = sphi 0, %s321
      %s322 = sphi 0, %s319
      %s323 = sphi 0, %s322
      %s339 = sphi 0, %s323
    $region4: #{tpu_custom_call.1} parent=1 // loop_header_branch
      %30 = sbr.rel (%p28) target = $region8
    $region5: #{tpu_custom_call.1} parent=1 // loop_body
      %s32 = ssub.s32 %s27, 1
      %s33 = ssub.s32 %s27, 2
      %s40 = sadd.s32 1, %s35
      %p41 = scmp.ge.s32.totalorder %s40, 3
      %s42 = scalar_select %p41, 0, %s40
      %s43 = sadd.s32 1, %s34
      %s44 = scalar_select %p41, %s43, %s34
      %p45 = scmp.ge.s32.totalorder %s44, 2
      %s46 = scalar_select %p45, 0, %s44
      %s47 = smul.u32 %s35, 2
      %s48 = ssub.s32 %s47, 1
      %p49 = scmp.gt.s32.totalorder %s48, 0
      %s50 = scalar_select %p49, %s48, 0
      %s51 = smul.u32 %s42, 2
      %s52 = ssub.s32 %s51, 1
      %p53 = scmp.gt.s32.totalorder %s52, 0
      %s54 = scalar_select %p53, %s52, 0
      %s55 = ssub.s32 %s34, %s46
      %s56 = ssub.s32 %s50, %s54
      %s57 = sor.u32 %s55, %s56
      %p58 = scmp.eq.s32.totalorder %s57, 0
      %s60 = sadd.s32 %s59, 1
      %s61 = scalar_select %p58, %s59, %s60
      %p64 = pneg %p58
      %p65 = scmp.eq.s32.totalorder %s27, 5
      %p66 = por %p64, %p65
      %p67 = scmp.ne.s32.totalorder %s59, %s62
      %p68 = scmp.eq.s32.totalorder %s27, 0
      %p69 = por %p67, %p68
      %p70 = scmp.ne.s32.totalorder %s59, %s62
      %p71 = scmp.eq.s32.totalorder %s32, 5
      %p72 = por %p70, %p71
      %p73 = scmp.ne.s32.totalorder %s62, %s63
      %p74 = scmp.eq.s32.totalorder %s32, 0
      %p75 = por %p73, %p74
      %p76 = scmp.ne.s32.totalorder %s62, %s63
      %p77 = scmp.eq.s32.totalorder %s33, 5
      %p78 = por %p76, %p77
      %p80 = scmp.ne.s32.totalorder %s63, %s79
      %p81 = scmp.eq.s32.totalorder %s33, 0
      %p82 = por %p80, %p81
      %s83 = ssub.s32 %s34, %s46
      %s84 = ssub.s32 %s35, %s42
      %s85 = sor.u32 %s83, %s84
      %p86 = scmp.eq.s32.totalorder %s85, 0
      %s88 = sadd.s32 %s87, 1
      %s89 = scalar_select %p86, %s87, %s88
      %p92 = pneg %p86
      %p93 = scmp.eq.s32.totalorder %s27, 5
      %p94 = por %p92, %p93
      %p95 = scmp.ne.s32.totalorder %s87, %s90
      %p96 = scmp.eq.s32.totalorder %s27, 0
      %p97 = por %p95, %p96
      %p98 = scmp.ne.s32.totalorder %s87, %s90
      %p99 = scmp.eq.s32.totalorder %s32, 5
      %p100 = por %p98, %p99
      %p101 = scmp.ne.s32.totalorder %s90, %s91
      %p102 = scmp.eq.s32.totalorder %s32, 0
      %p103 = por %p101, %p102
      %p104 = scmp.ne.s32.totalorder %s90, %s91
      %p105 = scmp.eq.s32.totalorder %s33, 5
      %p106 = por %p104, %p105
      %p108 = scmp.ne.s32.totalorder %s91, %s107
      %p109 = scmp.eq.s32.totalorder %s33, 0
      %p110 = por %p108, %p109
      %s111 = sadd.s32 %s35, 1
      %s112 = smul.u32 %s111, 2
      %p113 = scmp.lt.s32.totalorder %s112, 5
      %s114 = scalar_select %p113, %s112, 5
      %s115 = sadd.s32 %s42, 1
      %s116 = smul.u32 %s115, 2
      %p117 = scmp.lt.s32.totalorder %s116, 5
      %s118 = scalar_select %p117, %s116, 5
      %s119 = ssub.s32 %s34, %s46
      %s120 = ssub.s32 %s114, %s118
      %s121 = sor.u32 %s119, %s120
      %p122 = scmp.eq.s32.totalorder %s121, 0
      %s124 = sadd.s32 %s123, 1
      %s125 = scalar_select %p122, %s123, %s124
      %p128 = pneg %p122
      %p129 = scmp.eq.s32.totalorder %s27, 5
      %p130 = por %p128, %p129
      %p131 = scmp.ne.s32.totalorder %s123, %s126
      %p132 = scmp.eq.s32.totalorder %s27, 0
      %p133 = por %p131, %p132
      %p134 = scmp.ne.s32.totalorder %s123, %s126
      %p135 = scmp.eq.s32.totalorder %s32, 5
      %p136 = por %p134, %p135
      %p137 = scmp.ne.s32.totalorder %s126, %s127
      %p138 = scmp.eq.s32.totalorder %s32, 0
      %p139 = por %p137, %p138
      %p140 = scmp.ne.s32.totalorder %s126, %s127
      %p141 = scmp.eq.s32.totalorder %s33, 5
      %p142 = por %p140, %p141
      %p144 = scmp.ne.s32.totalorder %s127, %s143
      %p145 = scmp.eq.s32.totalorder %s33, 0
      %p146 = por %p144, %p145
      %s148 = sadd.s32 %s147, 1
      %p151 = scmp.eq.s32.totalorder %s27, 5
      %p152 = scmp.ne.s32.totalorder %s147, %s149
      %p153 = scmp.eq.s32.totalorder %s27, 0
      %p154 = por %p152, %p153
      %p155 = scmp.ne.s32.totalorder %s147, %s149
      %p156 = scmp.eq.s32.totalorder %s32, 5
      %p157 = por %p155, %p156
      %p158 = scmp.ne.s32.totalorder %s149, %s150
      %p159 = scmp.eq.s32.totalorder %s32, 0
      %p160 = por %p158, %p159
      %p161 = scmp.ne.s32.totalorder %s149, %s150
      %p162 = scmp.eq.s32.totalorder %s33, 5
      %p163 = por %p161, %p162
      %p165 = scmp.ne.s32.totalorder %s150, %s164
      %p166 = scmp.eq.s32.totalorder %s33, 0
      %p167 = por %p165, %p166
      %s169 = sadd.s32 %s168, 1
      %p172 = scmp.eq.s32.totalorder %s27, 5
      %p173 = scmp.ne.s32.totalorder %s168, %s170
      %p174 = scmp.eq.s32.totalorder %s27, 0
      %p175 = por %p173, %p174
      %p176 = scmp.ne.s32.totalorder %s168, %s170
      %p177 = scmp.eq.s32.totalorder %s32, 5
      %p178 = por %p176, %p177
      %p179 = scmp.ne.s32.totalorder %s170, %s171
      %p180 = scmp.eq.s32.totalorder %s32, 0
      %p181 = por %p179, %p180
      %p182 = scmp.ne.s32.totalorder %s170, %s171
      %p183 = scmp.eq.s32.totalorder %s33, 5
      %p184 = por %p182, %p183
      %p186 = scmp.ne.s32.totalorder %s171, %s185
      %p187 = scmp.eq.s32.totalorder %s33, 0
      %p188 = por %p186, %p187
      %s190 = sadd.s32 %s189, 1
      %p193 = scmp.eq.s32.totalorder %s27, 5
      %p194 = scmp.ne.s32.totalorder %s189, %s191
      %p195 = scmp.eq.s32.totalorder %s27, 0
      %p196 = por %p194, %p195
      %p197 = scmp.ne.s32.totalorder %s189, %s191
      %p198 = scmp.eq.s32.totalorder %s32, 5
      %p199 = por %p197, %p198
      %p200 = scmp.ne.s32.totalorder %s191, %s192
      %p201 = scmp.eq.s32.totalorder %s32, 0
      %p202 = por %p200, %p201
      %p203 = scmp.ne.s32.totalorder %s191, %s192
      %p204 = scmp.eq.s32.totalorder %s33, 5
      %p205 = por %p203, %p204
      %p207 = scmp.ne.s32.totalorder %s192, %s206
      %p208 = scmp.eq.s32.totalorder %s33, 0
      %p209 = por %p207, %p208
      %s211 = sadd.s32 %s210, 1
      %p214 = scmp.eq.s32.totalorder %s27, 5
      %p215 = scmp.ne.s32.totalorder %s210, %s212
      %p216 = scmp.eq.s32.totalorder %s27, 0
      %p217 = por %p215, %p216
      %p218 = scmp.ne.s32.totalorder %s210, %s212
      %p219 = scmp.eq.s32.totalorder %s32, 5
      %p220 = por %p218, %p219
      %p221 = scmp.ne.s32.totalorder %s212, %s213
      %p222 = scmp.eq.s32.totalorder %s32, 0
      %p223 = por %p221, %p222
      %p224 = scmp.ne.s32.totalorder %s212, %s213
      %p225 = scmp.eq.s32.totalorder %s33, 5
      %p226 = por %p224, %p225
      %p228 = scmp.ne.s32.totalorder %s213, %s227
      %p229 = scmp.eq.s32.totalorder %s33, 0
      %p230 = por %p228, %p229
      %s232 = sadd.s32 %s231, 1
      %p235 = scmp.eq.s32.totalorder %s27, 5
      %p236 = scmp.ne.s32.totalorder %s231, %s233
      %p237 = scmp.eq.s32.totalorder %s27, 0
      %p238 = por %p236, %p237
      %p239 = scmp.ne.s32.totalorder %s231, %s233
      %p240 = scmp.eq.s32.totalorder %s32, 5
      %p241 = por %p239, %p240
      %p242 = scmp.ne.s32.totalorder %s233, %s234
      %p243 = scmp.eq.s32.totalorder %s32, 0
      %p244 = por %p242, %p243
      %p245 = scmp.ne.s32.totalorder %s233, %s234
      %p246 = scmp.eq.s32.totalorder %s33, 5
      %p247 = por %p245, %p246
      %p249 = scmp.ne.s32.totalorder %s234, %s248
      %p250 = scmp.eq.s32.totalorder %s33, 0
      %p251 = por %p249, %p250
      %s253 = sadd.s32 %s252, 1
      %p256 = scmp.eq.s32.totalorder %s27, 5
      %p257 = scmp.ne.s32.totalorder %s252, %s254
      %p258 = scmp.eq.s32.totalorder %s27, 0
      %p259 = por %p257, %p258
      %p260 = scmp.ne.s32.totalorder %s252, %s254
      %p261 = scmp.eq.s32.totalorder %s32, 5
      %p262 = por %p260, %p261
      %p263 = scmp.ne.s32.totalorder %s254, %s255
      %p264 = scmp.eq.s32.totalorder %s32, 0
      %p265 = por %p263, %p264
      %p266 = scmp.ne.s32.totalorder %s254, %s255
      %p267 = scmp.eq.s32.totalorder %s33, 5
      %p268 = por %p266, %p267
      %p270 = scmp.ne.s32.totalorder %s255, %s269
      %p271 = scmp.eq.s32.totalorder %s33, 0
      %p272 = por %p270, %p271
      %s274 = sadd.s32 %s273, 1
      %p277 = scmp.eq.s32.totalorder %s27, 5
      %p278 = scmp.ne.s32.totalorder %s273, %s275
      %p279 = scmp.eq.s32.totalorder %s27, 0
      %p280 = por %p278, %p279
      %p281 = scmp.ne.s32.totalorder %s273, %s275
      %p282 = scmp.eq.s32.totalorder %s32, 5
      %p283 = por %p281, %p282
      %p284 = scmp.ne.s32.totalorder %s275, %s276
      %p285 = scmp.eq.s32.totalorder %s32, 0
      %p286 = por %p284, %p285
      %p287 = scmp.ne.s32.totalorder %s275, %s276
      %p288 = scmp.eq.s32.totalorder %s33, 5
      %p289 = por %p287, %p288
      %p291 = scmp.ne.s32.totalorder %s276, %s290
      %p292 = scmp.eq.s32.totalorder %s33, 0
      %p293 = por %p291, %p292
      %s295 = sadd.s32 %s294, 1
      %p298 = scmp.eq.s32.totalorder %s27, 5
      %p299 = scmp.ne.s32.totalorder %s294, %s296
      %p300 = scmp.eq.s32.totalorder %s27, 0
      %p301 = por %p299, %p300
      %p302 = scmp.ne.s32.totalorder %s294, %s296
      %p303 = scmp.eq.s32.totalorder %s32, 5
      %p304 = por %p302, %p303
      %p305 = scmp.ne.s32.totalorder %s296, %s297
      %p306 = scmp.eq.s32.totalorder %s32, 0
      %p307 = por %p305, %p306
      %p308 = scmp.ne.s32.totalorder %s296, %s297
      %p309 = scmp.eq.s32.totalorder %s33, 5
      %p310 = por %p308, %p309
      %p312 = scmp.ne.s32.totalorder %s297, %s311
      %p313 = scmp.eq.s32.totalorder %s33, 0
      %p314 = por %p312, %p313
      %s315 = ssub.s32 %s34, %s46
      %s316 = ssub.s32 %s35, %s42
      %s317 = sor.u32 %s315, %s316
      %p318 = scmp.eq.s32.totalorder %s317, 0
      %s320 = sadd.s32 %s319, 1
      %s321 = scalar_select %p318, %s319, %s320
      %p324 = pneg %p318
      %p325 = scmp.eq.s32.totalorder %s27, 5
      %p326 = por %p324, %p325
      %p327 = scmp.ne.s32.totalorder %s319, %s322
      %p328 = scmp.eq.s32.totalorder %s27, 0
      %p329 = por %p327, %p328
      %p330 = scmp.ne.s32.totalorder %s319, %s322
      %p331 = scmp.eq.s32.totalorder %s32, 5
      %p332 = por %p330, %p331
      %p333 = scmp.ne.s32.totalorder %s322, %s323
      %p334 = scmp.eq.s32.totalorder %s32, 0
      %p335 = por %p333, %p334
      %p336 = scmp.ne.s32.totalorder %s322, %s323
      %p337 = scmp.eq.s32.totalorder %s33, 5
      %p338 = por %p336, %p337
      %p340 = scmp.ne.s32.totalorder %s323, %s339
      %p341 = scmp.eq.s32.totalorder %s33, 0
      %p342 = por %p340, %p341
      %p343 = scmp.le.s32.totalorder 1, %s27
      %p344 = scmp.lt.s32.totalorder %s27, 7
      %p345 = pnand %p343, %p344
      %p346 = pneg %p345
      // Predicated region
      $region9: #{tpu_custom_call.1} parent=5 // pred_check
        _
      $region10: #{tpu_custom_call.1} parent=5 // pred_check_branch
        %348 = sbr.rel (%p345) target = $region12
      $region11: #{tpu_custom_call.1} parent=5 // pred_region
        %s349 = ssub.s32 %s27, 1
        // Predicated region
        $region13: #{tpu_custom_call.1} parent=11 // pred_check
          %p350 = pneg %p160
        $region14: #{tpu_custom_call.1} parent=11 // pred_check_branch
          %352 = sbr.rel (%p350) target = $region16
        $region15: #{tpu_custom_call.1} parent=11 // pred_region
          _
        $region16: #{tpu_custom_call.1} parent=11 // pred_fallthru
          _
        // Predicated region
        $region17: #{tpu_custom_call.1} parent=11 // pred_check
          %p353 = pneg %p181
        $region18: #{tpu_custom_call.1} parent=11 // pred_check_branch
          %355 = sbr.rel (%p353) target = $region20
        $region19: #{tpu_custom_call.1} parent=11 // pred_region
          _
        $region20: #{tpu_custom_call.1} parent=11 // pred_fallthru
          _
        // Predicated region
        $region21: #{tpu_custom_call.1} parent=11 // pred_check
          %p356 = pneg %p202
        $region22: #{tpu_custom_call.1} parent=11 // pred_check_branch
          %358 = sbr.rel (%p356) target = $region24
        $region23: #{tpu_custom_call.1} parent=11 // pred_region
          %s360 = ssub.s32 2048, 2048
          %361 = vsyncadd [#allocation9], %s360
          %s362 = sshll.u32 [#allocation8], 4
          %s363 = int_to_ptr.vmem [resolvable:$true] %s362
          %368 = dma.hbm_to_vmem [thread:$0]  %s5, 2048, %s363, [#allocation9], 128, 128, 8
        $region24: #{tpu_custom_call.1} parent=11 // pred_fallthru
          _
        // Predicated region
        $region25: #{tpu_custom_call.1} parent=11 // pred_check
          %p369 = pneg %p223
        $region26: #{tpu_custom_call.1} parent=11 // pred_check_branch
          %371 = sbr.rel (%p369) target = $region28
        $region27: #{tpu_custom_call.1} parent=11 // pred_region
          _
        $region28: #{tpu_custom_call.1} parent=11 // pred_fallthru
          _
        // Predicated region
        $region29: #{tpu_custom_call.1} parent=11 // pred_check
          %p372 = pneg %p244
        $region30: #{tpu_custom_call.1} parent=11 // pred_check_branch
          %374 = sbr.rel (%p372) target = $region32
        $region31: #{tpu_custom_call.1} parent=11 // pred_region
          _
        $region32: #{tpu_custom_call.1} parent=11 // pred_fallthru
          _
        // Predicated region
        $region33: #{tpu_custom_call.1} parent=11 // pred_check
          %p375 = pneg %p265
        $region34: #{tpu_custom_call.1} parent=11 // pred_check_branch
          %377 = sbr.rel (%p375) target = $region36
        $region35: #{tpu_custom_call.1} parent=11 // pred_region
          _
        $region36: #{tpu_custom_call.1} parent=11 // pred_fallthru
          _
        // Predicated region
        $region37: #{tpu_custom_call.1} parent=11 // pred_check
          %p378 = pneg %p286
        $region38: #{tpu_custom_call.1} parent=11 // pred_check_branch
          %380 = sbr.rel (%p378) target = $region40
        $region39: #{tpu_custom_call.1} parent=11 // pred_region
          %s382 = ssub.s32 1024, 1024
          %383 = vsyncadd [#allocation9], %s382
          %s384 = sshll.u32 [#allocation10], 4
          %s385 = int_to_ptr.vmem [resolvable:$true] %s384
          %390 = dma.hbm_to_vmem [thread:$0]  %s9, 1024, %s385, [#allocation9], 64, 64, 4
        $region40: #{tpu_custom_call.1} parent=11 // pred_fallthru
          _
        // Predicated region
        $region41: #{tpu_custom_call.1} parent=11 // pred_check
          %p391 = pneg %p307
        $region42: #{tpu_custom_call.1} parent=11 // pred_check_branch
          %393 = sbr.rel (%p391) target = $region44
        $region43: #{tpu_custom_call.1} parent=11 // pred_region
          _
        $region44: #{tpu_custom_call.1} parent=11 // pred_fallthru
          _
      $region12: #{tpu_custom_call.1} parent=5 // pred_fallthru
        _
      %p394 = scmp.lt.s32.totalorder %s27, 6
      // Predicated region
      $region45: #{tpu_custom_call.1} parent=5 // pred_check
        %p395 = pneg %p394
      $region46: #{tpu_custom_call.1} parent=5 // pred_check_branch
        %397 = sbr.rel (%p395) target = $region48
      $region47: #{tpu_custom_call.1} parent=5 // pred_region
        // Predicated region
        $region49: #{tpu_custom_call.1} parent=47 // pred_check
          %p398 = pneg %p69
        $region50: #{tpu_custom_call.1} parent=47 // pred_check_branch
          %400 = sbr.rel (%p398) target = $region52
        $region51: #{tpu_custom_call.1} parent=47 // pred_region
          %s401 = sand.u32 %s59, 1
          %s402 = scalar_lea.sflag [#allocation3], %s401
          %s403 = sand.u32 %s59, 1
          %s404 = smul.addr %s403, 8
          %s405 = scalar_lea.vmem [#allocation2], %s404
          %s406 = smul.u32 %s35, 2
          %s407 = ssub.s32 %s406, 1
          %p408 = scmp.gt.s32.totalorder %s407, 0
          %s409 = scalar_select %p408, %s407, 0
          %s410 = smul.u32 2, %s409
          %s412 = ssub.s32 128, 128
          %413 = vsyncadd %s402, %s412
          %s414 = smul.addr %s34, 12
          %s415 = sadd.s32 %s410, %s414
          %s416 = smul.addr %s415, 64
          %s417 = scalar_lea.hbm %s0, %s416
          %s418 = sshll.u32 %s405, 4
          %s419 = int_to_ptr.vmem [resolvable:$true] %s418
          %424 = dma.hbm_to_vmem [thread:$0]  %s417, 128, %s419, %s402, 64, 64, 4
        $region52: #{tpu_custom_call.1} parent=47 // pred_fallthru
          _
        // Predicated region
        $region53: #{tpu_custom_call.1} parent=47 // pred_check
          %p425 = pneg %p97
        $region54: #{tpu_custom_call.1} parent=47 // pred_check_branch
          %427 = sbr.rel (%p425) target = $region56
        $region55: #{tpu_custom_call.1} parent=47 // pred_region
          %s428 = sand.u32 %s27, 1
          %s429 = scalar_lea.sflag [#allocation6], %s428
          %s430 = sand.u32 %s87, 1
          %s431 = smul.addr %s430, 16
          %s432 = scalar_lea.vmem [#allocation5], %s431
          %s433 = smul.u32 4, %s35
          %s435 = ssub.s32 256, 256
          %436 = vsyncadd %s429, %s435
          %s437 = smul.addr %s34, 12
          %s438 = sadd.s32 %s433, %s437
          %s439 = smul.addr %s438, 64
          %s440 = scalar_lea.hbm %s1, %s439
          %s441 = sshll.u32 %s432, 4
          %s442 = int_to_ptr.vmem [resolvable:$true] %s441
          %447 = dma.hbm_to_vmem [thread:$0]  %s440, 256, %s442, %s429, 64, 64, 4
        $region56: #{tpu_custom_call.1} parent=47 // pred_fallthru
          _
        // Predicated region
        $region57: #{tpu_custom_call.1} parent=47 // pred_check
          %p448 = pneg %p133
        $region58: #{tpu_custom_call.1} parent=47 // pred_check_branch
          %450 = sbr.rel (%p448) target = $region60
        $region59: #{tpu_custom_call.1} parent=47 // pred_region
          %s451 = sand.u32 %s27, 1
          %s452 = scalar_lea.sflag [#allocation6], %s451
          %s453 = sand.u32 %s123, 1
          %s454 = smul.addr %s453, 8
          %s455 = scalar_lea.vmem [#allocation7], %s454
          %s456 = sadd.s32 %s35, 1
          %s457 = smul.u32 %s456, 2
          %p458 = scmp.lt.s32.totalorder %s457, 5
          %s459 = scalar_select %p458, %s457, 5
          %s460 = smul.u32 2, %s459
          %s462 = ssub.s32 128, 128
          %463 = vsyncadd %s452, %s462
          %s464 = smul.addr %s34, 12
          %s465 = sadd.s32 %s460, %s464
          %s466 = smul.addr %s465, 64
          %s467 = scalar_lea.hbm %s2, %s466
          %s468 = sshll.u32 %s455, 4
          %s469 = int_to_ptr.vmem [resolvable:$true] %s468
          %474 = dma.hbm_to_vmem [thread:$0]  %s467, 128, %s469, %s452, 64, 64, 4
        $region60: #{tpu_custom_call.1} parent=47 // pred_fallthru
          _
      $region48: #{tpu_custom_call.1} parent=5 // pred_fallthru
        _
      %p475 = scmp.le.s32.totalorder 1, %s27
      %p476 = scmp.lt.s32.totalorder %s27, 7
      %p477 = pnand %p475, %p476
      %p478 = pneg %p477
      // Predicated region
      $region61: #{tpu_custom_call.1} parent=5 // pred_check
        _
      $region62: #{tpu_custom_call.1} parent=5 // pred_check_branch
        %480 = sbr.rel (%p477) target = $region64
      $region63: #{tpu_custom_call.1} parent=5 // pred_region
        %s481 = ssub.s32 %s27, 1
        %s482 = sand.u32 %s62, 1
        %s483 = scalar_lea.sflag [#allocation3], %s482
        %s484 = sand.u32 %s62, 1
        %s485 = smul.addr %s484, 8
        %s486 = scalar_lea.vmem [#allocation2], %s485
        // Predicated region
        $region65: #{tpu_custom_call.1} parent=63 // pred_check
          %p487 = pneg %p75
        $region66: #{tpu_custom_call.1} parent=63 // pred_check_branch
          %489 = sbr.rel (%p487) target = $region68
        $region67: #{tpu_custom_call.1} parent=63 // pred_region
          %490 = dma.done %s483, 128
        $region68: #{tpu_custom_call.1} parent=63 // pred_fallthru
          _
        %s491 = sand.u32 %s32, 1
        %s492 = scalar_lea.sflag [#allocation6], %s491
        %s493 = sand.u32 %s90, 1
        %s494 = smul.addr %s493, 16
        %s495 = scalar_lea.vmem [#allocation5], %s494
        // Predicated region
        $region69: #{tpu_custom_call.1} parent=63 // pred_check
          %p496 = pneg %p103
        $region70: #{tpu_custom_call.1} parent=63 // pred_check_branch
          %498 = sbr.rel (%p496) target = $region72
        $region71: #{tpu_custom_call.1} parent=63 // pred_region
          %499 = dma.done %s492, 256
        $region72: #{tpu_custom_call.1} parent=63 // pred_fallthru
          _
        %s500 = sand.u32 %s32, 1
        %s501 = scalar_lea.sflag [#allocation6], %s500
        %s502 = sand.u32 %s126, 1
        %s503 = smul.addr %s502, 8
        %s504 = scalar_lea.vmem [#allocation7], %s503
        // Predicated region
        $region73: #{tpu_custom_call.1} parent=63 // pred_check
          %p505 = pneg %p139
        $region74: #{tpu_custom_call.1} parent=63 // pred_check_branch
          %507 = sbr.rel (%p505) target = $region76
        $region75: #{tpu_custom_call.1} parent=63 // pred_region
          %508 = dma.done %s501, 128
        $region76: #{tpu_custom_call.1} parent=63 // pred_fallthru
          _
        // Predicated region
        $region77: #{tpu_custom_call.1} parent=63 // pred_check
          %p509 = pneg %p202
        $region78: #{tpu_custom_call.1} parent=63 // pred_check_branch
          %511 = sbr.rel (%p509) target = $region80
        $region79: #{tpu_custom_call.1} parent=63 // pred_region
          %512 = dma.done [#allocation9], 2048
        $region80: #{tpu_custom_call.1} parent=63 // pred_fallthru
          _
        // Predicated region
        $region81: #{tpu_custom_call.1} parent=63 // pred_check
          %p513 = pneg %p286
        $region82: #{tpu_custom_call.1} parent=63 // pred_check_branch
          %515 = sbr.rel (%p513) target = $region84
        $region83: #{tpu_custom_call.1} parent=63 // pred_region
          %516 = dma.done [#allocation9], 1024
        $region84: #{tpu_custom_call.1} parent=63 // pred_fallthru
          _
        %s517 = sand.u32 %s62, 1
        %s518 = scalar_lea.sflag [#allocation3], %s517
        %s519 = sand.u32 %s62, 1
        %s520 = smul.addr %s519, 8
        %s521 = scalar_lea.vmem [#allocation2], %s520
        %p522 = pneg %p75
        %p523 = pneg %p72
        %s524 = sand.u32 %s32, 1
        %s525 = scalar_lea.sflag [#allocation6], %s524
        %s526 = sand.u32 %s90, 1
        %s527 = smul.addr %s526, 16
        %s528 = scalar_lea.vmem [#allocation5], %s527
        %p529 = pneg %p103
        %p530 = pneg %p100
        %s531 = sand.u32 %s32, 1
        %s532 = scalar_lea.sflag [#allocation6], %s531
        %s533 = sand.u32 %s126, 1
        %s534 = smul.addr %s533, 8
        %s535 = scalar_lea.vmem [#allocation7], %s534
        %p536 = pneg %p139
        %p537 = pneg %p136
        %p538 = pneg %p160
        %p539 = pneg %p157
        %p540 = pneg %p181
        %p541 = pneg %p178
        %p542 = pneg %p202
        %p543 = pneg %p199
        %p544 = pneg %p223
        %p545 = pneg %p220
        %p546 = pneg %p244
        %p547 = pneg %p241
        %p548 = pneg %p265
        %p549 = pneg %p262
        %p550 = pneg %p286
        %p551 = pneg %p283
        %p552 = pneg %p307
        %p553 = pneg %p304
        %p554 = pneg %p335
        %p555 = pneg %p332
        %s556 = sand.u32 %s322, 1
        %s557 = scalar_lea.sflag [#allocation4], %s556
        %s558 = sand.u32 %s322, 1
        %s559 = smul.addr %s558, 16
        %s560 = scalar_lea.vmem [#allocation11], %s559
        %s561 = smul.u32 %s37, 2
        %s562 = ssub.s32 %s561, 1
        %p563 = scmp.gt.s32.totalorder %s562, 0
        %s564 = scalar_select %p563, %s562, 0
        %s565 = smul.u32 2, %s564
        %s566 = smul.u32 4, %s37
        %s567 = sadd.s32 %s37, 1
        %s568 = smul.u32 %s567, 2
        %p569 = scmp.lt.s32.totalorder %s568, 5
        %s570 = scalar_select %p569, %s568, 5
        %s571 = smul.u32 2, %s570
        %s572 = smul.u32 4, %s37
        %v574 = vld [vmem:[%s486] sm:$0xf]
        %v575 = vld [vmem:[%s486 + $0x4] sm:$0xf]
        %v576 = vld [vmem:[%s495] sm:$0xf]
        %v577 = vld [vmem:[%s495 + $0x4] sm:$0xf]
        %v578 = vld [vmem:[%s495 + $0x8] sm:$0xf]
        %v579 = vld [vmem:[%s495 + $0xc] sm:$0xf]
        %v580 = vld [vmem:[%s504] sm:$0xf]
        %v581 = vld [vmem:[%s504 + $0x4] sm:$0xf]
        %v584 = vunpack.c.l.b16 %v574
        %v585 = vunpack.c.l.b16 %v575
        %v586 = vpack.c.b16 %v585, %v584
        %v592 = vunpack.c.l.b16 %v576
        %v593 = vunpack.c.l.b16 %v577
        %v594 = vunpack.c.l.b16 %v578
        %v595 = vunpack.c.l.b16 %v579
        %v596 = vpack.c.b16 %v593, %v592
        %v597 = vpack.c.b16 %v595, %v594
        %v602 = vunpack.c.l.b16 %v580
        %v603 = vunpack.c.l.b16 %v581
        %v604 = vpack.c.b16 %v603, %v602
        %v606 = vunpack.c.l.bf16 %v586
        %v607 = vunpack.c.h.bf16 %v586
        %v608 = vunpack.c.l.bf16 %v596
        %v609 = vunpack.c.h.bf16 %v596
        %v610 = vunpack.c.l.bf16 %v597
        %v611 = vunpack.c.h.bf16 %v597
        %v612 = vunpack.c.l.bf16 %v604
        %v613 = vunpack.c.h.bf16 %v604
        %614 = vadd.xlane.f32.xlu0 %v606
        %v615 = vpop.xlane.xlu0 %614
        %616 = vadd.xlane.f32.xlu0 %v607
        %v617 = vpop.xlane.xlu0 %616
        %618 = vadd.xlane.f32.xlu0 %v608
        %v619 = vpop.xlane.xlu0 %618
        %620 = vadd.xlane.f32.xlu0 %v609
        %v621 = vpop.xlane.xlu0 %620
        %622 = vadd.xlane.f32.xlu0 %v610
        %v623 = vpop.xlane.xlu0 %622
        %624 = vadd.xlane.f32.xlu0 %v611
        %v625 = vpop.xlane.xlu0 %624
        %626 = vadd.xlane.f32.xlu0 %v612
        %v627 = vpop.xlane.xlu0 %626
        %628 = vadd.xlane.f32.xlu0 %v613
        %v629 = vpop.xlane.xlu0 %628
        %v630 = vrcp.pop 128.0
        %v631 = vmul.f32 %v615, %v630
        %v632 = vmul.f32 %v617, %v630
        %v633 = vmul.f32 %v619, %v630
        %v634 = vmul.f32 %v621, %v630
        %v635 = vmul.f32 %v623, %v630
        %v636 = vmul.f32 %v625, %v630
        %v637 = vmul.f32 %v627, %v630
        %v638 = vmul.f32 %v629, %v630
        %v639 = vsub.f32 %v606, %v631
        %v640 = vsub.f32 %v607, %v632
        %v641 = vsub.f32 %v608, %v633
        %v642 = vsub.f32 %v609, %v634
        %v643 = vsub.f32 %v610, %v635
        %v644 = vsub.f32 %v611, %v636
        %v645 = vsub.f32 %v612, %v637
        %v646 = vsub.f32 %v613, %v638
        %v647 = vmul.f32 %v639, %v639
        %v648 = vmul.f32 %v640, %v640
        %v649 = vmul.f32 %v641, %v641
        %v650 = vmul.f32 %v642, %v642
        %v651 = vmul.f32 %v643, %v643
        %v652 = vmul.f32 %v644, %v644
        %v653 = vmul.f32 %v645, %v645
        %v654 = vmul.f32 %v646, %v646
        %655 = vadd.xlane.f32.xlu0 %v647
        %v656 = vpop.xlane.xlu0 %655
        %657 = vadd.xlane.f32.xlu0 %v648
        %v658 = vpop.xlane.xlu0 %657
        %659 = vadd.xlane.f32.xlu0 %v649
        %v660 = vpop.xlane.xlu0 %659
        %661 = vadd.xlane.f32.xlu0 %v650
        %v662 = vpop.xlane.xlu0 %661
        %663 = vadd.xlane.f32.xlu0 %v651
        %v664 = vpop.xlane.xlu0 %663
        %665 = vadd.xlane.f32.xlu0 %v652
        %v666 = vpop.xlane.xlu0 %665
        %667 = vadd.xlane.f32.xlu0 %v653
        %v668 = vpop.xlane.xlu0 %667
        %669 = vadd.xlane.f32.xlu0 %v654
        %v670 = vpop.xlane.xlu0 %669
        %v671 = vmul.f32 %v656, %v630
        %v672 = vmul.f32 %v658, %v630
        %v673 = vmul.f32 %v660, %v630
        %v674 = vmul.f32 %v662, %v630
        %v675 = vmul.f32 %v664, %v630
        %v676 = vmul.f32 %v666, %v630
        %v677 = vmul.f32 %v668, %v630
        %v678 = vmul.f32 %v670, %v630
        %v679 = vadd.f32 %v671, 1e-05
        %v680 = vadd.f32 %v672, 1e-05
        %v681 = vadd.f32 %v673, 1e-05
        %v682 = vadd.f32 %v674, 1e-05
        %v683 = vadd.f32 %v675, 1e-05
        %v684 = vadd.f32 %v676, 1e-05
        %v685 = vadd.f32 %v677, 1e-05
        %v686 = vadd.f32 %v678, 1e-05
        %v687 = vrsqrt.pop %v679
        %v688 = vrsqrt.pop %v680
        %v689 = vrsqrt.pop %v681
        %v690 = vrsqrt.pop %v682
        %v691 = vrsqrt.pop %v683
        %v692 = vrsqrt.pop %v684
        %v693 = vrsqrt.pop %v685
        %v694 = vrsqrt.pop %v686
        %v695 = vmul.f32 %v639, %v687
        %v696 = vmul.f32 %v640, %v688
        %v697 = vmul.f32 %v641, %v689
        %v698 = vmul.f32 %v642, %v690
        %v699 = vmul.f32 %v643, %v691
        %v700 = vmul.f32 %v644, %v692
        %v701 = vmul.f32 %v645, %v693
        %v702 = vmul.f32 %v646, %v694
        %v703 = vld [vmem:[%s3] sm:$0x1]
        %v705 = vlaneseq
        %v706 = vshrl.u32 %v705, 7
        %v707 = vsub.s32 0, %v706
        %v708 = vrot.slane %v703, %v707
        %v710 = vmul.f32 %v695, %v708
        %v711 = vmul.f32 %v696, %v708
        %v712 = vmul.f32 %v697, %v708
        %v713 = vmul.f32 %v698, %v708
        %v714 = vmul.f32 %v699, %v708
        %v715 = vmul.f32 %v700, %v708
        %v716 = vmul.f32 %v701, %v708
        %v717 = vmul.f32 %v702, %v708
        %v718 = vld [vmem:[%s4] sm:$0x1]
        %v720 = vlaneseq
        %v721 = vshrl.u32 %v720, 7
        %v722 = vsub.s32 0, %v721
        %v723 = vrot.slane %v718, %v722
        %v725 = vadd.f32 %v710, %v723
        %v726 = vadd.f32 %v711, %v723
        %v727 = vadd.f32 %v712, %v723
        %v728 = vadd.f32 %v713, %v723
        %v729 = vadd.f32 %v714, %v723
        %v730 = vadd.f32 %v715, %v723
        %v731 = vadd.f32 %v716, %v723
        %v732 = vadd.f32 %v717, %v723
        %v733 = vpack.c.bf16 %v726, %v725
        %v734 = vpack.c.bf16 %v728, %v727
        %v735 = vpack.c.bf16 %v730, %v729
        %v736 = vpack.c.bf16 %v732, %v731
        %v737 = vld [vmem:[#allocation8] sm:$0xff]
        %v738 = vld [vmem:[#allocation8 + $0x8] sm:$0xff]
        %v739 = vld [vmem:[#allocation8 + $0x10] sm:$0xff]
        %v740 = vld [vmem:[#allocation8 + $0x18] sm:$0xff]
        %v741 = vld [vmem:[#allocation8 + $0x20] sm:$0xff]
        %v742 = vld [vmem:[#allocation8 + $0x28] sm:$0xff]
        %v743 = vld [vmem:[#allocation8 + $0x30] sm:$0xff]
        %v744 = vld [vmem:[#allocation8 + $0x38] sm:$0xff]
        %v745 = vld [vmem:[#allocation8 + $0x40] sm:$0xff]
        %v746 = vld [vmem:[#allocation8 + $0x48] sm:$0xff]
        %v747 = vld [vmem:[#allocation8 + $0x50] sm:$0xff]
        %v748 = vld [vmem:[#allocation8 + $0x58] sm:$0xff]
        %v749 = vld [vmem:[#allocation8 + $0x60] sm:$0xff]
        %v750 = vld [vmem:[#allocation8 + $0x68] sm:$0xff]
        %v751 = vld [vmem:[#allocation8 + $0x70] sm:$0xff]
        %v752 = vld [vmem:[#allocation8 + $0x78] sm:$0xff]
        %v753 = vld [vmem:[%s6] sm:$0x3]
        %v755 = vlaneseq
        %v756 = vshrl.u32 %v755, 7
        %v757 = vsub.s32 0, %v756
        %v758 = vrot.slane %v753, %v757
        %v759 = vlaneseq
        %v760 = vshrl.u32 %v759, 7
        %v761 = vsub.s32 1, %v760
        %v762 = vrot.slane %v753, %v761
        %v781 = vunpack.c.l.b16 %v737
        %v782 = vunpack.c.h.b16 %v737
        %v783 = vunpack.c.l.b16 %v738
        %v784 = vunpack.c.h.b16 %v738
        %v785 = vunpack.c.l.b16 %v739
        %v786 = vunpack.c.h.b16 %v739
        %v787 = vunpack.c.l.b16 %v740
        %v788 = vunpack.c.h.b16 %v740
        %v789 = vunpack.c.l.b16 %v741
        %v790 = vunpack.c.h.b16 %v741
        %v791 = vunpack.c.l.b16 %v742
        %v792 = vunpack.c.h.b16 %v742
        %v793 = vunpack.c.l.b16 %v743
        %v794 = vunpack.c.h.b16 %v743
        %v795 = vunpack.c.l.b16 %v744
        %v796 = vunpack.c.h.b16 %v744
        %v797 = vunpack.c.l.b16 %v745
        %v798 = vunpack.c.h.b16 %v745
        %v799 = vunpack.c.l.b16 %v746
        %v800 = vunpack.c.h.b16 %v746
        %v801 = vunpack.c.l.b16 %v747
        %v802 = vunpack.c.h.b16 %v747
        %v803 = vunpack.c.l.b16 %v748
        %v804 = vunpack.c.h.b16 %v748
        %v805 = vunpack.c.l.b16 %v749
        %v806 = vunpack.c.h.b16 %v749
        %v807 = vunpack.c.l.b16 %v750
        %v808 = vunpack.c.h.b16 %v750
        %v809 = vunpack.c.l.b16 %v751
        %v810 = vunpack.c.h.b16 %v751
        %v811 = vunpack.c.l.b16 %v752
        %v812 = vunpack.c.h.b16 %v752
        %v813 = vpack.c.b16 %v783, %v781
        %v814 = vpack.c.b16 %v784, %v782
        %v815 = vpack.c.b16 %v787, %v785
        %v816 = vpack.c.b16 %v788, %v786
        %v817 = vpack.c.b16 %v791, %v789
        %v818 = vpack.c.b16 %v792, %v790
        %v819 = vpack.c.b16 %v795, %v793
        %v820 = vpack.c.b16 %v796, %v794
        %v821 = vpack.c.b16 %v799, %v797
        %v822 = vpack.c.b16 %v800, %v798
        %v823 = vpack.c.b16 %v803, %v801
        %v824 = vpack.c.b16 %v804, %v802
        %v825 = vpack.c.b16 %v807, %v805
        %v826 = vpack.c.b16 %v808, %v806
        %v827 = vpack.c.b16 %v811, %v809
        %v828 = vpack.c.b16 %v812, %v810
        %845 = vmatprep.subr.bf16.mxu0 %v828
        %846 = vmatpush1.bf16.msra.mxu0 %v827
        %847 = vmatprep.subr.bf16.mxu0 %v826
        %848 = vmatpush1.bf16.msra.mxu0 %v825
        %849 = vmatprep.subr.bf16.mxu0 %v824
        %850 = vmatpush1.bf16.msra.mxu0 %v823
        %851 = vmatprep.subr.bf16.mxu0 %v822
        %852 = vmatpush1.bf16.msra.mxu0 %v821
        %853 = vmatprep.subr.bf16.mxu0 %v820
        %854 = vmatpush1.bf16.msra.mxu0 %v819
        %855 = vmatprep.subr.bf16.mxu0 %v818
        %856 = vmatpush1.bf16.msra.mxu0 %v817
        %857 = vmatprep.subr.bf16.mxu0 %v816
        %858 = vmatpush1.bf16.msra.mxu0 %v815
        %859 = vmatprep.subr.bf16.mxu0 %v814
        %860 = vmatpush1.bf16.msra.mxu0 %v813
        %861 = vmatprep.subr.bf16.mxu0 0
        %862 = vmatpush2.bf16.msra.mxu0 0
        %863 = vmatprep.subr.bf16.mxu0 0
        %864 = vmatpush2.bf16.msra.mxu0 0
        %865 = vmatprep.subr.bf16.mxu0 0
        %866 = vmatpush2.bf16.msra.mxu0 0
        %867 = vmatprep.subr.bf16.mxu0 0
        %868 = vmatpush2.bf16.msra.mxu0 0
        %869 = vmatprep.subr.bf16.mxu0 0
        %870 = vmatpush2.bf16.msra.mxu0 0
        %871 = vmatprep.subr.bf16.mxu0 0
        %872 = vmatpush2.bf16.msra.mxu0 0
        %873 = vmatprep.subr.bf16.mxu0 0
        %874 = vmatpush2.bf16.msra.mxu0 0
        %875 = vmatprep.subr.bf16.mxu0 0
        %876 = vmatpush2.bf16.msra.mxu0 0
        %877 = vmatprep.mubr.bf16.mxu0 0
        %878 = vmatmul.mubr.bf16.gmra.mxu0 %v733
        %v879 = vpop.f32.mrf.mxu0
        %v880 = vpop.f32.mrf.mxu0
        %v881 = vpop.f32.mrf.mxu0
        %v882 = vadd.f32 %v758, %v881
        %v883 = vpop.f32.mrf.mxu0
        %v884 = vadd.f32 %v762, %v883
        %885 = vmatprep.mubr.bf16.mxu0 0
        %886 = vmatmul.mubr.bf16.gmra.mxu0 %v734
        %v887 = vpop.f32.mrf.mxu0
        %v888 = vadd.f32 %v758, %v887
        %v889 = vpop.f32.mrf.mxu0
        %v890 = vadd.f32 %v762, %v889
        %v891 = vpop.f32.mrf.mxu0
        %v892 = vadd.f32 %v758, %v891
        %v893 = vpop.f32.mrf.mxu0
        %v894 = vadd.f32 %v762, %v893
        %895 = vmatprep.mubr.bf16.mxu0 0
        %896 = vmatmul.mubr.bf16.gmra.mxu0 %v735
        %v897 = vpop.f32.mrf.mxu0
        %v898 = vadd.f32 %v758, %v897
        %v899 = vpop.f32.mrf.mxu0
        %v900 = vadd.f32 %v762, %v899
        %v901 = vpop.f32.mrf.mxu0
        %v902 = vadd.f32 %v758, %v901
        %v903 = vpop.f32.mrf.mxu0
        %v904 = vadd.f32 %v762, %v903
        %905 = vmatprep.mubr.bf16.mxu0 0
        %906 = vmatmul.mubr.bf16.gmra.mxu0 %v736
        %v907 = vpop.f32.mrf.mxu0
        %v908 = vadd.f32 %v758, %v907
        %v909 = vpop.f32.mrf.mxu0
        %v910 = vadd.f32 %v762, %v909
        %v911 = vpop.f32.mrf.mxu0
        %v912 = vpop.f32.mrf.mxu0
        %913 = vdwg.mxu0
        %v914 = vsub.f32 0.0, %v884
        %v915 = vsub.f32 0.0, %v890
        %v916 = vsub.f32 0.0, %v894
        %v917 = vsub.f32 0.0, %v900
        %v918 = vsub.f32 0.0, %v904
        %v919 = vsub.f32 0.0, %v910
        %v920 = vmul.f32 %v914, 1.442695
        %v921 = vpow.pop %v920
        %v922 = vmul.f32 %v915, 1.442695
        %v923 = vpow.pop %v922
        %v924 = vmul.f32 %v916, 1.442695
        %v925 = vpow.pop %v924
        %v926 = vmul.f32 %v917, 1.442695
        %v927 = vpow.pop %v926
        %v928 = vmul.f32 %v918, 1.442695
        %v929 = vpow.pop %v928
        %v930 = vmul.f32 %v919, 1.442695
        %v931 = vpow.pop %v930
        %v932 = vadd.f32 %v921, 1.0
        %v933 = vadd.f32 %v923, 1.0
        %v934 = vadd.f32 %v925, 1.0
        %v935 = vadd.f32 %v927, 1.0
        %v936 = vadd.f32 %v929, 1.0
        %v937 = vadd.f32 %v931, 1.0
        %v938 = vrcp.pop %v932
        %v939 = vrcp.pop %v933
        %v940 = vrcp.pop %v934
        %v941 = vrcp.pop %v935
        %v942 = vrcp.pop %v936
        %v943 = vrcp.pop %v937
        %v944 = vmul.f32 %v882, %v938
        %v945 = vmul.f32 %v888, %v939
        %v946 = vmul.f32 %v892, %v940
        %v947 = vmul.f32 %v898, %v941
        %v948 = vmul.f32 %v902, %v942
        %v949 = vmul.f32 %v908, %v943
        %v950 = vlaneseq
        %v951 = vshrl.u32 %v950, 7
        %v952 = vadd.s32 %v951, 8
        %v953 = vadd.s32 %v951, 16
        %v954 = vadd.s32 %v951, 24
        %v955 = vadd.s32 %v951, 32
        %v956 = vadd.s32 %v951, 40
        %v957 = vadd.s32 %v951, 48
        %s958 = smul.u32 %s37, 32
        %v959 = vstv %s958
        %v960 = vadd.s32 %v952, %v959
        %v961 = vadd.s32 %v953, %v959
        %v962 = vadd.s32 %v954, %v959
        %v963 = vadd.s32 %v955, %v959
        %v964 = vadd.s32 %v956, %v959
        %v965 = vadd.s32 %v957, %v959
        %v966 = vsub.s32 %v960, 16
        %v967 = vsub.s32 %v961, 16
        %v968 = vsub.s32 %v962, 16
        %v969 = vsub.s32 %v963, 16
        %v970 = vsub.s32 %v964, 16
        %v971 = vsub.s32 %v965, 16
        %vm972 = vcmp.ge.s32.totalorder %v966, 0
        %vm973 = vcmp.ge.s32.totalorder %v967, 0
        %vm974 = vcmp.ge.s32.totalorder %v968, 0
        %vm975 = vcmp.ge.s32.totalorder %v969, 0
        %vm976 = vcmp.ge.s32.totalorder %v970, 0
        %vm977 = vcmp.ge.s32.totalorder %v971, 0
        %vm978 = vcmp.lt.s32.totalorder %v966, 80
        %vm979 = vcmp.lt.s32.totalorder %v967, 80
        %vm980 = vcmp.lt.s32.totalorder %v968, 80
        %vm981 = vcmp.lt.s32.totalorder %v969, 80
        %vm982 = vcmp.lt.s32.totalorder %v970, 80
        %vm983 = vcmp.lt.s32.totalorder %v971, 80
        %vm984 = vmand %vm972, %vm978
        %vm985 = vmand %vm973, %vm979
        %vm986 = vmand %vm974, %vm980
        %vm987 = vmand %vm975, %vm981
        %vm988 = vmand %vm976, %vm982
        %vm989 = vmand %vm977, %vm983
        %v990 = vsel %vm984, 1, 0
        %v991 = vsel %vm985, 1, 0
        %v992 = vsel %vm986, 1, 0
        %v993 = vsel %vm987, 1, 0
        %v994 = vsel %vm988, 1, 0
        %v995 = vsel %vm989, 1, 0
        %v996 = vcvt.s32.f32 %v990
        %v997 = vcvt.s32.f32 %v991
        %v998 = vcvt.s32.f32 %v992
        %v999 = vcvt.s32.f32 %v993
        %v1000 = vcvt.s32.f32 %v994
        %v1001 = vcvt.s32.f32 %v995
        %v1002 = vmul.f32 %v944, %v996
        %v1003 = vmul.f32 %v945, %v997
        %v1004 = vmul.f32 %v946, %v998
        %v1005 = vmul.f32 %v947, %v999
        %v1006 = vmul.f32 %v948, %v1000
        %v1007 = vmul.f32 %v949, %v1001
        %v1008 = vld [vmem:[%s7] sm:$0x7f]
        %v1009 = vrot.slane %v1002, 5
        %v1010 = vrot.slane %v1003, 5
        %v1011 = vrot.slane %v1004, 5
        %v1012 = vrot.slane %v1005, 5
        %v1013 = vrot.slane %v1006, 5
        %vm1014 = vcmp.lt.s32.totalorder %v951, 3
        %v1015 = vsel %vm1014, %v1012, %v1013
        %v1016 = vsel %vm1014, %v1011, %v1012
        %v1017 = vsel %vm1014, %v1010, %v1011
        %v1018 = vsel %vm1014, %v1009, %v1010
        %v1019 = vlaneseq
        %v1020 = vshrl.u32 %v1019, 7
        %v1021 = vsub.s32 0, %v1020
        %v1022 = vrot.slane %v1008, %v1021
        %v1023 = vmul.f32 %v1018, %v1022
        %v1024 = vmul.f32 %v1017, %v1022
        %v1025 = vmul.f32 %v1016, %v1022
        %v1026 = vmul.f32 %v1015, %v1022
        %v1027 = vadd.f32 %v1023, 0.0
        %v1028 = vadd.f32 %v1024, 0.0
        %v1029 = vadd.f32 %v1025, 0.0
        %v1030 = vadd.f32 %v1026, 0.0
        %v1031 = vrot.slane %v1002, 6
        %v1032 = vrot.slane %v1003, 6
        %v1033 = vrot.slane %v1004, 6
        %v1034 = vrot.slane %v1005, 6
        %v1035 = vrot.slane %v1006, 6
        %vm1036 = vcmp.lt.s32.totalorder %v951, 2
        %v1037 = vsel %vm1036, %v1034, %v1035
        %v1038 = vsel %vm1036, %v1033, %v1034
        %v1039 = vsel %vm1036, %v1032, %v1033
        %v1040 = vsel %vm1036, %v1031, %v1032
        %v1041 = vlaneseq
        %v1042 = vshrl.u32 %v1041, 7
        %v1043 = vsub.s32 1, %v1042
        %v1044 = vrot.slane %v1008, %v1043
        %v1045 = vmul.f32 %v1040, %v1044
        %v1046 = vmul.f32 %v1039, %v1044
        %v1047 = vmul.f32 %v1038, %v1044
        %v1048 = vmul.f32 %v1037, %v1044
        %v1049 = vadd.f32 %v1027, %v1045
        %v1050 = vadd.f32 %v1028, %v1046
        %v1051 = vadd.f32 %v1029, %v1047
        %v1052 = vadd.f32 %v1030, %v1048
        %v1053 = vrot.slane %v1002, 7
        %v1054 = vrot.slane %v1003, 7
        %v1055 = vrot.slane %v1004, 7
        %v1056 = vrot.slane %v1005, 7
        %v1057 = vrot.slane %v1006, 7
        %vm1058 = vcmp.lt.s32.totalorder %v951, 1
        %v1059 = vsel %vm1058, %v1056, %v1057
        %v1060 = vsel %vm1058, %v1055, %v1056
        %v1061 = vsel %vm1058, %v1054, %v1055
        %v1062 = vsel %vm1058, %v1053, %v1054
        %v1063 = vlaneseq
        %v1064 = vshrl.u32 %v1063, 7
        %v1065 = vsub.s32 2, %v1064
        %v1066 = vrot.slane %v1008, %v1065
        %v1067 = vmul.f32 %v1062, %v1066
        %v1068 = vmul.f32 %v1061, %v1066
        %v1069 = vmul.f32 %v1060, %v1066
        %v1070 = vmul.f32 %v1059, %v1066
        %v1071 = vadd.f32 %v1049, %v1067
        %v1072 = vadd.f32 %v1050, %v1068
        %v1073 = vadd.f32 %v1051, %v1069
        %v1074 = vadd.f32 %v1052, %v1070
        %v1075 = vlaneseq
        %v1076 = vshrl.u32 %v1075, 7
        %v1077 = vsub.s32 3, %v1076
        %v1078 = vrot.slane %v1008, %v1077
        %v1079 = vmul.f32 %v1003, %v1078
        %v1080 = vmul.f32 %v1004, %v1078
        %v1081 = vmul.f32 %v1005, %v1078
        %v1082 = vmul.f32 %v1006, %v1078
        %v1083 = vadd.f32 %v1071, %v1079
        %v1084 = vadd.f32 %v1072, %v1080
        %v1085 = vadd.f32 %v1073, %v1081
        %v1086 = vadd.f32 %v1074, %v1082
        %v1087 = vrot.slane %v1003, 1
        %v1088 = vrot.slane %v1004, 1
        %v1089 = vrot.slane %v1005, 1
        %v1090 = vrot.slane %v1006, 1
        %v1091 = vrot.slane %v1007, 1
        %vm1092 = vcmp.lt.s32.totalorder %v951, 7
        %v1093 = vsel %vm1092, %v1090, %v1091
        %v1094 = vsel %vm1092, %v1089, %v1090
        %v1095 = vsel %vm1092, %v1088, %v1089
        %v1096 = vsel %vm1092, %v1087, %v1088
        %v1097 = vlaneseq
        %v1098 = vshrl.u32 %v1097, 7
        %v1099 = vsub.s32 4, %v1098
        %v1100 = vrot.slane %v1008, %v1099
        %v1101 = vmul.f32 %v1096, %v1100
        %v1102 = vmul.f32 %v1095, %v1100
        %v1103 = vmul.f32 %v1094, %v1100
        %v1104 = vmul.f32 %v1093, %v1100
        %v1105 = vadd.f32 %v1083, %v1101
        %v1106 = vadd.f32 %v1084, %v1102
        %v1107 = vadd.f32 %v1085, %v1103
        %v1108 = vadd.f32 %v1086, %v1104
        %v1109 = vrot.slane %v1003, 2
        %v1110 = vrot.slane %v1004, 2
        %v1111 = vrot.slane %v1005, 2
        %v1112 = vrot.slane %v1006, 2
        %v1113 = vrot.slane %v1007, 2
        %vm1114 = vcmp.lt.s32.totalorder %v951, 6
        %v1115 = vsel %vm1114, %v1112, %v1113
        %v1116 = vsel %vm1114, %v1111, %v1112
        %v1117 = vsel %vm1114, %v1110, %v1111
        %v1118 = vsel %vm1114, %v1109, %v1110
        %v1119 = vlaneseq
        %v1120 = vshrl.u32 %v1119, 7
        %v1121 = vsub.s32 5, %v1120
        %v1122 = vrot.slane %v1008, %v1121
        %v1123 = vmul.f32 %v1118, %v1122
        %v1124 = vmul.f32 %v1117, %v1122
        %v1125 = vmul.f32 %v1116, %v1122
        %v1126 = vmul.f32 %v1115, %v1122
        %v1127 = vadd.f32 %v1105, %v1123
        %v1128 = vadd.f32 %v1106, %v1124
        %v1129 = vadd.f32 %v1107, %v1125
        %v1130 = vadd.f32 %v1108, %v1126
        %v1131 = vrot.slane %v1003, 3
        %v1132 = vrot.slane %v1004, 3
        %v1133 = vrot.slane %v1005, 3
        %v1134 = vrot.slane %v1006, 3
        %v1135 = vrot.slane %v1007, 3
        %vm1136 = vcmp.lt.s32.totalorder %v951, 5
        %v1137 = vsel %vm1136, %v1134, %v1135
        %v1138 = vsel %vm1136, %v1133, %v1134
        %v1139 = vsel %vm1136, %v1132, %v1133
        %v1140 = vsel %vm1136, %v1131, %v1132
        %v1141 = vlaneseq
        %v1142 = vshrl.u32 %v1141, 7
        %v1143 = vsub.s32 6, %v1142
        %v1144 = vrot.slane %v1008, %v1143
        %v1145 = vmul.f32 %v1140, %v1144
        %v1146 = vmul.f32 %v1139, %v1144
        %v1147 = vmul.f32 %v1138, %v1144
        %v1148 = vmul.f32 %v1137, %v1144
        %v1149 = vadd.f32 %v1127, %v1145
        %v1150 = vadd.f32 %v1128, %v1146
        %v1151 = vadd.f32 %v1129, %v1147
        %v1152 = vadd.f32 %v1130, %v1148
        %v1153 = vld [vmem:[%s8] sm:$0x1]
        %v1155 = vlaneseq
        %v1156 = vshrl.u32 %v1155, 7
        %v1157 = vsub.s32 0, %v1156
        %v1158 = vrot.slane %v1153, %v1157
        %v1160 = vadd.f32 %v1149, %v1158
        %v1161 = vadd.f32 %v1150, %v1158
        %v1162 = vadd.f32 %v1151, %v1158
        %v1163 = vadd.f32 %v1152, %v1158
        %v1164 = vsub.f32 0.0, %v1160
        %v1165 = vsub.f32 0.0, %v1161
        %v1166 = vsub.f32 0.0, %v1162
        %v1167 = vsub.f32 0.0, %v1163
        %v1168 = vmul.f32 %v1164, 1.442695
        %v1169 = vpow.pop %v1168
        %v1170 = vmul.f32 %v1165, 1.442695
        %v1171 = vpow.pop %v1170
        %v1172 = vmul.f32 %v1166, 1.442695
        %v1173 = vpow.pop %v1172
        %v1174 = vmul.f32 %v1167, 1.442695
        %v1175 = vpow.pop %v1174
        %v1176 = vadd.f32 %v1169, 1.0
        %v1177 = vadd.f32 %v1171, 1.0
        %v1178 = vadd.f32 %v1173, 1.0
        %v1179 = vadd.f32 %v1175, 1.0
        %v1180 = vrcp.pop %v1176
        %v1181 = vrcp.pop %v1177
        %v1182 = vrcp.pop %v1178
        %v1183 = vrcp.pop %v1179
        %v1184 = vmul.f32 %v1160, %v1180
        %v1185 = vmul.f32 %v1161, %v1181
        %v1186 = vmul.f32 %v1162, %v1182
        %v1187 = vmul.f32 %v1163, %v1183
        %v1188 = vpack.c.bf16 %v1185, %v1184
        %v1189 = vpack.c.bf16 %v1187, %v1186
        %v1190 = vld [vmem:[#allocation10] sm:$0xf]
        %v1191 = vld [vmem:[#allocation10 + $0x4] sm:$0xf]
        %v1192 = vld [vmem:[#allocation10 + $0x8] sm:$0xf]
        %v1193 = vld [vmem:[#allocation10 + $0xc] sm:$0xf]
        %v1194 = vld [vmem:[#allocation10 + $0x10] sm:$0xf]
        %v1195 = vld [vmem:[#allocation10 + $0x14] sm:$0xf]
        %v1196 = vld [vmem:[#allocation10 + $0x18] sm:$0xf]
        %v1197 = vld [vmem:[#allocation10 + $0x1c] sm:$0xf]
        %v1198 = vld [vmem:[#allocation10 + $0x20] sm:$0xf]
        %v1199 = vld [vmem:[#allocation10 + $0x24] sm:$0xf]
        %v1200 = vld [vmem:[#allocation10 + $0x28] sm:$0xf]
        %v1201 = vld [vmem:[#allocation10 + $0x2c] sm:$0xf]
        %v1202 = vld [vmem:[#allocation10 + $0x30] sm:$0xf]
        %v1203 = vld [vmem:[#allocation10 + $0x34] sm:$0xf]
        %v1204 = vld [vmem:[#allocation10 + $0x38] sm:$0xf]
        %v1205 = vld [vmem:[#allocation10 + $0x3c] sm:$0xf]
        %v1206 = vld [vmem:[%s10] sm:$0x1]
        %v1208 = vlaneseq
        %v1209 = vshrl.u32 %v1208, 7
        %v1210 = vsub.s32 0, %v1209
        %v1211 = vrot.slane %v1206, %v1210
        %v1229 = vunpack.c.l.b16 %v1190
        %v1230 = vunpack.c.l.b16 %v1191
        %v1231 = vunpack.c.l.b16 %v1192
        %v1232 = vunpack.c.l.b16 %v1193
        %v1233 = vunpack.c.l.b16 %v1194
        %v1234 = vunpack.c.l.b16 %v1195
        %v1235 = vunpack.c.l.b16 %v1196
        %v1236 = vunpack.c.l.b16 %v1197
        %v1237 = vunpack.c.l.b16 %v1198
        %v1238 = vunpack.c.l.b16 %v1199
        %v1239 = vunpack.c.l.b16 %v1200
        %v1240 = vunpack.c.l.b16 %v1201
        %v1241 = vunpack.c.l.b16 %v1202
        %v1242 = vunpack.c.l.b16 %v1203
        %v1243 = vunpack.c.l.b16 %v1204
        %v1244 = vunpack.c.l.b16 %v1205
        %v1245 = vpack.c.b16 %v1230, %v1229
        %v1246 = vpack.c.b16 %v1232, %v1231
        %v1247 = vpack.c.b16 %v1234, %v1233
        %v1248 = vpack.c.b16 %v1236, %v1235
        %v1249 = vpack.c.b16 %v1238, %v1237
        %v1250 = vpack.c.b16 %v1240, %v1239
        %v1251 = vpack.c.b16 %v1242, %v1241
        %v1252 = vpack.c.b16 %v1244, %v1243
        %1261 = vmatprep.subr.bf16.mxu0 0
        %1262 = vmatpush1.bf16.msra.mxu0 %v1252
        %1263 = vmatprep.subr.bf16.mxu0 0
        %1264 = vmatpush1.bf16.msra.mxu0 %v1251
        %1265 = vmatprep.subr.bf16.mxu0 0
        %1266 = vmatpush1.bf16.msra.mxu0 %v1250
        %1267 = vmatprep.subr.bf16.mxu0 0
        %1268 = vmatpush1.bf16.msra.mxu0 %v1249
        %1269 = vmatprep.subr.bf16.mxu0 0
        %1270 = vmatpush1.bf16.msra.mxu0 %v1248
        %1271 = vmatprep.subr.bf16.mxu0 0
        %1272 = vmatpush1.bf16.msra.mxu0 %v1247
        %1273 = vmatprep.subr.bf16.mxu0 0
        %1274 = vmatpush1.bf16.msra.mxu0 %v1246
        %1275 = vmatprep.subr.bf16.mxu0 0
        %1276 = vmatpush1.bf16.msra.mxu0 %v1245
        %1277 = vmatprep.subr.bf16.mxu0 0
        %1278 = vmatpush2.bf16.msra.mxu0 0
        %1279 = vmatprep.subr.bf16.mxu0 0
        %1280 = vmatpush2.bf16.msra.mxu0 0
        %1281 = vmatprep.subr.bf16.mxu0 0
        %1282 = vmatpush2.bf16.msra.mxu0 0
        %1283 = vmatprep.subr.bf16.mxu0 0
        %1284 = vmatpush2.bf16.msra.mxu0 0
        %1285 = vmatprep.subr.bf16.mxu0 0
        %1286 = vmatpush2.bf16.msra.mxu0 0
        %1287 = vmatprep.subr.bf16.mxu0 0
        %1288 = vmatpush2.bf16.msra.mxu0 0
        %1289 = vmatprep.subr.bf16.mxu0 0
        %1290 = vmatpush2.bf16.msra.mxu0 0
        %1291 = vmatprep.subr.bf16.mxu0 0
        %1292 = vmatpush2.bf16.msra.mxu0 0
        %1293 = vmatprep.mubr.bf16.mxu0 0
        %1294 = vmatmul.mubr.bf16.gmra.mxu0 %v1188
        %v1295 = vpop.f32.mrf.mxu0
        %v1296 = vadd.f32 %v1211, %v1295
        %v1297 = vpop.f32.mrf.mxu0
        %v1298 = vpop.f32.mrf.mxu0
        %v1299 = vadd.f32 %v1211, %v1298
        %v1300 = vpop.f32.mrf.mxu0
        %1301 = vmatprep.mubr.bf16.mxu0 0
        %1302 = vmatmul.mubr.bf16.gmra.mxu0 %v1189
        %v1303 = vpop.f32.mrf.mxu0
        %v1304 = vadd.f32 %v1211, %v1303
        %v1305 = vpop.f32.mrf.mxu0
        %v1306 = vpop.f32.mrf.mxu0
        %v1307 = vadd.f32 %v1211, %v1306
        %v1308 = vpop.f32.mrf.mxu0
        %1309 = vdwg.mxu0
        %v1310 = vpack.c.bf16 %v1299, %v1296
        %v1311 = vpack.c.bf16 %v1307, %v1304
        %v1314 = vunpack.c.l.b16 %v1310
        %v1315 = vunpack.c.h.b16 %v1310
        %v1316 = vunpack.c.l.b16 %v1311
        %v1317 = vunpack.c.h.b16 %v1311
        %v1318 = vpack.c.b16 %v1314, %v1314
        %v1319 = vpack.c.b16 %v1315, %v1315
        %v1320 = vpack.c.b16 %v1316, %v1316
        %v1321 = vpack.c.b16 %v1317, %v1317
        %1326 = vst [vmem:[%s560] sm:$0xf] %v1318
        %1327 = vst [vmem:[%s560 + $0x4] sm:$0xf] %v1319
        %1328 = vst [vmem:[%s560 + $0x8] sm:$0xf] %v1320
        %1329 = vst [vmem:[%s560 + $0xc] sm:$0xf] %v1321
        %s1330 = sand.u32 %s322, 1
        %s1331 = scalar_lea.sflag [#allocation4], %s1330
        %s1332 = sand.u32 %s322, 1
        %s1333 = smul.addr %s1332, 16
        %s1334 = scalar_lea.vmem [#allocation11], %s1333
        // Predicated region
        $region85: #{tpu_custom_call.1} parent=63 // pred_check
          %p1335 = pneg %p332
        $region86: #{tpu_custom_call.1} parent=63 // pred_check_branch
          %1337 = sbr.rel (%p1335) target = $region88
        $region87: #{tpu_custom_call.1} parent=63 // pred_region
          %s1338 = smul.u32 4, %s37
          %s1340 = ssub.s32 256, 256
          %1341 = vsyncadd %s1331, %s1340
          %s1342 = smul.addr %s36, 12
          %s1343 = sadd.s32 %s1338, %s1342
          %s1344 = smul.addr %s1343, 64
          %s1345 = scalar_lea.hbm %s11, %s1344
          %s1346 = sshll.u32 %s1334, 4
          %s1347 = int_to_ptr.vmem [resolvable:$true] %s1346
          %1352 = dma.vmem_to_hbm [thread:$0]  %s1347, 256, %s1345, %s1331, 64, 64, 4
        $region88: #{tpu_custom_call.1} parent=63 // pred_fallthru
          _
      $region64: #{tpu_custom_call.1} parent=5 // pred_fallthru
        _
      %p1353 = scmp.le.s32.totalorder 2, %s27
      // Predicated region
      $region89: #{tpu_custom_call.1} parent=5 // pred_check
        %p1354 = pneg %p1353
      $region90: #{tpu_custom_call.1} parent=5 // pred_check_branch
        %1356 = sbr.rel (%p1354) target = $region92
      $region91: #{tpu_custom_call.1} parent=5 // pred_region
        %s1357 = ssub.s32 %s27, 2
        // Predicated region
        $region93: #{tpu_custom_call.1} parent=91 // pred_check
          %p1358 = pneg %p338
        $region94: #{tpu_custom_call.1} parent=91 // pred_check_branch
          %1360 = sbr.rel (%p1358) target = $region96
        $region95: #{tpu_custom_call.1} parent=91 // pred_region
          %s1361 = sand.u32 %s323, 1
          %s1362 = scalar_lea.sflag [#allocation4], %s1361
          %s1363 = sand.u32 %s323, 1
          %s1364 = smul.addr %s1363, 16
          %s1365 = scalar_lea.vmem [#allocation11], %s1364
          %1366 = dma.done %s1362, 256
        $region96: #{tpu_custom_call.1} parent=91 // pred_fallthru
          _
      $region92: #{tpu_custom_call.1} parent=5 // pred_fallthru
        _
    $region6: #{tpu_custom_call.1} parent=1 // loop_footer
      %s31 = sadd.s32 1, %s27
    $region7: #{tpu_custom_call.1} parent=1 // loop_footer_branch
      %26 = sbr.rel target = $region3
    $region8: #{tpu_custom_call.1} parent=1 // loop_exit
      _
    %1367 = vsyncpa [#allocation3], 1
    %s1368 = scalar_lea.sflag [#allocation3], 1
    %1369 = vsyncpa %s1368, 1
    %1370 = vsyncpa [#allocation6], 1
    %s1371 = scalar_lea.sflag [#allocation6], 1
    %1372 = vsyncpa %s1371, 1
    %1373 = vsyncpa [#allocation9], 1
    %1374 = vsyncpa [#allocation4], 1
    %s1375 = scalar_lea.sflag [#allocation4], 1
    %1376 = vsyncpa %s1375, 1

// kernel: tpu_custom_call.1
$region0: #{tpu_custom_call.1}
  #allocation0 [shape = 'u32[]', space=smem, size = 0x4, offset = 0x4, fixed_abs, tag = 'smem constant byte address 0x4 - core index']
  #allocation1 [shape = 'u32[144,128]{1,0:T(1,128)}', space=vmem, size = 0x12000, scoped, tag = 'internal scratch']
  %s0 = inlined_call_operand.hbm [shape: bf16[2,96,128], index: 0, kind: input, shape index: {}]
  %s1 = inlined_call_operand.hbm [shape: bf16[2,96,128], index: 1, kind: input, shape index: {}]
  %s2 = inlined_call_operand.hbm [shape: bf16[2,96,128], index: 2, kind: input, shape index: {}]
  %s3 = inlined_call_operand.vmem [shape: f32[1,128], index: 3, kind: input, shape index: {}]
  %s4 = inlined_call_operand.vmem [shape: f32[1,128], index: 4, kind: input, shape index: {}]
  %s5 = inlined_call_operand.hbm [shape: bf16[128,256], index: 5, kind: input, shape index: {}]
  %s6 = inlined_call_operand.vmem [shape: f32[1,256], index: 6, kind: input, shape index: {}]
  %s7 = inlined_call_operand.vmem [shape: f32[7,128], index: 7, kind: input, shape index: {}]
  %s8 = inlined_call_operand.vmem [shape: f32[1,128], index: 8, kind: input, shape index: {}]
  %s9 = inlined_call_operand.hbm [shape: bf16[128,128], index: 9, kind: input, shape index: {}]
  %s10 = inlined_call_operand.vmem [shape: f32[1,128], index: 10, kind: input, shape index: {}]
  %s11 = inlined_call_operand.hbm [shape: bf16[2,96,128], index: 11, kind: output, shape index: {}]
  %s12 = sld [smem:[#allocation0]]
  $region97: #{tpu_custom_call.1} parent=0
    _
  %s14 = ssub.s32 1, %s12
  %s15 = scalar_select 0, %s14, %s12
  $region1: #{tpu_custom_call.1} parent=0
    #allocation2 [shape = 'u8[8192]{0}', space=vmem, size = 0x2000, scoped, tag = 'input window, operand 0']
    #allocation3 [shape = 's32[2]{0}', space=sflag, size = 0x8, scoped, tag = 'scoped memory for tpu_custom_call.1']
    #allocation4 [shape = 's32[2]{0}', space=sflag, size = 0x8, scoped, tag = 'scoped memory for tpu_custom_call.1']
    #allocation5 [shape = 'u8[16384]{0}', space=vmem, size = 0x4000, scoped, tag = 'input window, operand 1']
    #allocation6 [shape = 's32[2]{0}', space=sflag, size = 0x8, scoped, tag = 'scoped memory for tpu_custom_call.1']
    #allocation7 [shape = 'u8[8192]{0}', space=vmem, size = 0x2000, scoped, tag = 'input window, operand 2']
    #allocation8 [shape = 'u8[65536]{0}', space=vmem, size = 0x10000, scoped, tag = 'input window, operand 5, single buffered']
    #allocation9 [shape = 's32[1]{0}', space=sflag, size = 0x4, scoped, tag = 'scoped memory for tpu_custom_call.1']
    #allocation10 [shape = 'u8[32768]{0}', space=vmem, size = 0x8000, scoped, tag = 'input window, operand 9, single buffered']
    #allocation11 [shape = 'u8[16384]{0}', space=vmem, size = 0x4000, scoped, tag = 'output window, operand 0']
    %16 = vsyncpa [#allocation3], 0
    %s17 = scalar_lea.sflag [#allocation3], 1
    %18 = vsyncpa %s17, 0
    %19 = vsyncpa [#allocation6], 0
    %s20 = scalar_lea.sflag [#allocation6], 1
    %21 = vsyncpa %s20, 0
    %22 = vsyncpa [#allocation9], 0
    %23 = vsyncpa [#allocation4], 0
    %s24 = scalar_lea.sflag [#allocation4], 1
    %25 = vsyncpa %s24, 0
    loop: start=0, step=1, limit=8
    $region2: #{tpu_custom_call.1} parent=1 // loop_pre_header
      _
    $region3: #{tpu_custom_call.1} parent=1 // loop_header
      %s27 = sphi 0, %s31
      %p28 = scmp.ge.s32.totalorder %s27, 8
      %s34 = sphi 0, %s46
      %s35 = sphi 0, %s42
      %s36 = sphi 0, %s34
      %s37 = sphi 0, %s35
      %s38 = sphi 0, %s36
      %s39 = sphi 0, %s37
      %s59 = sphi 0, %s61
      %s62 = sphi 0, %s59
      %s63 = sphi 0, %s62
      %s79 = sphi 0, %s63
      %s87 = sphi 0, %s89
      %s90 = sphi 0, %s87
      %s91 = sphi 0, %s90
      %s107 = sphi 0, %s91
      %s123 = sphi 0, %s125
      %s126 = sphi 0, %s123
      %s127 = sphi 0, %s126
      %s143 = sphi 0, %s127
      %s147 = sphi 0, %s147
      %s149 = sphi 0, %s147
      %s150 = sphi 0, %s149
      %s164 = sphi 0, %s150
      %s168 = sphi 0, %s168
      %s170 = sphi 0, %s168
      %s171 = sphi 0, %s170
      %s185 = sphi 0, %s171
      %s189 = sphi 0, %s189
      %s191 = sphi 0, %s189
      %s192 = sphi 0, %s191
      %s206 = sphi 0, %s192
      %s210 = sphi 0, %s210
      %s212 = sphi 0, %s210
      %s213 = sphi 0, %s212
      %s227 = sphi 0, %s213
      %s231 = sphi 0, %s231
      %s233 = sphi 0, %s231
      %s234 = sphi 0, %s233
      %s248 = sphi 0, %s234
      %s252 = sphi 0, %s252
      %s254 = sphi 0, %s252
      %s255 = sphi 0, %s254
      %s269 = sphi 0, %s255
      %s273 = sphi 0, %s273
      %s275 = sphi 0, %s273
      %s276 = sphi 0, %s275
      %s290 = sphi 0, %s276
      %s294 = sphi 0, %s294
      %s296 = sphi 0, %s294
      %s297 = sphi 0, %s296
      %s311 = sphi 0, %s297
      %s319 = sphi 0, %s321
      %s322 = sphi 0, %s319
      %s323 = sphi 0, %s322
      %s339 = sphi 0, %s323
    $region4: #{tpu_custom_call.1} parent=1 // loop_header_branch
      %30 = sbr.rel (%p28) target = $region8
    $region5: #{tpu_custom_call.1} parent=1 // loop_body
      %s32 = ssub.s32 %s27, 1
      %s33 = ssub.s32 %s27, 2
      %s40 = sadd.s32 1, %s35
      %p41 = scmp.ge.s32.totalorder %s40, 3
      %s42 = scalar_select %p41, 0, %s40
      %s43 = sadd.s32 1, %s34
      %s44 = scalar_select %p41, %s43, %s34
      %p45 = scmp.ge.s32.totalorder %s44, 2
      %s46 = scalar_select %p45, 0, %s44
      %s47 = smul.u32 %s35, 2
      %s48 = ssub.s32 %s47, 1
      %p49 = scmp.gt.s32.totalorder %s48, 0
      %s50 = scalar_select %p49, %s48, 0
      %s51 = smul.u32 %s42, 2
      %s52 = ssub.s32 %s51, 1
      %p53 = scmp.gt.s32.totalorder %s52, 0
      %s54 = scalar_select %p53, %s52, 0
      %s55 = ssub.s32 %s34, %s46
      %s56 = ssub.s32 %s50, %s54
      %s57 = sor.u32 %s55, %s56
      %p58 = scmp.eq.s32.totalorder %s57, 0
      %s60 = sadd.s32 %s59, 1
      %s61 = scalar_select %p58, %s59, %s60
      %p64 = pneg %p58
      %p65 = scmp.eq.s32.totalorder %s27, 5
      %p66 = por %p64, %p65
      %p67 = scmp.ne.s32.totalorder %s59, %s62
      %p68 = scmp.eq.s32.totalorder %s27, 0
      %p69 = por %p67, %p68
      %p70 = scmp.ne.s32.totalorder %s59, %s62
      %p71 = scmp.eq.s32.totalorder %s32, 5
      %p72 = por %p70, %p71
      %p73 = scmp.ne.s32.totalorder %s62, %s63
      %p74 = scmp.eq.s32.totalorder %s32, 0
      %p75 = por %p73, %p74
      %p76 = scmp.ne.s32.totalorder %s62, %s63
      %p77 = scmp.eq.s32.totalorder %s33, 5
      %p78 = por %p76, %p77
      %p80 = scmp.ne.s32.totalorder %s63, %s79
      %p81 = scmp.eq.s32.totalorder %s33, 0
      %p82 = por %p80, %p81
      %s83 = ssub.s32 %s34, %s46
      %s84 = ssub.s32 %s35, %s42
      %s85 = sor.u32 %s83, %s84
      %p86 = scmp.eq.s32.totalorder %s85, 0
      %s88 = sadd.s32 %s87, 1
      %s89 = scalar_select %p86, %s87, %s88
      %p92 = pneg %p86
      %p93 = scmp.eq.s32.totalorder %s27, 5
      %p94 = por %p92, %p93
      %p95 = scmp.ne.s32.totalorder %s87, %s90
      %p96 = scmp.eq.s32.totalorder %s27, 0
      %p97 = por %p95, %p96
      %p98 = scmp.ne.s32.totalorder %s87, %s90
      %p99 = scmp.eq.s32.totalorder %s32, 5
      %p100 = por %p98, %p99
      %p101 = scmp.ne.s32.totalorder %s90, %s91
      %p102 = scmp.eq.s32.totalorder %s32, 0
      %p103 = por %p101, %p102
      %p104 = scmp.ne.s32.totalorder %s90, %s91
      %p105 = scmp.eq.s32.totalorder %s33, 5
      %p106 = por %p104, %p105
      %p108 = scmp.ne.s32.totalorder %s91, %s107
      %p109 = scmp.eq.s32.totalorder %s33, 0
      %p110 = por %p108, %p109
      %s111 = sadd.s32 %s35, 1
      %s112 = smul.u32 %s111, 2
      %p113 = scmp.lt.s32.totalorder %s112, 5
      %s114 = scalar_select %p113, %s112, 5
      %s115 = sadd.s32 %s42, 1
      %s116 = smul.u32 %s115, 2
      %p117 = scmp.lt.s32.totalorder %s116, 5
      %s118 = scalar_select %p117, %s116, 5
      %s119 = ssub.s32 %s34, %s46
      %s120 = ssub.s32 %s114, %s118
      %s121 = sor.u32 %s119, %s120
      %p122 = scmp.eq.s32.totalorder %s121, 0
      %s124 = sadd.s32 %s123, 1
      %s125 = scalar_select %p122, %s123, %s124
      %p128 = pneg %p122
      %p129 = scmp.eq.s32.totalorder %s27, 5
      %p130 = por %p128, %p129
      %p131 = scmp.ne.s32.totalorder %s123, %s126
      %p132 = scmp.eq.s32.totalorder %s27, 0
      %p133 = por %p131, %p132
      %p134 = scmp.ne.s32.totalorder %s123, %s126
      %p135 = scmp.eq.s32.totalorder %s32, 5
      %p136 = por %p134, %p135
      %p137 = scmp.ne.s32.totalorder %s126, %s127
      %p138 = scmp.eq.s32.totalorder %s32, 0
      %p139 = por %p137, %p138
      %p140 = scmp.ne.s32.totalorder %s126, %s127
      %p141 = scmp.eq.s32.totalorder %s33, 5
      %p142 = por %p140, %p141
      %p144 = scmp.ne.s32.totalorder %s127, %s143
      %p145 = scmp.eq.s32.totalorder %s33, 0
      %p146 = por %p144, %p145
      %s148 = sadd.s32 %s147, 1
      %p151 = scmp.eq.s32.totalorder %s27, 5
      %p152 = scmp.ne.s32.totalorder %s147, %s149
      %p153 = scmp.eq.s32.totalorder %s27, 0
      %p154 = por %p152, %p153
      %p155 = scmp.ne.s32.totalorder %s147, %s149
      %p156 = scmp.eq.s32.totalorder %s32, 5
      %p157 = por %p155, %p156
      %p158 = scmp.ne.s32.totalorder %s149, %s150
      %p159 = scmp.eq.s32.totalorder %s32, 0
      %p160 = por %p158, %p159
      %p161 = scmp.ne.s32.totalorder %s149, %s150
      %p162 = scmp.eq.s32.totalorder %s33, 5
      %p163 = por %p161, %p162
      %p165 = scmp.ne.s32.totalorder %s150, %s164
      %p166 = scmp.eq.s32.totalorder %s33, 0
      %p167 = por %p165, %p166
      %s169 = sadd.s32 %s168, 1
      %p172 = scmp.eq.s32.totalorder %s27, 5
      %p173 = scmp.ne.s32.totalorder %s168, %s170
      %p174 = scmp.eq.s32.totalorder %s27, 0
      %p175 = por %p173, %p174
      %p176 = scmp.ne.s32.totalorder %s168, %s170
      %p177 = scmp.eq.s32.totalorder %s32, 5
      %p178 = por %p176, %p177
      %p179 = scmp.ne.s32.totalorder %s170, %s171
      %p180 = scmp.eq.s32.totalorder %s32, 0
      %p181 = por %p179, %p180
      %p182 = scmp.ne.s32.totalorder %s170, %s171
      %p183 = scmp.eq.s32.totalorder %s33, 5
      %p184 = por %p182, %p183
      %p186 = scmp.ne.s32.totalorder %s171, %s185
      %p187 = scmp.eq.s32.totalorder %s33, 0
      %p188 = por %p186, %p187
      %s190 = sadd.s32 %s189, 1
      %p193 = scmp.eq.s32.totalorder %s27, 5
      %p194 = scmp.ne.s32.totalorder %s189, %s191
      %p195 = scmp.eq.s32.totalorder %s27, 0
      %p196 = por %p194, %p195
      %p197 = scmp.ne.s32.totalorder %s189, %s191
      %p198 = scmp.eq.s32.totalorder %s32, 5
      %p199 = por %p197, %p198
      %p200 = scmp.ne.s32.totalorder %s191, %s192
      %p201 = scmp.eq.s32.totalorder %s32, 0
      %p202 = por %p200, %p201
      %p203 = scmp.ne.s32.totalorder %s191, %s192
      %p204 = scmp.eq.s32.totalorder %s33, 5
      %p205 = por %p203, %p204
      %p207 = scmp.ne.s32.totalorder %s192, %s206
      %p208 = scmp.eq.s32.totalorder %s33, 0
      %p209 = por %p207, %p208
      %s211 = sadd.s32 %s210, 1
      %p214 = scmp.eq.s32.totalorder %s27, 5
      %p215 = scmp.ne.s32.totalorder %s210, %s212
      %p216 = scmp.eq.s32.totalorder %s27, 0
      %p217 = por %p215, %p216
      %p218 = scmp.ne.s32.totalorder %s210, %s212
      %p219 = scmp.eq.s32.totalorder %s32, 5
      %p220 = por %p218, %p219
      %p221 = scmp.ne.s32.totalorder %s212, %s213
      %p222 = scmp.eq.s32.totalorder %s32, 0
      %p223 = por %p221, %p222
      %p224 = scmp.ne.s32.totalorder %s212, %s213
      %p225 = scmp.eq.s32.totalorder %s33, 5
      %p226 = por %p224, %p225
      %p228 = scmp.ne.s32.totalorder %s213, %s227
      %p229 = scmp.eq.s32.totalorder %s33, 0
      %p230 = por %p228, %p229
      %s232 = sadd.s32 %s231, 1
      %p235 = scmp.eq.s32.totalorder %s27, 5
      %p236 = scmp.ne.s32.totalorder %s231, %s233
      %p237 = scmp.eq.s32.totalorder %s27, 0
      %p238 = por %p236, %p237
      %p239 = scmp.ne.s32.totalorder %s231, %s233
      %p240 = scmp.eq.s32.totalorder %s32, 5
      %p241 = por %p239, %p240
      %p242 = scmp.ne.s32.totalorder %s233, %s234
      %p243 = scmp.eq.s32.totalorder %s32, 0
      %p244 = por %p242, %p243
      %p245 = scmp.ne.s32.totalorder %s233, %s234
      %p246 = scmp.eq.s32.totalorder %s33, 5
      %p247 = por %p245, %p246
      %p249 = scmp.ne.s32.totalorder %s234, %s248
      %p250 = scmp.eq.s32.totalorder %s33, 0
      %p251 = por %p249, %p250
      %s253 = sadd.s32 %s252, 1
      %p256 = scmp.eq.s32.totalorder %s27, 5
      %p257 = scmp.ne.s32.totalorder %s252, %s254
      %p258 = scmp.eq.s32.totalorder %s27, 0
      %p259 = por %p257, %p258
      %p260 = scmp.ne.s32.totalorder %s252, %s254
      %p261 = scmp.eq.s32.totalorder %s32, 5
      %p262 = por %p260, %p261
      %p263 = scmp.ne.s32.totalorder %s254, %s255
      %p264 = scmp.eq.s32.totalorder %s32, 0
      %p265 = por %p263, %p264
      %p266 = scmp.ne.s32.totalorder %s254, %s255
      %p267 = scmp.eq.s32.totalorder %s33, 5
      %p268 = por %p266, %p267
      %p270 = scmp.ne.s32.totalorder %s255, %s269
      %p271 = scmp.eq.s32.totalorder %s33, 0
      %p272 = por %p270, %p271
      %s274 = sadd.s32 %s273, 1
      %p277 = scmp.eq.s32.totalorder %s27, 5
      %p278 = scmp.ne.s32.totalorder %s273, %s275
      %p279 = scmp.eq.s32.totalorder %s27, 0
      %p280 = por %p278, %p279
      %p281 = scmp.ne.s32.totalorder %s273, %s275
      %p282 = scmp.eq.s32.totalorder %s32, 5
      %p283 = por %p281, %p282
      %p284 = scmp.ne.s32.totalorder %s275, %s276
      %p285 = scmp.eq.s32.totalorder %s32, 0
      %p286 = por %p284, %p285
      %p287 = scmp.ne.s32.totalorder %s275, %s276
      %p288 = scmp.eq.s32.totalorder %s33, 5
      %p289 = por %p287, %p288
      %p291 = scmp.ne.s32.totalorder %s276, %s290
      %p292 = scmp.eq.s32.totalorder %s33, 0
      %p293 = por %p291, %p292
      %s295 = sadd.s32 %s294, 1
      %p298 = scmp.eq.s32.totalorder %s27, 5
      %p299 = scmp.ne.s32.totalorder %s294, %s296
      %p300 = scmp.eq.s32.totalorder %s27, 0
      %p301 = por %p299, %p300
      %p302 = scmp.ne.s32.totalorder %s294, %s296
      %p303 = scmp.eq.s32.totalorder %s32, 5
      %p304 = por %p302, %p303
      %p305 = scmp.ne.s32.totalorder %s296, %s297
      %p306 = scmp.eq.s32.totalorder %s32, 0
      %p307 = por %p305, %p306
      %p308 = scmp.ne.s32.totalorder %s296, %s297
      %p309 = scmp.eq.s32.totalorder %s33, 5
      %p310 = por %p308, %p309
      %p312 = scmp.ne.s32.totalorder %s297, %s311
      %p313 = scmp.eq.s32.totalorder %s33, 0
      %p314 = por %p312, %p313
      %s315 = ssub.s32 %s34, %s46
      %s316 = ssub.s32 %s35, %s42
      %s317 = sor.u32 %s315, %s316
      %p318 = scmp.eq.s32.totalorder %s317, 0
      %s320 = sadd.s32 %s319, 1
      %s321 = scalar_select %p318, %s319, %s320
      %p324 = pneg %p318
      %p325 = scmp.eq.s32.totalorder %s27, 5
      %p326 = por %p324, %p325
      %p327 = scmp.ne.s32.totalorder %s319, %s322
      %p328 = scmp.eq.s32.totalorder %s27, 0
      %p329 = por %p327, %p328
      %p330 = scmp.ne.s32.totalorder %s319, %s322
      %p331 = scmp.eq.s32.totalorder %s32, 5
      %p332 = por %p330, %p331
      %p333 = scmp.ne.s32.totalorder %s322, %s323
      %p334 = scmp.eq.s32.totalorder %s32, 0
      %p335 = por %p333, %p334
      %p336 = scmp.ne.s32.totalorder %s322, %s323
      %p337 = scmp.eq.s32.totalorder %s33, 5
      %p338 = por %p336, %p337
      %p340 = scmp.ne.s32.totalorder %s323, %s339
      %p341 = scmp.eq.s32.totalorder %s33, 0
      %p342 = por %p340, %p341
      %p343 = scmp.le.s32.totalorder 1, %s27
      %p344 = scmp.lt.s32.totalorder %s27, 7
      %p345 = pnand %p343, %p344
      %p346 = pneg %p345
      // Predicated region
      $region9: #{tpu_custom_call.1} parent=5 // pred_check
        _
      $region10: #{tpu_custom_call.1} parent=5 // pred_check_branch
        %348 = sbr.rel (%p345) target = $region12
      $region11: #{tpu_custom_call.1} parent=5 // pred_region
        %s349 = ssub.s32 %s27, 1
        // Predicated region
        $region13: #{tpu_custom_call.1} parent=11 // pred_check
          %p350 = pneg %p160
        $region14: #{tpu_custom_call.1} parent=11 // pred_check_branch
          %352 = sbr.rel (%p350) target = $region16
        $region15: #{tpu_custom_call.1} parent=11 // pred_region
          _
        $region16: #{tpu_custom_call.1} parent=11 // pred_fallthru
          _
        // Predicated region
        $region17: #{tpu_custom_call.1} parent=11 // pred_check
          %p353 = pneg %p181
        $region18: #{tpu_custom_call.1} parent=11 // pred_check_branch
          %355 = sbr.rel (%p353) target = $region20
        $region19: #{tpu_custom_call.1} parent=11 // pred_region
          _
        $region20: #{tpu_custom_call.1} parent=11 // pred_fallthru
          _
        // Predicated region
        $region21: #{tpu_custom_call.1} parent=11 // pred_check
          %p356 = pneg %p202
        $region22: #{tpu_custom_call.1} parent=11 // pred_check_branch
          %358 = sbr.rel (%p356) target = $region24
        $region23: #{tpu_custom_call.1} parent=11 // pred_region
          %s360 = ssub.s32 2048, 2048
          %361 = vsyncadd [#allocation9], %s360
          %s362 = sshll.u32 [#allocation8], 4
          %s363 = int_to_ptr.vmem [resolvable:$true] %s362
          %368 = dma.hbm_to_vmem [thread:$0]  %s5, 2048, %s363, [#allocation9], 128, 128, 8
        $region24: #{tpu_custom_call.1} parent=11 // pred_fallthru
          _
        // Predicated region
        $region25: #{tpu_custom_call.1} parent=11 // pred_check
          %p369 = pneg %p223
        $region26: #{tpu_custom_call.1} parent=11 // pred_check_branch
          %371 = sbr.rel (%p369) target = $region28
        $region27: #{tpu_custom_call.1} parent=11 // pred_region
          _
        $region28: #{tpu_custom_call.1} parent=11 // pred_fallthru
          _
        // Predicated region
        $region29: #{tpu_custom_call.1} parent=11 // pred_check
          %p372 = pneg %p244
        $region30: #{tpu_custom_call.1} parent=11 // pred_check_branch
          %374 = sbr.rel (%p372) target = $region32
        $region31: #{tpu_custom_call.1} parent=11 // pred_region
          _
        $region32: #{tpu_custom_call.1} parent=11 // pred_fallthru
          _
        // Predicated region
        $region33: #{tpu_custom_call.1} parent=11 // pred_check
          %p375 = pneg %p265
        $region34: #{tpu_custom_call.1} parent=11 // pred_check_branch
          %377 = sbr.rel (%p375) target = $region36
        $region35: #{tpu_custom_call.1} parent=11 // pred_region
          _
        $region36: #{tpu_custom_call.1} parent=11 // pred_fallthru
          _
        // Predicated region
        $region37: #{tpu_custom_call.1} parent=11 // pred_check
          %p378 = pneg %p286
        $region38: #{tpu_custom_call.1} parent=11 // pred_check_branch
          %380 = sbr.rel (%p378) target = $region40
        $region39: #{tpu_custom_call.1} parent=11 // pred_region
          %s382 = ssub.s32 1024, 1024
          %383 = vsyncadd [#allocation9], %s382
          %s384 = sshll.u32 [#allocation10], 4
          %s385 = int_to_ptr.vmem [resolvable:$true] %s384
          %390 = dma.hbm_to_vmem [thread:$0]  %s9, 1024, %s385, [#allocation9], 64, 64, 4
        $region40: #{tpu_custom_call.1} parent=11 // pred_fallthru
          _
        // Predicated region
        $region41: #{tpu_custom_call.1} parent=11 // pred_check
          %p391 = pneg %p307
        $region42: #{tpu_custom_call.1} parent=11 // pred_check_branch
          %393 = sbr.rel (%p391) target = $region44
        $region43: #{tpu_custom_call.1} parent=11 // pred_region
          _
        $region44: #{tpu_custom_call.1} parent=11 // pred_fallthru
          _
      $region12: #{tpu_custom_call.1} parent=5 // pred_fallthru
        _
      %p394 = scmp.lt.s32.totalorder %s27, 6
      // Predicated region
      $region45: #{tpu_custom_call.1} parent=5 // pred_check
        %p395 = pneg %p394
      $region46: #{tpu_custom_call.1} parent=5 // pred_check_branch
        %397 = sbr.rel (%p395) target = $region48
      $region47: #{tpu_custom_call.1} parent=5 // pred_region
        // Predicated region
        $region49: #{tpu_custom_call.1} parent=47 // pred_check
          %p398 = pneg %p69
        $region50: #{tpu_custom_call.1} parent=47 // pred_check_branch
          %400 = sbr.rel (%p398) target = $region52
        $region51: #{tpu_custom_call.1} parent=47 // pred_region
          %s401 = sand.u32 %s59, 1
          %s402 = scalar_lea.sflag [#allocation3], %s401
          %s403 = sand.u32 %s59, 1
          %s404 = smul.addr %s403, 8
          %s405 = scalar_lea.vmem [#allocation2], %s404
          %s406 = smul.u32 %s35, 2
          %s407 = ssub.s32 %s406, 1
          %p408 = scmp.gt.s32.totalorder %s407, 0
          %s409 = scalar_select %p408, %s407, 0
          %s410 = smul.u32 2, %s409
          %s412 = ssub.s32 128, 128
          %413 = vsyncadd %s402, %s412
          %s414 = smul.addr %s34, 12
          %s415 = sadd.s32 %s410, %s414
          %s416 = smul.addr %s415, 64
          %s417 = scalar_lea.hbm %s0, %s416
          %s418 = sshll.u32 %s405, 4
          %s419 = int_to_ptr.vmem [resolvable:$true] %s418
          %424 = dma.hbm_to_vmem [thread:$0]  %s417, 128, %s419, %s402, 64, 64, 4
        $region52: #{tpu_custom_call.1} parent=47 // pred_fallthru
          _
        // Predicated region
        $region53: #{tpu_custom_call.1} parent=47 // pred_check
          %p425 = pneg %p97
        $region54: #{tpu_custom_call.1} parent=47 // pred_check_branch
          %427 = sbr.rel (%p425) target = $region56
        $region55: #{tpu_custom_call.1} parent=47 // pred_region
          %s428 = sand.u32 %s27, 1
          %s429 = scalar_lea.sflag [#allocation6], %s428
          %s430 = sand.u32 %s87, 1
          %s431 = smul.addr %s430, 16
          %s432 = scalar_lea.vmem [#allocation5], %s431
          %s433 = smul.u32 4, %s35
          %s435 = ssub.s32 256, 256
          %436 = vsyncadd %s429, %s435
          %s437 = smul.addr %s34, 12
          %s438 = sadd.s32 %s433, %s437
          %s439 = smul.addr %s438, 64
          %s440 = scalar_lea.hbm %s1, %s439
          %s441 = sshll.u32 %s432, 4
          %s442 = int_to_ptr.vmem [resolvable:$true] %s441
          %447 = dma.hbm_to_vmem [thread:$0]  %s440, 256, %s442, %s429, 64, 64, 4
        $region56: #{tpu_custom_call.1} parent=47 // pred_fallthru
          _
        // Predicated region
        $region57: #{tpu_custom_call.1} parent=47 // pred_check
          %p448 = pneg %p133
        $region58: #{tpu_custom_call.1} parent=47 // pred_check_branch
          %450 = sbr.rel (%p448) target = $region60
        $region59: #{tpu_custom_call.1} parent=47 // pred_region
          %s451 = sand.u32 %s27, 1
          %s452 = scalar_lea.sflag [#allocation6], %s451
          %s453 = sand.u32 %s123, 1
          %s454 = smul.addr %s453, 8
          %s455 = scalar_lea.vmem [#allocation7], %s454
          %s456 = sadd.s32 %s35, 1
          %s457 = smul.u32 %s456, 2
          %p458 = scmp.lt.s32.totalorder %s457, 5
          %s459 = scalar_select %p458, %s457, 5
          %s460 = smul.u32 2, %s459
          %s462 = ssub.s32 128, 128
          %463 = vsyncadd %s452, %s462
          %s464 = smul.addr %s34, 12
          %s465 = sadd.s32 %s460, %s464
          %s466 = smul.addr %s465, 64
          %s467 = scalar_lea.hbm %s2, %s466
          %s468 = sshll.u32 %s455, 4
          %s469 = int_to_ptr.vmem [resolvable:$true] %s468
          %474 = dma.hbm_to_vmem [thread:$0]  %s467, 128, %s469, %s452, 64, 64, 4
        $region60: #{tpu_custom_call.1} parent=47 // pred_fallthru
          _
      $region48: #{tpu_custom_call.1} parent=5 // pred_fallthru
        _
      %p475 = scmp.le.s32.totalorder 1, %s27
      %p476 = scmp.lt.s32.totalorder %s27, 7
      %p477 = pnand %p475, %p476
      %p478 = pneg %p477
      // Predicated region
      $region61: #{tpu_custom_call.1} parent=5 // pred_check
        _
      $region62: #{tpu_custom_call.1} parent=5 // pred_check_branch
        %480 = sbr.rel (%p477) target = $region64
      $region63: #{tpu_custom_call.1} parent=5 // pred_region
        %s481 = ssub.s32 %s27, 1
        %s482 = sand.u32 %s62, 1
        %s483 = scalar_lea.sflag [#allocation3], %s482
        %s484 = sand.u32 %s62, 1
        %s485 = smul.addr %s484, 8
        %s486 = scalar_lea.vmem [#allocation2], %s485
        // Predicated region
        $region65: #{tpu_custom_call.1} parent=63 // pred_check
          %p487 = pneg %p75
        $region66: #{tpu_custom_call.1} parent=63 // pred_check_branch
          %489 = sbr.rel (%p487) target = $region68
        $region67: #{tpu_custom_call.1} parent=63 // pred_region
          %490 = dma.done %s483, 128
        $region68: #{tpu_custom_call.1} parent=63 // pred_fallthru
          _
        %s491 = sand.u32 %s32, 1
        %s492 = scalar_lea.sflag [#allocation6], %s491
        %s493 = sand.u32 %s90, 1
        %s494 = smul.addr %s493, 16
        %s495 = scalar_lea.vmem [#allocation5], %s494
        // Predicated region
        $region69: #{tpu_custom_call.1} parent=63 // pred_check
          %p496 = pneg %p103
        $region70: #{tpu_custom_call.1} parent=63 // pred_check_branch
          %498 = sbr.rel (%p496) target = $region72
        $region71: #{tpu_custom_call.1} parent=63 // pred_region
          %499 = dma.done %s492, 256
        $region72: #{tpu_custom_call.1} parent=63 // pred_fallthru
          _
        %s500 = sand.u32 %s32, 1
        %s501 = scalar_lea.sflag [#allocation6], %s500
        %s502 = sand.u32 %s126, 1
        %s503 = smul.addr %s502, 8
        %s504 = scalar_lea.vmem [#allocation7], %s503
        // Predicated region
        $region73: #{tpu_custom_call.1} parent=63 // pred_check
          %p505 = pneg %p139
        $region74: #{tpu_custom_call.1} parent=63 // pred_check_branch
          %507 = sbr.rel (%p505) target = $region76
        $region75: #{tpu_custom_call.1} parent=63 // pred_region
          %508 = dma.done %s501, 128
        $region76: #{tpu_custom_call.1} parent=63 // pred_fallthru
          _
        // Predicated region
        $region77: #{tpu_custom_call.1} parent=63 // pred_check
          %p509 = pneg %p202
        $region78: #{tpu_custom_call.1} parent=63 // pred_check_branch
          %511 = sbr.rel (%p509) target = $region80
        $region79: #{tpu_custom_call.1} parent=63 // pred_region
          %512 = dma.done [#allocation9], 2048
        $region80: #{tpu_custom_call.1} parent=63 // pred_fallthru
          _
        // Predicated region
        $region81: #{tpu_custom_call.1} parent=63 // pred_check
          %p513 = pneg %p286
        $region82: #{tpu_custom_call.1} parent=63 // pred_check_branch
          %515 = sbr.rel (%p513) target = $region84
        $region83: #{tpu_custom_call.1} parent=63 // pred_region
          %516 = dma.done [#allocation9], 1024
        $region84: #{tpu_custom_call.1} parent=63 // pred_fallthru
          _
        %s517 = sand.u32 %s62, 1
        %s518 = scalar_lea.sflag [#allocation3], %s517
        %s519 = sand.u32 %s62, 1
        %s520 = smul.addr %s519, 8
        %s521 = scalar_lea.vmem [#allocation2], %s520
        %p522 = pneg %p75
        %p523 = pneg %p72
        %s524 = sand.u32 %s32, 1
        %s525 = scalar_lea.sflag [#allocation6], %s524
        %s526 = sand.u32 %s90, 1
        %s527 = smul.addr %s526, 16
        %s528 = scalar_lea.vmem [#allocation5], %s527
        %p529 = pneg %p103
        %p530 = pneg %p100
        %s531 = sand.u32 %s32, 1
        %s532 = scalar_lea.sflag [#allocation6], %s531
        %s533 = sand.u32 %s126, 1
        %s534 = smul.addr %s533, 8
        %s535 = scalar_lea.vmem [#allocation7], %s534
        %p536 = pneg %p139
        %p537 = pneg %p136
        %p538 = pneg %p160
        %p539 = pneg %p157
        %p540 = pneg %p181
        %p541 = pneg %p178
        %p542 = pneg %p202
        %p543 = pneg %p199
        %p544 = pneg %p223
        %p545 = pneg %p220
        %p546 = pneg %p244
        %p547 = pneg %p241
        %p548 = pneg %p265
        %p549 = pneg %p262
        %p550 = pneg %p286
        %p551 = pneg %p283
        %p552 = pneg %p307
        %p553 = pneg %p304
        %p554 = pneg %p335
        %p555 = pneg %p332
        %s556 = sand.u32 %s322, 1
        %s557 = scalar_lea.sflag [#allocation4], %s556
        %s558 = sand.u32 %s322, 1
        %s559 = smul.addr %s558, 16
        %s560 = scalar_lea.vmem [#allocation11], %s559
        %s561 = smul.u32 %s37, 2
        %s562 = ssub.s32 %s561, 1
        %p563 = scmp.gt.s32.totalorder %s562, 0
        %s564 = scalar_select %p563, %s562, 0
        %s565 = smul.u32 2, %s564
        %s566 = smul.u32 4, %s37
        %s567 = sadd.s32 %s37, 1
        %s568 = smul.u32 %s567, 2
        %p569 = scmp.lt.s32.totalorder %s568, 5
        %s570 = scalar_select %p569, %s568, 5
        %s571 = smul.u32 2, %s570
        %s572 = smul.u32 4, %s37
        %v574 = vld [vmem:[%s486] sm:$0xf]
        %v575 = vld [vmem:[%s486 + $0x4] sm:$0xf]
        %v576 = vld [vmem:[%s495] sm:$0xf]
        %v577 = vld [vmem:[%s495 + $0x4] sm:$0xf]
        %v578 = vld [vmem:[%s495 + $0x8] sm:$0xf]
        %v579 = vld [vmem:[%s495 + $0xc] sm:$0xf]
        %v580 = vld [vmem:[%s504] sm:$0xf]
        %v581 = vld [vmem:[%s504 + $0x4] sm:$0xf]
        %v584 = vunpack.c.l.b16 %v574
        %v585 = vunpack.c.l.b16 %v575
        %v586 = vpack.c.b16 %v585, %v584
        %v592 = vunpack.c.l.b16 %v576
        %v593 = vunpack.c.l.b16 %v577
        %v594 = vunpack.c.l.b16 %v578
        %v595 = vunpack.c.l.b16 %v579
        %v596 = vpack.c.b16 %v593, %v592
        %v597 = vpack.c.b16 %v595, %v594
        %v602 = vunpack.c.l.b16 %v580
        %v603 = vunpack.c.l.b16 %v581
        %v604 = vpack.c.b16 %v603, %v602
        %v606 = vunpack.c.l.bf16 %v586
        %v607 = vunpack.c.h.bf16 %v586
        %v608 = vunpack.c.l.bf16 %v596
        %v609 = vunpack.c.h.bf16 %v596
        %v610 = vunpack.c.l.bf16 %v597
        %v611 = vunpack.c.h.bf16 %v597
        %v612 = vunpack.c.l.bf16 %v604
        %v613 = vunpack.c.h.bf16 %v604
        %614 = vadd.xlane.f32.xlu0 %v606
        %v615 = vpop.xlane.xlu0 %614
        %616 = vadd.xlane.f32.xlu0 %v607
        %v617 = vpop.xlane.xlu0 %616
        %618 = vadd.xlane.f32.xlu0 %v608
        %v619 = vpop.xlane.xlu0 %618
        %620 = vadd.xlane.f32.xlu0 %v609
        %v621 = vpop.xlane.xlu0 %620
        %622 = vadd.xlane.f32.xlu0 %v610
        %v623 = vpop.xlane.xlu0 %622
        %624 = vadd.xlane.f32.xlu0 %v611
        %v625 = vpop.xlane.xlu0 %624
        %626 = vadd.xlane.f32.xlu0 %v612
        %v627 = vpop.xlane.xlu0 %626
        %628 = vadd.xlane.f32.xlu0 %v613
        %v629 = vpop.xlane.xlu0 %628
        %v630 = vrcp.pop 128.0
        %v631 = vmul.f32 %v615, %v630
        %v632 = vmul.f32 %v617, %v630
        %v633 = vmul.f32 %v619, %v630
        %v634 = vmul.f32 %v621, %v630
        %v635 = vmul.f32 %v623, %v630
        %v636 = vmul.f32 %v625, %v630
        %v637 = vmul.f32 %v627, %v630
        %v638 = vmul.f32 %v629, %v630
        %v639 = vsub.f32 %v606, %v631
        %v640 = vsub.f32 %v607, %v632
        %v641 = vsub.f32 %v608, %v633
        %v642 = vsub.f32 %v609, %v634
        %v643 = vsub.f32 %v610, %v635
        %v644 = vsub.f32 %v611, %v636
        %v645 = vsub.f32 %v612, %v637
        %v646 = vsub.f32 %v613, %v638
        %v647 = vmul.f32 %v639, %v639
        %v648 = vmul.f32 %v640, %v640
        %v649 = vmul.f32 %v641, %v641
        %v650 = vmul.f32 %v642, %v642
        %v651 = vmul.f32 %v643, %v643
        %v652 = vmul.f32 %v644, %v644
        %v653 = vmul.f32 %v645, %v645
        %v654 = vmul.f32 %v646, %v646
        %655 = vadd.xlane.f32.xlu0 %v647
        %v656 = vpop.xlane.xlu0 %655
        %657 = vadd.xlane.f32.xlu0 %v648
        %v658 = vpop.xlane.xlu0 %657
        %659 = vadd.xlane.f32.xlu0 %v649
        %v660 = vpop.xlane.xlu0 %659
        %661 = vadd.xlane.f32.xlu0 %v650
        %v662 = vpop.xlane.xlu0 %661
        %663 = vadd.xlane.f32.xlu0 %v651
        %v664 = vpop.xlane.xlu0 %663
        %665 = vadd.xlane.f32.xlu0 %v652
        %v666 = vpop.xlane.xlu0 %665
        %667 = vadd.xlane.f32.xlu0 %v653
        %v668 = vpop.xlane.xlu0 %667
        %669 = vadd.xlane.f32.xlu0 %v654
        %v670 = vpop.xlane.xlu0 %669
        %v671 = vmul.f32 %v656, %v630
        %v672 = vmul.f32 %v658, %v630
        %v673 = vmul.f32 %v660, %v630
        %v674 = vmul.f32 %v662, %v630
        %v675 = vmul.f32 %v664, %v630
        %v676 = vmul.f32 %v666, %v630
        %v677 = vmul.f32 %v668, %v630
        %v678 = vmul.f32 %v670, %v630
        %v679 = vadd.f32 %v671, 1e-05
        %v680 = vadd.f32 %v672, 1e-05
        %v681 = vadd.f32 %v673, 1e-05
        %v682 = vadd.f32 %v674, 1e-05
        %v683 = vadd.f32 %v675, 1e-05
        %v684 = vadd.f32 %v676, 1e-05
        %v685 = vadd.f32 %v677, 1e-05
        %v686 = vadd.f32 %v678, 1e-05
        %v687 = vrsqrt.pop %v679
        %v688 = vrsqrt.pop %v680
        %v689 = vrsqrt.pop %v681
        %v690 = vrsqrt.pop %v682
        %v691 = vrsqrt.pop %v683
        %v692 = vrsqrt.pop %v684
        %v693 = vrsqrt.pop %v685
        %v694 = vrsqrt.pop %v686
        %v695 = vmul.f32 %v639, %v687
        %v696 = vmul.f32 %v640, %v688
        %v697 = vmul.f32 %v641, %v689
        %v698 = vmul.f32 %v642, %v690
        %v699 = vmul.f32 %v643, %v691
        %v700 = vmul.f32 %v644, %v692
        %v701 = vmul.f32 %v645, %v693
        %v702 = vmul.f32 %v646, %v694
        %v703 = vld [vmem:[%s3] sm:$0x1]
        %v705 = vlaneseq
        %v706 = vshrl.u32 %v705, 7
        %v707 = vsub.s32 0, %v706
        %v708 = vrot.slane %v703, %v707
        %v710 = vmul.f32 %v695, %v708
        %v711 = vmul.f32 %v696, %v708
        %v712 = vmul.f32 %v697, %v708
        %v713 = vmul.f32 %v698, %v708
        %v714 = vmul.f32 %v699, %v708
        %v715 = vmul.f32 %v700, %v708
        %v716 = vmul.f32 %v701, %v708
        %v717 = vmul.f32 %v702, %v708
        %v718 = vld [vmem:[%s4] sm:$0x1]
        %v720 = vlaneseq
        %v721 = vshrl.u32 %v720, 7
        %v722 = vsub.s32 0, %v721
        %v723 = vrot.slane %v718, %v722
        %v725 = vadd.f32 %v710, %v723
        %v726 = vadd.f32 %v711, %v723
        %v727 = vadd.f32 %v712, %v723
        %v728 = vadd.f32 %v713, %v723
        %v729 = vadd.f32 %v714, %v723
        %v730 = vadd.f32 %v715, %v723
        %v731 = vadd.f32 %v716, %v723
        %v732 = vadd.f32 %v717, %v723
        %v733 = vpack.c.bf16 %v726, %v725
        %v734 = vpack.c.bf16 %v728, %v727
        %v735 = vpack.c.bf16 %v730, %v729
        %v736 = vpack.c.bf16 %v732, %v731
        %v737 = vld [vmem:[#allocation8] sm:$0xff]
        %v738 = vld [vmem:[#allocation8 + $0x8] sm:$0xff]
        %v739 = vld [vmem:[#allocation8 + $0x10] sm:$0xff]
        %v740 = vld [vmem:[#allocation8 + $0x18] sm:$0xff]
        %v741 = vld [vmem:[#allocation8 + $0x20] sm:$0xff]
        %v742 = vld [vmem:[#allocation8 + $0x28] sm:$0xff]
        %v743 = vld [vmem:[#allocation8 + $0x30] sm:$0xff]
        %v744 = vld [vmem:[#allocation8 + $0x38] sm:$0xff]
        %v745 = vld [vmem:[#allocation8 + $0x40] sm:$0xff]
        %v746 = vld [vmem:[#allocation8 + $0x48] sm:$0xff]
        %v747 = vld [vmem:[#allocation8 + $0x50] sm:$0xff]
        %v748 = vld [vmem:[#allocation8 + $0x58] sm:$0xff]
        %v749 = vld [vmem:[#allocation8 + $0x60] sm:$0xff]
        %v750 = vld [vmem:[#allocation8 + $0x68] sm:$0xff]
        %v751 = vld [vmem:[#allocation8 + $0x70] sm:$0xff]
        %v752 = vld [vmem:[#allocation8 + $0x78] sm:$0xff]
        %v753 = vld [vmem:[%s6] sm:$0x3]
        %v755 = vlaneseq
        %v756 = vshrl.u32 %v755, 7
        %v757 = vsub.s32 0, %v756
        %v758 = vrot.slane %v753, %v757
        %v759 = vlaneseq
        %v760 = vshrl.u32 %v759, 7
        %v761 = vsub.s32 1, %v760
        %v762 = vrot.slane %v753, %v761
        %v781 = vunpack.c.l.b16 %v737
        %v782 = vunpack.c.h.b16 %v737
        %v783 = vunpack.c.l.b16 %v738
        %v784 = vunpack.c.h.b16 %v738
        %v785 = vunpack.c.l.b16 %v739
        %v786 = vunpack.c.h.b16 %v739
        %v787 = vunpack.c.l.b16 %v740
        %v788 = vunpack.c.h.b16 %v740
        %v789 = vunpack.c.l.b16 %v741
        %v790 = vunpack.c.h.b16 %v741
        %v791 = vunpack.c.l.b16 %v742
        %v792 = vunpack.c.h.b16 %v742
        %v793 = vunpack.c.l.b16 %v743
        %v794 = vunpack.c.h.b16 %v743
        %v795 = vunpack.c.l.b16 %v744
        %v796 = vunpack.c.h.b16 %v744
        %v797 = vunpack.c.l.b16 %v745
        %v798 = vunpack.c.h.b16 %v745
        %v799 = vunpack.c.l.b16 %v746
        %v800 = vunpack.c.h.b16 %v746
        %v801 = vunpack.c.l.b16 %v747
        %v802 = vunpack.c.h.b16 %v747
        %v803 = vunpack.c.l.b16 %v748
        %v804 = vunpack.c.h.b16 %v748
        %v805 = vunpack.c.l.b16 %v749
        %v806 = vunpack.c.h.b16 %v749
        %v807 = vunpack.c.l.b16 %v750
        %v808 = vunpack.c.h.b16 %v750
        %v809 = vunpack.c.l.b16 %v751
        %v810 = vunpack.c.h.b16 %v751
        %v811 = vunpack.c.l.b16 %v752
        %v812 = vunpack.c.h.b16 %v752
        %v813 = vpack.c.b16 %v783, %v781
        %v814 = vpack.c.b16 %v784, %v782
        %v815 = vpack.c.b16 %v787, %v785
        %v816 = vpack.c.b16 %v788, %v786
        %v817 = vpack.c.b16 %v791, %v789
        %v818 = vpack.c.b16 %v792, %v790
        %v819 = vpack.c.b16 %v795, %v793
        %v820 = vpack.c.b16 %v796, %v794
        %v821 = vpack.c.b16 %v799, %v797
        %v822 = vpack.c.b16 %v800, %v798
        %v823 = vpack.c.b16 %v803, %v801
        %v824 = vpack.c.b16 %v804, %v802
        %v825 = vpack.c.b16 %v807, %v805
        %v826 = vpack.c.b16 %v808, %v806
        %v827 = vpack.c.b16 %v811, %v809
        %v828 = vpack.c.b16 %v812, %v810
        %845 = vmatprep.subr.bf16.mxu0 %v828
        %846 = vmatpush1.bf16.msra.mxu0 %v827
        %847 = vmatprep.subr.bf16.mxu0 %v826
        %848 = vmatpush1.bf16.msra.mxu0 %v825
        %849 = vmatprep.subr.bf16.mxu0 %v824
        %850 = vmatpush1.bf16.msra.mxu0 %v823
        %851 = vmatprep.subr.bf16.mxu0 %v822
        %852 = vmatpush1.bf16.msra.mxu0 %v821
        %853 = vmatprep.subr.bf16.mxu0 %v820
        %854 = vmatpush1.bf16.msra.mxu0 %v819
        %855 = vmatprep.subr.bf16.mxu0 %v818
        %856 = vmatpush1.bf16.msra.mxu0 %v817
        %857 = vmatprep.subr.bf16.mxu0 %v816
        %858 = vmatpush1.bf16.msra.mxu0 %v815
        %859 = vmatprep.subr.bf16.mxu0 %v814
        %860 = vmatpush1.bf16.msra.mxu0 %v813
        %861 = vmatprep.subr.bf16.mxu0 0
        %862 = vmatpush2.bf16.msra.mxu0 0
        %863 = vmatprep.subr.bf16.mxu0 0
        %864 = vmatpush2.bf16.msra.mxu0 0
        %865 = vmatprep.subr.bf16.mxu0 0
        %866 = vmatpush2.bf16.msra.mxu0 0
        %867 = vmatprep.subr.bf16.mxu0 0
        %868 = vmatpush2.bf16.msra.mxu0 0
        %869 = vmatprep.subr.bf16.mxu0 0
        %870 = vmatpush2.bf16.msra.mxu0 0
        %871 = vmatprep.subr.bf16.mxu0 0
        %872 = vmatpush2.bf16.msra.mxu0 0
        %873 = vmatprep.subr.bf16.mxu0 0
        %874 = vmatpush2.bf16.msra.mxu0 0
        %875 = vmatprep.subr.bf16.mxu0 0
        %876 = vmatpush2.bf16.msra.mxu0 0
        %877 = vmatprep.mubr.bf16.mxu0 0
        %878 = vmatmul.mubr.bf16.gmra.mxu0 %v733
        %v879 = vpop.f32.mrf.mxu0
        %v880 = vpop.f32.mrf.mxu0
        %v881 = vpop.f32.mrf.mxu0
        %v882 = vadd.f32 %v758, %v881
        %v883 = vpop.f32.mrf.mxu0
        %v884 = vadd.f32 %v762, %v883
        %885 = vmatprep.mubr.bf16.mxu0 0
        %886 = vmatmul.mubr.bf16.gmra.mxu0 %v734
        %v887 = vpop.f32.mrf.mxu0
        %v888 = vadd.f32 %v758, %v887
        %v889 = vpop.f32.mrf.mxu0
        %v890 = vadd.f32 %v762, %v889
        %v891 = vpop.f32.mrf.mxu0
        %v892 = vadd.f32 %v758, %v891
        %v893 = vpop.f32.mrf.mxu0
        %v894 = vadd.f32 %v762, %v893
        %895 = vmatprep.mubr.bf16.mxu0 0
        %896 = vmatmul.mubr.bf16.gmra.mxu0 %v735
        %v897 = vpop.f32.mrf.mxu0
        %v898 = vadd.f32 %v758, %v897
        %v899 = vpop.f32.mrf.mxu0
        %v900 = vadd.f32 %v762, %v899
        %v901 = vpop.f32.mrf.mxu0
        %v902 = vadd.f32 %v758, %v901
        %v903 = vpop.f32.mrf.mxu0
        %v904 = vadd.f32 %v762, %v903
        %905 = vmatprep.mubr.bf16.mxu0 0
        %906 = vmatmul.mubr.bf16.gmra.mxu0 %v736
        %v907 = vpop.f32.mrf.mxu0
        %v908 = vadd.f32 %v758, %v907
        %v909 = vpop.f32.mrf.mxu0
        %v910 = vadd.f32 %v762, %v909
        %v911 = vpop.f32.mrf.mxu0
        %v912 = vpop.f32.mrf.mxu0
        %913 = vdwg.mxu0
        %v914 = vsub.f32 0.0, %v884
        %v915 = vsub.f32 0.0, %v890
        %v916 = vsub.f32 0.0, %v894
        %v917 = vsub.f32 0.0, %v900
        %v918 = vsub.f32 0.0, %v904
        %v919 = vsub.f32 0.0, %v910
        %v920 = vmul.f32 %v914, 1.442695
        %v921 = vpow.pop %v920
        %v922 = vmul.f32 %v915, 1.442695
        %v923 = vpow.pop %v922
        %v924 = vmul.f32 %v916, 1.442695
        %v925 = vpow.pop %v924
        %v926 = vmul.f32 %v917, 1.442695
        %v927 = vpow.pop %v926
        %v928 = vmul.f32 %v918, 1.442695
        %v929 = vpow.pop %v928
        %v930 = vmul.f32 %v919, 1.442695
        %v931 = vpow.pop %v930
        %v932 = vadd.f32 %v921, 1.0
        %v933 = vadd.f32 %v923, 1.0
        %v934 = vadd.f32 %v925, 1.0
        %v935 = vadd.f32 %v927, 1.0
        %v936 = vadd.f32 %v929, 1.0
        %v937 = vadd.f32 %v931, 1.0
        %v938 = vrcp.pop %v932
        %v939 = vrcp.pop %v933
        %v940 = vrcp.pop %v934
        %v941 = vrcp.pop %v935
        %v942 = vrcp.pop %v936
        %v943 = vrcp.pop %v937
        %v944 = vmul.f32 %v882, %v938
        %v945 = vmul.f32 %v888, %v939
        %v946 = vmul.f32 %v892, %v940
        %v947 = vmul.f32 %v898, %v941
        %v948 = vmul.f32 %v902, %v942
        %v949 = vmul.f32 %v908, %v943
        %v950 = vlaneseq
        %v951 = vshrl.u32 %v950, 7
        %v952 = vadd.s32 %v951, 8
        %v953 = vadd.s32 %v951, 16
        %v954 = vadd.s32 %v951, 24
        %v955 = vadd.s32 %v951, 32
        %v956 = vadd.s32 %v951, 40
        %v957 = vadd.s32 %v951, 48
        %s958 = smul.u32 %s37, 32
        %v959 = vstv %s958
        %v960 = vadd.s32 %v952, %v959
        %v961 = vadd.s32 %v953, %v959
        %v962 = vadd.s32 %v954, %v959
        %v963 = vadd.s32 %v955, %v959
        %v964 = vadd.s32 %v956, %v959
        %v965 = vadd.s32 %v957, %v959
        %v966 = vsub.s32 %v960, 16
        %v967 = vsub.s32 %v961, 16
        %v968 = vsub.s32 %v962, 16
        %v969 = vsub.s32 %v963, 16
        %v970 = vsub.s32 %v964, 16
        %v971 = vsub.s32 %v965, 16
        %vm972 = vcmp.ge.s32.totalorder %v966, 0
        %vm973 = vcmp.ge.s32.totalorder %v967, 0
        %vm974 = vcmp.ge.s32.totalorder %v968, 0
        %vm975 = vcmp.ge.s32.totalorder %v969, 0
        %vm976 = vcmp.ge.s32.totalorder %v970, 0
        %vm977 = vcmp.ge.s32.totalorder %v971, 0
        %vm978 = vcmp.lt.s32.totalorder %v966, 80
        %vm979 = vcmp.lt.s32.totalorder %v967, 80
        %vm980 = vcmp.lt.s32.totalorder %v968, 80
        %vm981 = vcmp.lt.s32.totalorder %v969, 80
        %vm982 = vcmp.lt.s32.totalorder %v970, 80
        %vm983 = vcmp.lt.s32.totalorder %v971, 80
        %vm984 = vmand %vm972, %vm978
        %vm985 = vmand %vm973, %vm979
        %vm986 = vmand %vm974, %vm980
        %vm987 = vmand %vm975, %vm981
        %vm988 = vmand %vm976, %vm982
        %vm989 = vmand %vm977, %vm983
        %v990 = vsel %vm984, 1, 0
        %v991 = vsel %vm985, 1, 0
        %v992 = vsel %vm986, 1, 0
        %v993 = vsel %vm987, 1, 0
        %v994 = vsel %vm988, 1, 0
        %v995 = vsel %vm989, 1, 0
        %v996 = vcvt.s32.f32 %v990
        %v997 = vcvt.s32.f32 %v991
        %v998 = vcvt.s32.f32 %v992
        %v999 = vcvt.s32.f32 %v993
        %v1000 = vcvt.s32.f32 %v994
        %v1001 = vcvt.s32.f32 %v995
        %v1002 = vmul.f32 %v944, %v996
        %v1003 = vmul.f32 %v945, %v997
        %v1004 = vmul.f32 %v946, %v998
        %v1005 = vmul.f32 %v947, %v999
        %v1006 = vmul.f32 %v948, %v1000
        %v1007 = vmul.f32 %v949, %v1001
        %v1008 = vld [vmem:[%s7] sm:$0x7f]
        %v1009 = vlaneseq
        %v1010 = vshrl.u32 %v1009, 7
        %v1011 = vsub.s32 0, %v1010
        %v1012 = vrot.slane %v1008, %v1011
        %v1013 = vmul.f32 %v1002, %v1012
        %v1014 = vmul.f32 %v1003, %v1012
        %v1015 = vmul.f32 %v1004, %v1012
        %v1016 = vmul.f32 %v1005, %v1012
        %v1017 = vmul.f32 %v1006, %v1012
        %v1018 = vadd.f32 %v1013, 0.0
        %v1019 = vadd.f32 %v1014, 0.0
        %v1020 = vadd.f32 %v1015, 0.0
        %v1021 = vadd.f32 %v1016, 0.0
        %v1022 = vadd.f32 %v1017, 0.0
        %v1023 = vlaneseq
        %v1024 = vshrl.u32 %v1023, 7
        %v1025 = vsub.s32 1, %v1024
        %v1026 = vrot.slane %v1008, %v1025
        %v1027 = vmul.f32 %v1002, %v1026
        %v1028 = vmul.f32 %v1003, %v1026
        %v1029 = vmul.f32 %v1004, %v1026
        %v1030 = vmul.f32 %v1005, %v1026
        %v1031 = vmul.f32 %v1006, %v1026
        %vm1037 = vcmask 1046528
        %v1038 = vrot.slane %v1027, 1
        %v1039 = vrot.slane %v1028, 1
        %v1040 = vsel %vm1037, %v1038, %v1039
        %v1041 = vrot.slane %v1029, 1
        %v1042 = vsel %vm1037, %v1039, %v1041
        %v1043 = vrot.slane %v1030, 1
        %v1044 = vsel %vm1037, %v1041, %v1043
        %v1045 = vrot.slane %v1031, 1
        %v1046 = vsel %vm1037, %v1043, %v1045
        %v1052 = vadd.f32 %v1018, %v1040
        %v1053 = vadd.f32 %v1019, %v1042
        %v1054 = vadd.f32 %v1020, %v1044
        %v1055 = vadd.f32 %v1021, %v1046
        %v1056 = vadd.f32 %v1022, %v1045
        %v1057 = vlaneseq
        %v1058 = vshrl.u32 %v1057, 7
        %v1059 = vsub.s32 2, %v1058
        %v1060 = vrot.slane %v1008, %v1059
        %v1061 = vmul.f32 %v1002, %v1060
        %v1062 = vmul.f32 %v1003, %v1060
        %v1063 = vmul.f32 %v1004, %v1060
        %v1064 = vmul.f32 %v1005, %v1060
        %v1065 = vmul.f32 %v1006, %v1060
        %vm1071 = vcmask 1045504
        %v1072 = vrot.slane %v1061, 2
        %v1073 = vrot.slane %v1062, 2
        %v1074 = vsel %vm1071, %v1072, %v1073
        %v1075 = vrot.slane %v1063, 2
        %v1076 = vsel %vm1071, %v1073, %v1075
        %v1077 = vrot.slane %v1064, 2
        %v1078 = vsel %vm1071, %v1075, %v1077
        %v1079 = vrot.slane %v1065, 2
        %v1080 = vsel %vm1071, %v1077, %v1079
        %v1086 = vadd.f32 %v1052, %v1074
        %v1087 = vadd.f32 %v1053, %v1076
        %v1088 = vadd.f32 %v1054, %v1078
        %v1089 = vadd.f32 %v1055, %v1080
        %v1090 = vadd.f32 %v1056, %v1079
        %v1091 = vlaneseq
        %v1092 = vshrl.u32 %v1091, 7
        %v1093 = vsub.s32 3, %v1092
        %v1094 = vrot.slane %v1008, %v1093
        %v1095 = vmul.f32 %v1003, %v1094
        %v1096 = vmul.f32 %v1004, %v1094
        %v1097 = vmul.f32 %v1005, %v1094
        %v1098 = vmul.f32 %v1006, %v1094
        %vm1103 = vcmask 1044480
        %v1104 = vrot.slane %v1095, 3
        %v1105 = vrot.slane %v1096, 3
        %v1106 = vsel %vm1103, %v1104, %v1105
        %v1107 = vrot.slane %v1097, 3
        %v1108 = vsel %vm1103, %v1105, %v1107
        %v1109 = vrot.slane %v1098, 3
        %v1110 = vsel %vm1103, %v1107, %v1109
        %v1116 = vadd.f32 %v1086, %v1104
        %v1117 = vadd.f32 %v1087, %v1106
        %v1118 = vadd.f32 %v1088, %v1108
        %v1119 = vadd.f32 %v1089, %v1110
        %v1120 = vadd.f32 %v1090, %v1109
        %v1121 = vlaneseq
        %v1122 = vshrl.u32 %v1121, 7
        %v1123 = vsub.s32 4, %v1122
        %v1124 = vrot.slane %v1008, %v1123
        %v1125 = vmul.f32 %v1003, %v1124
        %v1126 = vmul.f32 %v1004, %v1124
        %v1127 = vmul.f32 %v1005, %v1124
        %v1128 = vmul.f32 %v1006, %v1124
        %v1129 = vmul.f32 %v1007, %v1124
        %vm1135 = vcmask 1043456
        %v1136 = vrot.slane %v1125, 4
        %v1137 = vrot.slane %v1126, 4
        %v1138 = vsel %vm1135, %v1136, %v1137
        %v1139 = vrot.slane %v1127, 4
        %v1140 = vsel %vm1135, %v1137, %v1139
        %v1141 = vrot.slane %v1128, 4
        %v1142 = vsel %vm1135, %v1139, %v1141
        %v1143 = vrot.slane %v1129, 4
        %v1144 = vsel %vm1135, %v1141, %v1143
        %v1150 = vadd.f32 %v1116, %v1136
        %v1151 = vadd.f32 %v1117, %v1138
        %v1152 = vadd.f32 %v1118, %v1140
        %v1153 = vadd.f32 %v1119, %v1142
        %v1154 = vadd.f32 %v1120, %v1144
        %v1155 = vlaneseq
        %v1156 = vshrl.u32 %v1155, 7
        %v1157 = vsub.s32 5, %v1156
        %v1158 = vrot.slane %v1008, %v1157
        %v1159 = vmul.f32 %v1003, %v1158
        %v1160 = vmul.f32 %v1004, %v1158
        %v1161 = vmul.f32 %v1005, %v1158
        %v1162 = vmul.f32 %v1006, %v1158
        %v1163 = vmul.f32 %v1007, %v1158
        %vm1169 = vcmask 1042432
        %v1170 = vrot.slane %v1159, 5
        %v1171 = vrot.slane %v1160, 5
        %v1172 = vsel %vm1169, %v1170, %v1171
        %v1173 = vrot.slane %v1161, 5
        %v1174 = vsel %vm1169, %v1171, %v1173
        %v1175 = vrot.slane %v1162, 5
        %v1176 = vsel %vm1169, %v1173, %v1175
        %v1177 = vrot.slane %v1163, 5
        %v1178 = vsel %vm1169, %v1175, %v1177
        %v1184 = vadd.f32 %v1150, %v1170
        %v1185 = vadd.f32 %v1151, %v1172
        %v1186 = vadd.f32 %v1152, %v1174
        %v1187 = vadd.f32 %v1153, %v1176
        %v1188 = vadd.f32 %v1154, %v1178
        %v1189 = vlaneseq
        %v1190 = vshrl.u32 %v1189, 7
        %v1191 = vsub.s32 6, %v1190
        %v1192 = vrot.slane %v1008, %v1191
        %v1193 = vmul.f32 %v1003, %v1192
        %v1194 = vmul.f32 %v1004, %v1192
        %v1195 = vmul.f32 %v1005, %v1192
        %v1196 = vmul.f32 %v1006, %v1192
        %v1197 = vmul.f32 %v1007, %v1192
        %vm1203 = vcmask 1041408
        %v1204 = vrot.slane %v1193, 6
        %v1205 = vrot.slane %v1194, 6
        %v1206 = vsel %vm1203, %v1204, %v1205
        %v1207 = vrot.slane %v1195, 6
        %v1208 = vsel %vm1203, %v1205, %v1207
        %v1209 = vrot.slane %v1196, 6
        %v1210 = vsel %vm1203, %v1207, %v1209
        %v1211 = vrot.slane %v1197, 6
        %v1212 = vsel %vm1203, %v1209, %v1211
        %v1218 = vadd.f32 %v1184, %v1204
        %v1219 = vadd.f32 %v1185, %v1206
        %v1220 = vadd.f32 %v1186, %v1208
        %v1221 = vadd.f32 %v1187, %v1210
        %v1222 = vadd.f32 %v1188, %v1212
        %v1223 = vld [vmem:[%s8] sm:$0x1]
        %v1225 = vlaneseq
        %v1226 = vshrl.u32 %v1225, 7
        %v1227 = vsub.s32 0, %v1226
        %v1228 = vrot.slane %v1223, %v1227
        %v1230 = vadd.f32 %v1218, %v1228
        %v1231 = vadd.f32 %v1219, %v1228
        %v1232 = vadd.f32 %v1220, %v1228
        %v1233 = vadd.f32 %v1221, %v1228
        %v1234 = vadd.f32 %v1222, %v1228
        %v1235 = vsub.f32 0.0, %v1230
        %v1236 = vsub.f32 0.0, %v1231
        %v1237 = vsub.f32 0.0, %v1232
        %v1238 = vsub.f32 0.0, %v1233
        %v1239 = vsub.f32 0.0, %v1234
        %v1240 = vmul.f32 %v1235, 1.442695
        %v1241 = vpow.pop %v1240
        %v1242 = vmul.f32 %v1236, 1.442695
        %v1243 = vpow.pop %v1242
        %v1244 = vmul.f32 %v1237, 1.442695
        %v1245 = vpow.pop %v1244
        %v1246 = vmul.f32 %v1238, 1.442695
        %v1247 = vpow.pop %v1246
        %v1248 = vmul.f32 %v1239, 1.442695
        %v1249 = vpow.pop %v1248
        %v1250 = vadd.f32 %v1241, 1.0
        %v1251 = vadd.f32 %v1243, 1.0
        %v1252 = vadd.f32 %v1245, 1.0
        %v1253 = vadd.f32 %v1247, 1.0
        %v1254 = vadd.f32 %v1249, 1.0
        %v1255 = vrcp.pop %v1250
        %v1256 = vrcp.pop %v1251
        %v1257 = vrcp.pop %v1252
        %v1258 = vrcp.pop %v1253
        %v1259 = vrcp.pop %v1254
        %v1260 = vmul.f32 %v1230, %v1255
        %v1261 = vmul.f32 %v1231, %v1256
        %v1262 = vmul.f32 %v1232, %v1257
        %v1263 = vmul.f32 %v1233, %v1258
        %v1264 = vmul.f32 %v1234, %v1259
        %v1265 = vpack.c.bf16 %v1261, %v1260
        %v1266 = vpack.c.bf16 %v1263, %v1262
        %v1267 = vpack.c.bf16 %v1264, %v1264
        %v1268 = vld [vmem:[#allocation10] sm:$0xf]
        %v1269 = vld [vmem:[#allocation10 + $0x4] sm:$0xf]
        %v1270 = vld [vmem:[#allocation10 + $0x8] sm:$0xf]
        %v1271 = vld [vmem:[#allocation10 + $0xc] sm:$0xf]
        %v1272 = vld [vmem:[#allocation10 + $0x10] sm:$0xf]
        %v1273 = vld [vmem:[#allocation10 + $0x14] sm:$0xf]
        %v1274 = vld [vmem:[#allocation10 + $0x18] sm:$0xf]
        %v1275 = vld [vmem:[#allocation10 + $0x1c] sm:$0xf]
        %v1276 = vld [vmem:[#allocation10 + $0x20] sm:$0xf]
        %v1277 = vld [vmem:[#allocation10 + $0x24] sm:$0xf]
        %v1278 = vld [vmem:[#allocation10 + $0x28] sm:$0xf]
        %v1279 = vld [vmem:[#allocation10 + $0x2c] sm:$0xf]
        %v1280 = vld [vmem:[#allocation10 + $0x30] sm:$0xf]
        %v1281 = vld [vmem:[#allocation10 + $0x34] sm:$0xf]
        %v1282 = vld [vmem:[#allocation10 + $0x38] sm:$0xf]
        %v1283 = vld [vmem:[#allocation10 + $0x3c] sm:$0xf]
        %v1284 = vld [vmem:[%s10] sm:$0x1]
        %v1286 = vlaneseq
        %v1287 = vshrl.u32 %v1286, 7
        %v1288 = vsub.s32 0, %v1287
        %v1289 = vrot.slane %v1284, %v1288
        %vm1291 = vsmask.f32 5376
        %v1293 = vshrl.u32 %v1265, 16
        %v1295 = vrot.slane %v1293, 2
        %v1296 = vshll.u32 %v1265, 16
        %v1298 = vrot.slane %v1296, 3
        %v1299 = vor.u32 %v1295, %v1298
        %v1301 = vshrl.u32 %v1266, 16
        %v1303 = vrot.slane %v1301, 2
        %v1304 = vshll.u32 %v1266, 16
        %v1306 = vrot.slane %v1304, 3
        %v1307 = vor.u32 %v1303, %v1306
        %v1308 = vsel %vm1291, %v1299, %v1307
        %v1310 = vshrl.u32 %v1267, 16
        %v1312 = vrot.slane %v1310, 2
        %v1313 = vshll.u32 %v1267, 16
        %v1315 = vrot.slane %v1313, 3
        %v1316 = vor.u32 %v1312, %v1315
        %v1317 = vsel %vm1291, %v1307, %v1316
        %v1336 = vunpack.c.l.b16 %v1268
        %v1337 = vunpack.c.l.b16 %v1269
        %v1338 = vunpack.c.l.b16 %v1270
        %v1339 = vunpack.c.l.b16 %v1271
        %v1340 = vunpack.c.l.b16 %v1272
        %v1341 = vunpack.c.l.b16 %v1273
        %v1342 = vunpack.c.l.b16 %v1274
        %v1343 = vunpack.c.l.b16 %v1275
        %v1344 = vunpack.c.l.b16 %v1276
        %v1345 = vunpack.c.l.b16 %v1277
        %v1346 = vunpack.c.l.b16 %v1278
        %v1347 = vunpack.c.l.b16 %v1279
        %v1348 = vunpack.c.l.b16 %v1280
        %v1349 = vunpack.c.l.b16 %v1281
        %v1350 = vunpack.c.l.b16 %v1282
        %v1351 = vunpack.c.l.b16 %v1283
        %v1352 = vpack.c.b16 %v1337, %v1336
        %v1353 = vpack.c.b16 %v1339, %v1338
        %v1354 = vpack.c.b16 %v1341, %v1340
        %v1355 = vpack.c.b16 %v1343, %v1342
        %v1356 = vpack.c.b16 %v1345, %v1344
        %v1357 = vpack.c.b16 %v1347, %v1346
        %v1358 = vpack.c.b16 %v1349, %v1348
        %v1359 = vpack.c.b16 %v1351, %v1350
        %1368 = vmatprep.subr.bf16.mxu0 0
        %1369 = vmatpush1.bf16.msra.mxu0 %v1359
        %1370 = vmatprep.subr.bf16.mxu0 0
        %1371 = vmatpush1.bf16.msra.mxu0 %v1358
        %1372 = vmatprep.subr.bf16.mxu0 0
        %1373 = vmatpush1.bf16.msra.mxu0 %v1357
        %1374 = vmatprep.subr.bf16.mxu0 0
        %1375 = vmatpush1.bf16.msra.mxu0 %v1356
        %1376 = vmatprep.subr.bf16.mxu0 0
        %1377 = vmatpush1.bf16.msra.mxu0 %v1355
        %1378 = vmatprep.subr.bf16.mxu0 0
        %1379 = vmatpush1.bf16.msra.mxu0 %v1354
        %1380 = vmatprep.subr.bf16.mxu0 0
        %1381 = vmatpush1.bf16.msra.mxu0 %v1353
        %1382 = vmatprep.subr.bf16.mxu0 0
        %1383 = vmatpush1.bf16.msra.mxu0 %v1352
        %1384 = vmatprep.subr.bf16.mxu0 0
        %1385 = vmatpush2.bf16.msra.mxu0 0
        %1386 = vmatprep.subr.bf16.mxu0 0
        %1387 = vmatpush2.bf16.msra.mxu0 0
        %1388 = vmatprep.subr.bf16.mxu0 0
        %1389 = vmatpush2.bf16.msra.mxu0 0
        %1390 = vmatprep.subr.bf16.mxu0 0
        %1391 = vmatpush2.bf16.msra.mxu0 0
        %1392 = vmatprep.subr.bf16.mxu0 0
        %1393 = vmatpush2.bf16.msra.mxu0 0
        %1394 = vmatprep.subr.bf16.mxu0 0
        %1395 = vmatpush2.bf16.msra.mxu0 0
        %1396 = vmatprep.subr.bf16.mxu0 0
        %1397 = vmatpush2.bf16.msra.mxu0 0
        %1398 = vmatprep.subr.bf16.mxu0 0
        %1399 = vmatpush2.bf16.msra.mxu0 0
        %1400 = vmatprep.mubr.bf16.mxu0 0
        %1401 = vmatmul.mubr.bf16.gmra.mxu0 %v1308
        %v1402 = vpop.f32.mrf.mxu0
        %v1403 = vadd.f32 %v1289, %v1402
        %v1404 = vpop.f32.mrf.mxu0
        %v1405 = vpop.f32.mrf.mxu0
        %v1406 = vadd.f32 %v1289, %v1405
        %v1407 = vpop.f32.mrf.mxu0
        %1408 = vmatprep.mubr.bf16.mxu0 0
        %1409 = vmatmul.mubr.bf16.gmra.mxu0 %v1317
        %v1410 = vpop.f32.mrf.mxu0
        %v1411 = vadd.f32 %v1289, %v1410
        %v1412 = vpop.f32.mrf.mxu0
        %v1413 = vpop.f32.mrf.mxu0
        %v1414 = vadd.f32 %v1289, %v1413
        %v1415 = vpop.f32.mrf.mxu0
        %1416 = vdwg.mxu0
        %v1417 = vpack.c.bf16 %v1406, %v1403
        %v1418 = vpack.c.bf16 %v1414, %v1411
        %v1421 = vunpack.c.l.b16 %v1417
        %v1422 = vunpack.c.h.b16 %v1417
        %v1423 = vunpack.c.l.b16 %v1418
        %v1424 = vunpack.c.h.b16 %v1418
        %v1425 = vpack.c.b16 %v1421, %v1421
        %v1426 = vpack.c.b16 %v1422, %v1422
        %v1427 = vpack.c.b16 %v1423, %v1423
        %v1428 = vpack.c.b16 %v1424, %v1424
        %1433 = vst [vmem:[%s560] sm:$0xf] %v1425
        %1434 = vst [vmem:[%s560 + $0x4] sm:$0xf] %v1426
        %1435 = vst [vmem:[%s560 + $0x8] sm:$0xf] %v1427
        %1436 = vst [vmem:[%s560 + $0xc] sm:$0xf] %v1428
        %s1437 = sand.u32 %s322, 1
        %s1438 = scalar_lea.sflag [#allocation4], %s1437
        %s1439 = sand.u32 %s322, 1
        %s1440 = smul.addr %s1439, 16
        %s1441 = scalar_lea.vmem [#allocation11], %s1440
        // Predicated region
        $region85: #{tpu_custom_call.1} parent=63 // pred_check
          %p1442 = pneg %p332
        $region86: #{tpu_custom_call.1} parent=63 // pred_check_branch
          %1444 = sbr.rel (%p1442) target = $region88
        $region87: #{tpu_custom_call.1} parent=63 // pred_region
          %s1445 = smul.u32 4, %s37
          %s1447 = ssub.s32 256, 256
          %1448 = vsyncadd %s1438, %s1447
          %s1449 = smul.addr %s36, 12
          %s1450 = sadd.s32 %s1445, %s1449
          %s1451 = smul.addr %s1450, 64
          %s1452 = scalar_lea.hbm %s11, %s1451
          %s1453 = sshll.u32 %s1441, 4
          %s1454 = int_to_ptr.vmem [resolvable:$true] %s1453
          %1459 = dma.vmem_to_hbm [thread:$0]  %s1454, 256, %s1452, %s1438, 64, 64, 4
        $region88: #{tpu_custom_call.1} parent=63 // pred_fallthru
          _
      $region64: #{tpu_custom_call.1} parent=5 // pred_fallthru
        _
      %p1460 = scmp.le.s32.totalorder 2, %s27
      // Predicated region
      $region89: #{tpu_custom_call.1} parent=5 // pred_check
        %p1461 = pneg %p1460
      $region90: #{tpu_custom_call.1} parent=5 // pred_check_branch
        %1463 = sbr.rel (%p1461) target = $region92
      $region91: #{tpu_custom_call.1} parent=5 // pred_region
        %s1464 = ssub.s32 %s27, 2
        // Predicated region
        $region93: #{tpu_custom_call.1} parent=91 // pred_check
          %p1465 = pneg %p338
        $region94: #{tpu_custom_call.1} parent=91 // pred_check_branch
          %1467 = sbr.rel (%p1465) target = $region96
        $region95: #{tpu_custom_call.1} parent=91 // pred_region
          %s1468 = sand.u32 %s323, 1
          %s1469 = scalar_lea.sflag [#allocation4], %s1468
          %s1470 = sand.u32 %s323, 1
          %s1471 = smul.addr %s1470, 16
          %s1472 = scalar_lea.vmem [#allocation11], %s1471
          %1473 = dma.done %s1469, 256
        $region96: #{tpu_custom_call.1} parent=91 // pred_fallthru
          _
      $region92: #{tpu_custom_call.1} parent=5 // pred_fallthru
        _
    $region6: #{tpu_custom_call.1} parent=1 // loop_footer
      %s31 = sadd.s32 1, %s27
    $region7: #{tpu_custom_call.1} parent=1 // loop_footer_branch
      %26 = sbr.rel target = $region3
    $region8: #{tpu_custom_call.1} parent=1 // loop_exit
      _
    %1474 = vsyncpa [#allocation3], 1
    %s1475 = scalar_lea.sflag [#allocation3], 1
    %1476 = vsyncpa %s1475, 1
    %1477 = vsyncpa [#allocation6], 1
    %s1478 = scalar_lea.sflag [#allocation6], 1
    %1479 = vsyncpa %s1478, 1
    %1480 = vsyncpa [#allocation9], 1
    %1481 = vsyncpa [#allocation4], 1
    %s1482 = scalar_lea.sflag [#allocation4], 1
    %1483 = vsyncpa %s1482, 1

</llo_original>
